<compile_context>
chip_gen: v6e
topology: v6e:2x2x1
jax: 0.10.0
libtpu: 0.0.40
codegen_flags: <defaults>
</compile_context>

<pallas_src>
import jax
import jax.numpy as jnp
from jax.experimental import pallas as pl
from jax.experimental.pallas import tpu as pltpu


# --------------------------------------------------------------------------
# kernel
# --------------------------------------------------------------------------
def _lenet_kernel(x_ref, w1_ref, b1_ref, w2_ref, b2_ref,
                  w3_ref, b3_ref, w4_ref, b4_ref, w5_ref, b5_ref, out_ref):
    f32 = jnp.float32
    x = x_ref[...]                                                    # (TB, 64)

    # conv1 (1->6, 3x3, pad=2) as one dense lane-wide MXU matmul.
    h1 = jnp.maximum(
        jnp.dot(x, w1_ref[...], preferred_element_type=f32) + b1_ref[...],
        0.0)                                                          # (TB, 640)

    # conv2 (6->16, 3x3, valid) likewise; columns ordered (dh, dw | ph, pw, c)
    # so the four 2x2-pool partners are four contiguous 256-lane slabs.
    h2 = jnp.maximum(
        jnp.dot(h1, w2_ref[...], preferred_element_type=f32) + b2_ref[...],
        0.0)                                                          # (TB, 1024)

    # MaxPool2d(2,2): elementwise max over four lane-aligned whole-vreg slabs.
    feat = jnp.maximum(jnp.maximum(h2[:, 0:256], h2[:, 256:512]),
                       jnp.maximum(h2[:, 512:768], h2[:, 768:1024]))  # (TB, 256)

    # fc1 (256->128pad) ReLU -> fc2 (128->128pad) ReLU -> fc3 (128->896pad)
    z3 = jnp.maximum(
        jnp.dot(feat, w3_ref[...], preferred_element_type=f32) + b3_ref[...],
        0.0)                                                          # (TB, 128)
    z4 = jnp.maximum(
        jnp.dot(z3, w4_ref[...], preferred_element_type=f32) + b4_ref[...],
        0.0)                                                          # (TB, 128)
    out_ref[...] = (jnp.dot(z4, w5_ref[...], preferred_element_type=f32)
                    + b5_ref[...])                                    # (TB, 896) lane-dense


# --------------------------------------------------------------------------
# dense conv operators (layout glue: gathers/selects only, no FP transforms)
# --------------------------------------------------------------------------
def _conv1_dense(w1):
    """(6,1,3,3) OIHW conv weight -> (64, 640) dense operator.
    rows: flattened 8x8 image (ih*8 + iw);
    cols: (oh*10 + ow)*6 + oc, zero-padded 600 -> 640."""
    ih = jnp.arange(8)
    oh = jnp.arange(10)
    d = ih[:, None] - oh[None, :] + 2                      # kernel tap index
    valid = (d >= 0) & (d < 3)
    dc = jnp.clip(d, 0, 2)
    w_hw = w1[:, 0]                                        # (6, 3, 3)
    # V[oc, ih, oh, iw, ow] = w1[oc, 0, ih-oh+2, iw-ow+2]
    V = w_hw[:, dc[:, :, None, None], dc[None, None, :, :]]          # (6,8,10,8,10)
    mask = valid[:, :, None, None] & valid[None, None, :, :]         # (8,10,8,10)
    V = jnp.where(mask[None], V, 0.0)
    V = jnp.transpose(V, (1, 3, 2, 4, 0)).reshape(64, 600)           # (ih,iw | oh,ow,oc)
    return jnp.pad(V, ((0, 0), (0, 40)))                             # (64, 640)


def _conv2_dense(w2):
    """(16,6,3,3) OIHW conv weight -> (640, 1024) dense operator.
    rows: conv1 activation cols (oh1*10 + ow1)*6 + ic, zero-padded 600 -> 640;
    cols: dh*512 + dw*256 + ph*64 + pw*16 + oc  (2x2-pool partners are the
    four contiguous 256-lane slabs)."""
    i1 = jnp.arange(10)
    o2 = jnp.arange(8)
    d = i1[:, None] - o2[None, :]                          # kernel tap index
    valid = (d >= 0) & (d < 3)
    dc = jnp.clip(d, 0, 2)
    # V[oc, ic, i1h, oh2, i1w, ow2] = w2[oc, ic, i1h-oh2, i1w-ow2]
    V = w2[:, :, dc[:, :, None, None], dc[None, None, :, :]]         # (16,6,10,8,10,8)
    mask = valid[:, :, None, None] & valid[None, None, :, :]         # (10,8,10,8)
    V = jnp.where(mask[None, None], V, 0.0)
    # oh2 = 2*ph + dh, ow2 = 2*pw + dw
    V = V.reshape(16, 6, 10, 4, 2, 10, 4, 2)               # (oc,ic,i1h,ph,dh,i1w,pw,dw)
    V = jnp.transpose(V, (2, 5, 1, 4, 7, 3, 6, 0))         # (i1h,i1w,ic | dh,dw,ph,pw,oc)
    V = V.reshape(600, 1024)
    return jnp.pad(V, ((0, 40), (0, 0)))                   # (640, 1024)


# --------------------------------------------------------------------------
# wrapper
# --------------------------------------------------------------------------
def _round_up(n, m):
    return ((n + m - 1) // m) * m


def lenet_forward(x, p, tb_max=256):
    # torch: x.reshape(-1, 1, 8, 8); carry it as a lane-dense (B, 64) block.
    x = x.reshape(-1, 64).astype(jnp.float32)
    B = x.shape[0]

    # Batch tile: multiple of 8 sublanes, up to 256 rows per MXU push.
    TB = min(tb_max, _round_up(B, 8))
    B_pad = _round_up(B, TB)
    if B_pad != B:
        x = jnp.pad(x, ((0, B_pad - B), (0, 0)))

    # ---- weight repacking (pure layout glue, no compute on activations) ----
    w1d = _conv1_dense(p["w1"])                                       # (64, 640)
    b1d = jnp.pad(jnp.tile(p["b1"], 100), (0, 40)).reshape(1, 640)
    w2d = _conv2_dense(p["w2"])                                       # (640, 1024)
    b2d = jnp.tile(p["b2"], 64).reshape(1, 1024)
    # fc1: rows permuted to the pooled (ph, pw, c) order; pad 120 -> 128 cols.
    w3p = jnp.transpose(p["w3"].reshape(120, 16, 4, 4), (2, 3, 1, 0)).reshape(256, 120)
    w3p = jnp.pad(w3p, ((0, 0), (0, 8)))                              # (256, 128)
    w4p = jnp.pad(p["w4"].T, ((0, 8), (0, 44)))                       # (128, 128)
    w5p = jnp.pad(p["w5"].T, ((0, 44), (0, 111)))                     # (128, 896)
    b3 = jnp.pad(p["b3"], (0, 8)).reshape(1, 128)
    b4 = jnp.pad(p["b4"], (0, 44)).reshape(1, 128)
    b5 = jnp.pad(p["b5"], (0, 111)).reshape(1, 896)

    def _resident(a):
        nd = a.ndim
        return pl.BlockSpec(a.shape, lambda i, _nd=nd: (0,) * _nd)

    in_specs = [
        pl.BlockSpec((TB, 64), lambda i: (i, 0)),    # batch-blocked, lane-dense input
        _resident(w1d), _resident(b1d),              # weights/biases: VMEM-resident
        _resident(w2d), _resident(b2d),
        _resident(w3p), _resident(b3),
        _resident(w4p), _resident(b4),
        _resident(w5p), _resident(b5),
    ]

    out = pl.pallas_call(
        _lenet_kernel,
        out_shape=jax.ShapeDtypeStruct((B_pad, 896), jnp.float32),
        grid=(B_pad // TB,),
        in_specs=in_specs,
        out_specs=pl.BlockSpec((TB, 896), lambda i: (i, 0)),
        compiler_params=pltpu.CompilerParams(
            dimension_semantics=("parallel",),
            # per-step footprint ~10-12 MiB; 48 MiB leaves headroom on v7x's
            # 64 MiB and is well inside v5e/v6e's 128 MiB.
            vmem_limit_bytes=48 * 1024 * 1024),
    )(x, w1d, b1d, w2d, b2d, w3p, b3, w4p, b4, w5p, b5)

    return out[:B, :785]


# --------------------------------------------------------------------------
# deterministic synthetic parameters + pure-JAX reference
# --------------------------------------------------------------------------
def init_params(key):
    keys = jax.random.split(key, 10)

    def uinit(k, shape, fan_in):
        bound = 1.0 / (fan_in ** 0.5)
        return jax.random.uniform(k, shape, jnp.float32, -bound, bound)

    return dict(
        w1=uinit(keys[0], (6, 1, 3, 3), 9),    b1=uinit(keys[1], (6,), 9),
        w2=uinit(keys[2], (16, 6, 3, 3), 54),  b2=uinit(keys[3], (16,), 54),
        w3=uinit(keys[4], (120, 256), 256),    b3=uinit(keys[5], (120,), 256),
        w4=uinit(keys[6], (84, 120), 120),     b4=uinit(keys[7], (84,), 120),
        w5=uinit(keys[8], (785, 84), 84),      b5=uinit(keys[9], (785,), 84),
    )


def lenet_reference(x, p):
    """Pure-JAX reference with PyTorch NCHW semantics (for verification)."""
    x = x.reshape(-1, 1, 8, 8).astype(jnp.float32)
    dn = ("NCHW", "OIHW", "NCHW")
    h = jax.lax.conv_general_dilated(x, p["w1"], (1, 1), [(2, 2), (2, 2)],
                                     dimension_numbers=dn)
    h = jax.nn.relu(h + p["b1"].reshape(1, 6, 1, 1))
    h = jax.lax.conv_general_dilated(h, p["w2"], (1, 1), [(0, 0), (0, 0)],
                                     dimension_numbers=dn)
    h = jax.nn.relu(h + p["b2"].reshape(1, 16, 1, 1))
    B = h.shape[0]
    h = h.reshape(B, 16, 4, 2, 4, 2).max(axis=(3, 5))     # MaxPool2d(2,2)
    h = h.reshape(B, 256)                                 # torch.flatten(x, 1)
    h = jax.nn.relu(h @ p["w3"].T + p["b3"])
    h = jax.nn.relu(h @ p["w4"].T + p["b4"])
    return h @ p["w5"].T + p["b5"]


# --------------------------------------------------------------------------
if __name__ == "__main__":
    params = init_params(jax.random.PRNGKey(42))
    fwd = jax.jit(lenet_forward)

    # small batch (single grid step, padded batch path)
    x_small = jax.random.normal(jax.random.PRNGKey(0), (2, 64), jnp.float32)
    out = jax.block_until_ready(fwd(x_small, params))
    assert out.shape == (2, 785), out.shape
    ref = lenet_reference(x_small, params)
    err = float(jnp.max(jnp.abs(out - ref)))
    assert jnp.allclose(out, ref, atol=2e-4, rtol=2e-4), err

    # larger batch (TB=256 -> 2 grid steps, exercising the parallel axis)
    x_big = jax.random.normal(jax.random.PRNGKey(1), (300, 64), jnp.float32)
    out_b = jax.block_until_ready(fwd(x_big, params))
    assert out_b.shape == (300, 785), out_b.shape
    ref_b = lenet_reference(x_big, params)
    err_b = float(jnp.max(jnp.abs(out_b - ref_b)))
    assert jnp.allclose(out_b, ref_b, atol=2e-4, rtol=2e-4), err_b

    print("KERNEL_OK")
</pallas_src>

<mosaic_0001>
module attributes {stable_mosaic.version = 11 : i64} {
  func.func @_lenet_kernel(%arg0: i32, %arg1: memref<8x64xf32, #tpu.memory_space<vmem>>, %arg2: memref<64x640xf32, #tpu.memory_space<vmem>>, %arg3: memref<1x640xf32, #tpu.memory_space<vmem>>, %arg4: memref<640x1024xf32, #tpu.memory_space<vmem>>, %arg5: memref<1x1024xf32, #tpu.memory_space<vmem>>, %arg6: memref<256x128xf32, #tpu.memory_space<vmem>>, %arg7: memref<1x128xf32, #tpu.memory_space<vmem>>, %arg8: memref<128x128xf32, #tpu.memory_space<vmem>>, %arg9: memref<1x128xf32, #tpu.memory_space<vmem>>, %arg10: memref<128x896xf32, #tpu.memory_space<vmem>>, %arg11: memref<1x896xf32, #tpu.memory_space<vmem>>, %arg12: memref<8x896xf32, #tpu.memory_space<vmem>>) attributes {dimension_semantics = [#tpu.dimension_semantics<parallel>], iteration_bounds = array<i64: 1>, scalar_prefetch = 0 : i64, scratch_operands = 0 : i64, tpu.core_type = #tpu.core_type<tc>, window_params = [{transform_indices = @transform_0, window_bounds = array<i64: 8, 64>}, {pipeline_mode = #tpu.pipeline_mode<synchronous>, transform_indices = @transform_1, window_bounds = array<i64: 64, 640>}, {pipeline_mode = #tpu.pipeline_mode<synchronous>, transform_indices = @transform_2, window_bounds = array<i64: 1, 640>}, {pipeline_mode = #tpu.pipeline_mode<synchronous>, transform_indices = @transform_3, window_bounds = array<i64: 640, 1024>}, {pipeline_mode = #tpu.pipeline_mode<synchronous>, transform_indices = @transform_4, window_bounds = array<i64: 1, 1024>}, {pipeline_mode = #tpu.pipeline_mode<synchronous>, transform_indices = @transform_5, window_bounds = array<i64: 256, 128>}, {pipeline_mode = #tpu.pipeline_mode<synchronous>, transform_indices = @transform_6, window_bounds = array<i64: 1, 128>}, {pipeline_mode = #tpu.pipeline_mode<synchronous>, transform_indices = @transform_7, window_bounds = array<i64: 128, 128>}, {pipeline_mode = #tpu.pipeline_mode<synchronous>, transform_indices = @transform_8, window_bounds = array<i64: 1, 128>}, {pipeline_mode = #tpu.pipeline_mode<synchronous>, transform_indices = @transform_9, window_bounds = array<i64: 128, 896>}, {pipeline_mode = #tpu.pipeline_mode<synchronous>, transform_indices = @transform_10, window_bounds = array<i64: 1, 896>}, {transform_indices = @transform_11, window_bounds = array<i64: 8, 896>}]} {
    %c0 = arith.constant 0 : index
    %c0_0 = arith.constant 0 : index
    %0 = vector.load %arg1[%c0, %c0_0] : memref<8x64xf32, #tpu.memory_space<vmem>>, vector<8x64xf32>
    %c0_1 = arith.constant 0 : index
    %c0_2 = arith.constant 0 : index
    %1 = vector.load %arg2[%c0_1, %c0_2] : memref<64x640xf32, #tpu.memory_space<vmem>>, vector<64x640xf32>
    %cst = arith.constant dense<0.000000e+00> : vector<8x640xf32>
    %2 = tpu.matmul %0, %1, %cst {dimension_numbers = #tpu.dot_dimension_numbers<[1], [0], [0], [1], [0, 0, 1, 1], [], []>} : vector<8x64xf32>, vector<64x640xf32>, vector<8x640xf32> -> vector<8x640xf32>
    %c0_3 = arith.constant 0 : index
    %c0_4 = arith.constant 0 : index
    %3 = vector.load %arg3[%c0_3, %c0_4] : memref<1x640xf32, #tpu.memory_space<vmem>>, vector<1x640xf32>
    %4 = vector.broadcast %3 : vector<1x640xf32> to vector<8x640xf32>
    %5 = arith.addf %2, %4 : vector<8x640xf32>
    %cst_5 = arith.constant 0.000000e+00 : f32
    %6 = vector.broadcast %cst_5 : f32 to vector<8x640xf32>
    %7 = arith.maximumf %5, %6 : vector<8x640xf32>
    %c0_6 = arith.constant 0 : index
    %c0_7 = arith.constant 0 : index
    %8 = vector.load %arg4[%c0_6, %c0_7] : memref<640x1024xf32, #tpu.memory_space<vmem>>, vector<640x1024xf32>
    %cst_8 = arith.constant dense<0.000000e+00> : vector<8x1024xf32>
    %9 = tpu.matmul %7, %8, %cst_8 {dimension_numbers = #tpu.dot_dimension_numbers<[1], [0], [0], [1], [0, 0, 1, 1], [], []>} : vector<8x640xf32>, vector<640x1024xf32>, vector<8x1024xf32> -> vector<8x1024xf32>
    %c0_9 = arith.constant 0 : index
    %c0_10 = arith.constant 0 : index
    %10 = vector.load %arg5[%c0_9, %c0_10] : memref<1x1024xf32, #tpu.memory_space<vmem>>, vector<1x1024xf32>
    %11 = vector.broadcast %10 : vector<1x1024xf32> to vector<8x1024xf32>
    %12 = arith.addf %9, %11 : vector<8x1024xf32>
    %cst_11 = arith.constant 0.000000e+00 : f32
    %13 = vector.broadcast %cst_11 : f32 to vector<8x1024xf32>
    %14 = arith.maximumf %12, %13 : vector<8x1024xf32>
    %15 = vector.extract_strided_slice %14 {offsets = [0, 0], sizes = [8, 256], strides = [1, 1]} : vector<8x1024xf32> to vector<8x256xf32>
    %16 = vector.extract_strided_slice %14 {offsets = [0, 256], sizes = [8, 256], strides = [1, 1]} : vector<8x1024xf32> to vector<8x256xf32>
    %17 = arith.maximumf %15, %16 : vector<8x256xf32>
    %18 = vector.extract_strided_slice %14 {offsets = [0, 512], sizes = [8, 256], strides = [1, 1]} : vector<8x1024xf32> to vector<8x256xf32>
    %19 = vector.extract_strided_slice %14 {offsets = [0, 768], sizes = [8, 256], strides = [1, 1]} : vector<8x1024xf32> to vector<8x256xf32>
    %20 = arith.maximumf %18, %19 : vector<8x256xf32>
    %21 = arith.maximumf %17, %20 : vector<8x256xf32>
    %c0_12 = arith.constant 0 : index
    %c0_13 = arith.constant 0 : index
    %22 = vector.load %arg6[%c0_12, %c0_13] : memref<256x128xf32, #tpu.memory_space<vmem>>, vector<256x128xf32>
    %cst_14 = arith.constant dense<0.000000e+00> : vector<8x128xf32>
    %23 = tpu.matmul %21, %22, %cst_14 {dimension_numbers = #tpu.dot_dimension_numbers<[1], [0], [0], [1], [0, 0, 1, 1], [], []>} : vector<8x256xf32>, vector<256x128xf32>, vector<8x128xf32> -> vector<8x128xf32>
    %c0_15 = arith.constant 0 : index
    %c0_16 = arith.constant 0 : index
    %24 = vector.load %arg7[%c0_15, %c0_16] : memref<1x128xf32, #tpu.memory_space<vmem>>, vector<1x128xf32>
    %25 = vector.broadcast %24 : vector<1x128xf32> to vector<8x128xf32>
    %26 = arith.addf %23, %25 : vector<8x128xf32>
    %cst_17 = arith.constant 0.000000e+00 : f32
    %27 = vector.broadcast %cst_17 : f32 to vector<8x128xf32>
    %28 = arith.maximumf %26, %27 : vector<8x128xf32>
    %c0_18 = arith.constant 0 : index
    %c0_19 = arith.constant 0 : index
    %29 = vector.load %arg8[%c0_18, %c0_19] : memref<128x128xf32, #tpu.memory_space<vmem>>, vector<128x128xf32>
    %cst_20 = arith.constant dense<0.000000e+00> : vector<8x128xf32>
    %30 = tpu.matmul %28, %29, %cst_20 {dimension_numbers = #tpu.dot_dimension_numbers<[1], [0], [0], [1], [0, 0, 1, 1], [], []>} : vector<8x128xf32>, vector<128x128xf32>, vector<8x128xf32> -> vector<8x128xf32>
    %c0_21 = arith.constant 0 : index
    %c0_22 = arith.constant 0 : index
    %31 = vector.load %arg9[%c0_21, %c0_22] : memref<1x128xf32, #tpu.memory_space<vmem>>, vector<1x128xf32>
    %32 = vector.broadcast %31 : vector<1x128xf32> to vector<8x128xf32>
    %33 = arith.addf %30, %32 : vector<8x128xf32>
    %cst_23 = arith.constant 0.000000e+00 : f32
    %34 = vector.broadcast %cst_23 : f32 to vector<8x128xf32>
    %35 = arith.maximumf %33, %34 : vector<8x128xf32>
    %c0_24 = arith.constant 0 : index
    %c0_25 = arith.constant 0 : index
    %36 = vector.load %arg10[%c0_24, %c0_25] : memref<128x896xf32, #tpu.memory_space<vmem>>, vector<128x896xf32>
    %cst_26 = arith.constant dense<0.000000e+00> : vector<8x896xf32>
    %37 = tpu.matmul %35, %36, %cst_26 {dimension_numbers = #tpu.dot_dimension_numbers<[1], [0], [0], [1], [0, 0, 1, 1], [], []>} : vector<8x128xf32>, vector<128x896xf32>, vector<8x896xf32> -> vector<8x896xf32>
    %c0_27 = arith.constant 0 : index
    %c0_28 = arith.constant 0 : index
    %38 = vector.load %arg11[%c0_27, %c0_28] : memref<1x896xf32, #tpu.memory_space<vmem>>, vector<1x896xf32>
    %39 = vector.broadcast %38 : vector<1x896xf32> to vector<8x896xf32>
    %40 = arith.addf %37, %39 : vector<8x896xf32>
    %c0_29 = arith.constant 0 : index
    %c0_30 = arith.constant 0 : index
    %41 = vector.load %arg12[%c0_29, %c0_30] : memref<8x896xf32, #tpu.memory_space<vmem>>, vector<8x896xf32>
    tpu.vector_store %arg12[%c0_29, %c0_30], %40 {strides = array<i32>} : memref<8x896xf32, #tpu.memory_space<vmem>>, vector<8x896xf32>,
    return
  }
  func.func @transform_0(%arg0: i32) -> (i32, i32) {
    %c0_i32 = arith.constant 0 : i32
    %c0_i32_0 = arith.constant 0 : i32
    return %arg0, %c0_i32 : i32, i32
  }
  func.func @transform_1(%arg0: i32) -> (i32, i32) {
    %c0_i32 = arith.constant 0 : i32
    %c0_i32_0 = arith.constant 0 : i32
    %c0_i32_1 = arith.constant 0 : i32
    return %c0_i32, %c0_i32_0 : i32, i32
  }
  func.func @transform_2(%arg0: i32) -> (i32, i32) {
    %c0_i32 = arith.constant 0 : i32
    %c0_i32_0 = arith.constant 0 : i32
    %c0_i32_1 = arith.constant 0 : i32
    return %c0_i32, %c0_i32_0 : i32, i32
  }
  func.func @transform_3(%arg0: i32) -> (i32, i32) {
    %c0_i32 = arith.constant 0 : i32
    %c0_i32_0 = arith.constant 0 : i32
    %c0_i32_1 = arith.constant 0 : i32
    return %c0_i32, %c0_i32_0 : i32, i32
  }
  func.func @transform_4(%arg0: i32) -> (i32, i32) {
    %c0_i32 = arith.constant 0 : i32
    %c0_i32_0 = arith.constant 0 : i32
    %c0_i32_1 = arith.constant 0 : i32
    return %c0_i32, %c0_i32_0 : i32, i32
  }
  func.func @transform_5(%arg0: i32) -> (i32, i32) {
    %c0_i32 = arith.constant 0 : i32
    %c0_i32_0 = arith.constant 0 : i32
    %c0_i32_1 = arith.constant 0 : i32
    return %c0_i32, %c0_i32_0 : i32, i32
  }
  func.func @transform_6(%arg0: i32) -> (i32, i32) {
    %c0_i32 = arith.constant 0 : i32
    %c0_i32_0 = arith.constant 0 : i32
    %c0_i32_1 = arith.constant 0 : i32
    return %c0_i32, %c0_i32_0 : i32, i32
  }
  func.func @transform_7(%arg0: i32) -> (i32, i32) {
    %c0_i32 = arith.constant 0 : i32
    %c0_i32_0 = arith.constant 0 : i32
    %c0_i32_1 = arith.constant 0 : i32
    return %c0_i32, %c0_i32_0 : i32, i32
  }
  func.func @transform_8(%arg0: i32) -> (i32, i32) {
    %c0_i32 = arith.constant 0 : i32
    %c0_i32_0 = arith.constant 0 : i32
    %c0_i32_1 = arith.constant 0 : i32
    return %c0_i32, %c0_i32_0 : i32, i32
  }
  func.func @transform_9(%arg0: i32) -> (i32, i32) {
    %c0_i32 = arith.constant 0 : i32
    %c0_i32_0 = arith.constant 0 : i32
    %c0_i32_1 = arith.constant 0 : i32
    return %c0_i32, %c0_i32_0 : i32, i32
  }
  func.func @transform_10(%arg0: i32) -> (i32, i32) {
    %c0_i32 = arith.constant 0 : i32
    %c0_i32_0 = arith.constant 0 : i32
    %c0_i32_1 = arith.constant 0 : i32
    return %c0_i32, %c0_i32_0 : i32, i32
  }
  func.func @transform_11(%arg0: i32) -> (i32, i32) {
    %c0_i32 = arith.constant 0 : i32
    %c0_i32_0 = arith.constant 0 : i32
    return %arg0, %c0_i32 : i32, i32
  }
}

</mosaic_0001>

<llo_original>
// kernel: tile.13
$region0: #{tile.13}
  #allocation0 [shape = 's32[1]{0}', space=sflag, size = 0x4, scoped, tag = 'scoped memory for tile.13']
  %s0 = inlined_call_operand.vmem [shape: f32[6], index: 0, kind: input, shape index: {}]
  %s1 = inlined_call_operand.vmem [shape: f32[100,6], index: 1, kind: output, shape index: {}]
  // Predicated region
  $region2: #{tile.13} parent=0 // pred_check
    _
  $region3: #{tile.13} parent=0 // pred_check_branch
    %3 = sbr.rel (0) target = $region5
  $region4: #{tile.13} parent=0 // pred_region
    _
  $region5: #{tile.13} parent=0 // pred_fallthru
    _
  %v4 = vld [vmem:[%s0] ss:$0 sm:$0xff]
  %5 = vst [vmem:[%s1] sm:$0xff] %v4
  %s6 = scalar_lea.vmem %s1, 8
  %7 = vst [vmem:[%s6] sm:$0xff] %v4
  %s8 = scalar_lea.vmem %s1, 16
  %9 = vst [vmem:[%s8] sm:$0xff] %v4
  %s10 = scalar_lea.vmem %s1, 24
  %11 = vst [vmem:[%s10] sm:$0xff] %v4
  %s12 = scalar_lea.vmem %s1, 32
  %13 = vst [vmem:[%s12] sm:$0xff] %v4
  %s14 = scalar_lea.vmem %s1, 40
  %15 = vst [vmem:[%s14] sm:$0xff] %v4
  %s16 = scalar_lea.vmem %s1, 48
  %17 = vst [vmem:[%s16] sm:$0xff] %v4
  %s18 = scalar_lea.vmem %s1, 56
  %19 = vst [vmem:[%s18] sm:$0xff] %v4
  %s20 = scalar_lea.vmem %s1, 64
  %21 = vst [vmem:[%s20] sm:$0xff] %v4
  %s22 = scalar_lea.vmem %s1, 72
  %23 = vst [vmem:[%s22] sm:$0xff] %v4
  %s24 = scalar_lea.vmem %s1, 80
  %25 = vst [vmem:[%s24] sm:$0xff] %v4
  %s26 = scalar_lea.vmem %s1, 88
  %27 = vst [vmem:[%s26] sm:$0xff] %v4
  %s28 = scalar_lea.vmem %s1, 96
  %29 = vst [vmem:[%s28] sm:$0xff] %v4

// kernel: tile.14
$region0: #{tile.14}
  %s0 = inlined_call_operand.vmem [shape: f32[100,6], index: 0, kind: input, shape index: {}]
  %s1 = inlined_call_operand.vmem [shape: f32[600], index: 1, kind: output, shape index: {}]
  %v2 = vld [vmem:[%s0] sm:$0x1]
  %s3 = scalar_lea.vmem %s0, 63
  %v4 = vld [vmem:[%s3] sm:$0x2]
  %vm5 = vcmask 1041409
  %v6 = vsel %vm5, %v4, %v2
  %vm7 = vcmask 48128
  %8 = vst.msk [vmem:[%s1] ss:$3 sm:$0x3] %vm7, %v6
  %s9 = scalar_lea.vmem %s0, 21
  %v10 = vld [vmem:[%s9] sm:$0x1]
  %s11 = scalar_lea.vmem %s0, 84
  %v12 = vld [vmem:[%s11] sm:$0x2]
  %vm13 = vcmask 1041409
  %v14 = vsel %vm13, %v12, %v10
  %s15 = scalar_lea.vmem %s0, 21
  %v16 = vld [vmem:[%s15] sm:$0x1]
  %s17 = scalar_lea.vmem %s0, 84
  %v18 = vld [vmem:[%s17] sm:$0x2]
  %vm19 = vcmask 1041409
  %v20 = vsel %vm19, %v18, %v16
  %vm21 = vcmask 15360
  %v22 = vsel %vm21, %v20, %v14
  %23 = vrot.lane.b32.xlu0 %v22, 126
  %v24 = vpop.permute.xlu0 %23
  %vm25 = vcmask 31744
  %s26 = scalar_lea.vmem %s1, 1
  %27 = vst.msk [vmem:[%s26] ss:$3 sm:$0x3] %vm25, %v24
  %vm28 = vcmask 1048560
  %29 = vst.msk [vmem:[%s1] ss:$3 sm:$0x3] %vm28, %v24
  %s30 = scalar_lea.vmem %s0, 42
  %v31 = vld [vmem:[%s30] sm:$0x1]
  %s32 = scalar_lea.vmem %s0, 42
  %v33 = vld [vmem:[%s32] sm:$0x1]
  %vm34 = vcmask 31744
  %v35 = vsel %vm34, %v33, %v31
  %36 = vrot.lane.b32.xlu0 %v35, 124
  %v37 = vpop.permute.xlu0 %36
  %vm38 = vcmask 15360
  %s39 = scalar_lea.vmem %s1, 2
  %40 = vst.msk [vmem:[%s39] sm:$0x1] %vm38, %v37
  %vm41 = vcmask 1048544
  %s42 = scalar_lea.vmem %s1, 1
  %43 = vst.msk [vmem:[%s42] sm:$0x1] %vm41, %v37
  %s44 = scalar_lea.vmem %s0, 63
  %v45 = vld [vmem:[%s44] sm:$0x1]
  %46 = vrot.lane.b32.xlu0 %v45, 122
  %v47 = vpop.permute.xlu0 %46
  %vm48 = vcmask 1048528
  %s49 = scalar_lea.vmem %s1, 2
  %50 = vst.msk [vmem:[%s49] sm:$0x1] %vm48, %v47
  %s51 = scalar_lea.vmem %s0, 20
  %v52 = vld [vmem:[%s51] sm:$0x1]
  %s53 = scalar_lea.vmem %s0, 83
  %v54 = vld [vmem:[%s53] sm:$0x2]
  %vm55 = vcmask 1041409
  %v56 = vsel %vm55, %v54, %v52
  %57 = vrot.lane.b32.xlu0 %v56, 120
  %v58 = vpop.permute.xlu0 %57
  %vm59 = vcmask 1032128
  %60 = vst.msk [vmem:[%s1] ss:$3 sm:$0x3] %vm59, %v58
  %s61 = scalar_lea.vmem %s0, 41
  %v62 = vld [vmem:[%s61] sm:$0x1]
  %63 = vrot.lane.b32.xlu0 %v62, 118
  %v64 = vpop.permute.xlu0 %63
  %vm65 = vcmask 1015728
  %s66 = scalar_lea.vmem %s1, 1
  %67 = vst.msk [vmem:[%s66] sm:$0x1] %vm65, %v64
  %s68 = scalar_lea.vmem %s0, 62
  %v69 = vld [vmem:[%s68] sm:$0x1]
  %70 = vrot.lane.b32.xlu0 %v69, 116
  %v71 = vpop.permute.xlu0 %70
  %vm72 = vcmask 999328
  %s73 = scalar_lea.vmem %s1, 2
  %74 = vst.msk [vmem:[%s73] sm:$0x1] %vm72, %v71
  %s75 = scalar_lea.vmem %s0, 19
  %v76 = vld [vmem:[%s75] sm:$0x1]
  %s77 = scalar_lea.vmem %s0, 82
  %v78 = vld [vmem:[%s77] sm:$0x2]
  %vm79 = vcmask 1041409
  %v80 = vsel %vm79, %v78, %v76
  %81 = vrot.lane.b32.xlu0 %v80, 114
  %v82 = vpop.permute.xlu0 %81
  %vm83 = vcmask 982928
  %84 = vst.msk [vmem:[%s1] ss:$3 sm:$0x3] %vm83, %v82
  %s85 = scalar_lea.vmem %s0, 40
  %v86 = vld [vmem:[%s85] sm:$0x1]
  %87 = vrot.lane.b32.xlu0 %v86, 112
  %v88 = vpop.permute.xlu0 %87
  %vm89 = vcmask 966528
  %s90 = scalar_lea.vmem %s1, 1
  %91 = vst.msk [vmem:[%s90] sm:$0x1] %vm89, %v88
  %s92 = scalar_lea.vmem %s0, 61
  %v93 = vld [vmem:[%s92] sm:$0x1]
  %94 = vrot.lane.b32.xlu0 %v93, 110
  %v95 = vpop.permute.xlu0 %94
  %vm96 = vcmask 950128
  %s97 = scalar_lea.vmem %s1, 2
  %98 = vst.msk [vmem:[%s97] sm:$0x1] %vm96, %v95
  %s99 = scalar_lea.vmem %s0, 18
  %v100 = vld [vmem:[%s99] sm:$0x1]
  %s101 = scalar_lea.vmem %s0, 81
  %v102 = vld [vmem:[%s101] sm:$0x2]
  %vm103 = vcmask 1041409
  %v104 = vsel %vm103, %v102, %v100
  %105 = vrot.lane.b32.xlu0 %v104, 108
  %v106 = vpop.permute.xlu0 %105
  %vm107 = vcmask 933728
  %108 = vst.msk [vmem:[%s1] ss:$3 sm:$0x3] %vm107, %v106
  %s109 = scalar_lea.vmem %s0, 39
  %v110 = vld [vmem:[%s109] sm:$0x1]
  %111 = vrot.lane.b32.xlu0 %v110, 106
  %v112 = vpop.permute.xlu0 %111
  %vm113 = vcmask 917328
  %s114 = scalar_lea.vmem %s1, 1
  %115 = vst.msk [vmem:[%s114] sm:$0x1] %vm113, %v112
  %s116 = scalar_lea.vmem %s0, 60
  %v117 = vld [vmem:[%s116] sm:$0x1]
  %118 = vrot.lane.b32.xlu0 %v117, 104
  %v119 = vpop.permute.xlu0 %118
  %vm120 = vcmask 900928
  %s121 = scalar_lea.vmem %s1, 2
  %122 = vst.msk [vmem:[%s121] sm:$0x1] %vm120, %v119
  %s123 = scalar_lea.vmem %s0, 17
  %v124 = vld [vmem:[%s123] sm:$0x1]
  %s125 = scalar_lea.vmem %s0, 80
  %v126 = vld [vmem:[%s125] sm:$0x2]
  %vm127 = vcmask 1041409
  %v128 = vsel %vm127, %v126, %v124
  %129 = vrot.lane.b32.xlu0 %v128, 102
  %v130 = vpop.permute.xlu0 %129
  %vm131 = vcmask 884528
  %132 = vst.msk [vmem:[%s1] ss:$3 sm:$0x3] %vm131, %v130
  %s133 = scalar_lea.vmem %s0, 38
  %v134 = vld [vmem:[%s133] sm:$0x1]
  %135 = vrot.lane.b32.xlu0 %v134, 100
  %v136 = vpop.permute.xlu0 %135
  %vm137 = vcmask 868128
  %s138 = scalar_lea.vmem %s1, 1
  %139 = vst.msk [vmem:[%s138] sm:$0x1] %vm137, %v136
  %s140 = scalar_lea.vmem %s0, 59
  %v141 = vld [vmem:[%s140] sm:$0x1]
  %142 = vrot.lane.b32.xlu0 %v141, 98
  %v143 = vpop.permute.xlu0 %142
  %vm144 = vcmask 851728
  %s145 = scalar_lea.vmem %s1, 2
  %146 = vst.msk [vmem:[%s145] sm:$0x1] %vm144, %v143
  %s147 = scalar_lea.vmem %s0, 16
  %v148 = vld [vmem:[%s147] sm:$0x1]
  %s149 = scalar_lea.vmem %s0, 79
  %v150 = vld [vmem:[%s149] sm:$0x2]
  %vm151 = vcmask 1041409
  %v152 = vsel %vm151, %v150, %v148
  %153 = vrot.lane.b32.xlu0 %v152, 96
  %v154 = vpop.permute.xlu0 %153
  %vm155 = vcmask 835328
  %156 = vst.msk [vmem:[%s1] ss:$3 sm:$0x3] %vm155, %v154
  %s157 = scalar_lea.vmem %s0, 37
  %v158 = vld [vmem:[%s157] sm:$0x1]
  %159 = vrot.lane.b32.xlu0 %v158, 94
  %v160 = vpop.permute.xlu0 %159
  %vm161 = vcmask 818928
  %s162 = scalar_lea.vmem %s1, 1
  %163 = vst.msk [vmem:[%s162] sm:$0x1] %vm161, %v160
  %s164 = scalar_lea.vmem %s0, 58
  %v165 = vld [vmem:[%s164] sm:$0x1]
  %166 = vrot.lane.b32.xlu0 %v165, 92
  %v167 = vpop.permute.xlu0 %166
  %vm168 = vcmask 802528
  %s169 = scalar_lea.vmem %s1, 2
  %170 = vst.msk [vmem:[%s169] sm:$0x1] %vm168, %v167
  %s171 = scalar_lea.vmem %s0, 15
  %v172 = vld [vmem:[%s171] sm:$0x1]
  %s173 = scalar_lea.vmem %s0, 78
  %v174 = vld [vmem:[%s173] sm:$0x2]
  %vm175 = vcmask 1041409
  %v176 = vsel %vm175, %v174, %v172
  %177 = vrot.lane.b32.xlu0 %v176, 90
  %v178 = vpop.permute.xlu0 %177
  %vm179 = vcmask 786128
  %180 = vst.msk [vmem:[%s1] ss:$3 sm:$0x3] %vm179, %v178
  %s181 = scalar_lea.vmem %s0, 36
  %v182 = vld [vmem:[%s181] sm:$0x1]
  %183 = vrot.lane.b32.xlu0 %v182, 88
  %v184 = vpop.permute.xlu0 %183
  %vm185 = vcmask 769728
  %s186 = scalar_lea.vmem %s1, 1
  %187 = vst.msk [vmem:[%s186] sm:$0x1] %vm185, %v184
  %s188 = scalar_lea.vmem %s0, 57
  %v189 = vld [vmem:[%s188] sm:$0x1]
  %190 = vrot.lane.b32.xlu0 %v189, 86
  %v191 = vpop.permute.xlu0 %190
  %vm192 = vcmask 753328
  %s193 = scalar_lea.vmem %s1, 2
  %194 = vst.msk [vmem:[%s193] sm:$0x1] %vm192, %v191
  %s195 = scalar_lea.vmem %s0, 14
  %v196 = vld [vmem:[%s195] sm:$0x1]
  %s197 = scalar_lea.vmem %s0, 77
  %v198 = vld [vmem:[%s197] sm:$0x2]
  %vm199 = vcmask 1041409
  %v200 = vsel %vm199, %v198, %v196
  %201 = vrot.lane.b32.xlu0 %v200, 84
  %v202 = vpop.permute.xlu0 %201
  %vm203 = vcmask 736928
  %204 = vst.msk [vmem:[%s1] ss:$3 sm:$0x3] %vm203, %v202
  %s205 = scalar_lea.vmem %s0, 35
  %v206 = vld [vmem:[%s205] sm:$0x1]
  %s207 = scalar_lea.vmem %s0, 98
  %v208 = vld [vmem:[%s207] sm:$0x2]
  %vm209 = vcmask 1041409
  %v210 = vsel %vm209, %v208, %v206
  %211 = vrot.lane.b32.xlu0 %v210, 82
  %v212 = vpop.permute.xlu0 %211
  %vm213 = vcmask 720528
  %s214 = scalar_lea.vmem %s1, 1
  %215 = vst.msk [vmem:[%s214] ss:$3 sm:$0x3] %vm213, %v212
  %s216 = scalar_lea.vmem %s0, 56
  %v217 = vld [vmem:[%s216] sm:$0x1]
  %218 = vrot.lane.b32.xlu0 %v217, 80
  %v219 = vpop.permute.xlu0 %218
  %vm220 = vcmask 704128
  %s221 = scalar_lea.vmem %s1, 2
  %222 = vst.msk [vmem:[%s221] sm:$0x1] %vm220, %v219
  %s223 = scalar_lea.vmem %s0, 13
  %v224 = vld [vmem:[%s223] sm:$0x1]
  %s225 = scalar_lea.vmem %s0, 76
  %v226 = vld [vmem:[%s225] sm:$0x2]
  %vm227 = vcmask 1041409
  %v228 = vsel %vm227, %v226, %v224
  %229 = vrot.lane.b32.xlu0 %v228, 78
  %v230 = vpop.permute.xlu0 %229
  %vm231 = vcmask 687728
  %232 = vst.msk [vmem:[%s1] ss:$3 sm:$0x3] %vm231, %v230
  %s233 = scalar_lea.vmem %s0, 34
  %v234 = vld [vmem:[%s233] sm:$0x1]
  %s235 = scalar_lea.vmem %s0, 97
  %v236 = vld [vmem:[%s235] sm:$0x2]
  %vm237 = vcmask 1041409
  %v238 = vsel %vm237, %v236, %v234
  %239 = vrot.lane.b32.xlu0 %v238, 76
  %v240 = vpop.permute.xlu0 %239
  %vm241 = vcmask 671328
  %s242 = scalar_lea.vmem %s1, 1
  %243 = vst.msk [vmem:[%s242] ss:$3 sm:$0x3] %vm241, %v240
  %s244 = scalar_lea.vmem %s0, 55
  %v245 = vld [vmem:[%s244] sm:$0x1]
  %246 = vrot.lane.b32.xlu0 %v245, 74
  %v247 = vpop.permute.xlu0 %246
  %vm248 = vcmask 654928
  %s249 = scalar_lea.vmem %s1, 2
  %250 = vst.msk [vmem:[%s249] sm:$0x1] %vm248, %v247
  %s251 = scalar_lea.vmem %s0, 12
  %v252 = vld [vmem:[%s251] sm:$0x1]
  %s253 = scalar_lea.vmem %s0, 75
  %v254 = vld [vmem:[%s253] sm:$0x2]
  %vm255 = vcmask 1041409
  %v256 = vsel %vm255, %v254, %v252
  %257 = vrot.lane.b32.xlu0 %v256, 72
  %v258 = vpop.permute.xlu0 %257
  %vm259 = vcmask 638528
  %260 = vst.msk [vmem:[%s1] ss:$3 sm:$0x3] %vm259, %v258
  %s261 = scalar_lea.vmem %s0, 33
  %v262 = vld [vmem:[%s261] sm:$0x1]
  %s263 = scalar_lea.vmem %s0, 96
  %v264 = vld [vmem:[%s263] sm:$0x2]
  %vm265 = vcmask 1041409
  %v266 = vsel %vm265, %v264, %v262
  %267 = vrot.lane.b32.xlu0 %v266, 70
  %v268 = vpop.permute.xlu0 %267
  %vm269 = vcmask 622128
  %s270 = scalar_lea.vmem %s1, 1
  %271 = vst.msk [vmem:[%s270] ss:$3 sm:$0x3] %vm269, %v268
  %s272 = scalar_lea.vmem %s0, 54
  %v273 = vld [vmem:[%s272] sm:$0x1]
  %274 = vrot.lane.b32.xlu0 %v273, 68
  %v275 = vpop.permute.xlu0 %274
  %vm276 = vcmask 605728
  %s277 = scalar_lea.vmem %s1, 2
  %278 = vst.msk [vmem:[%s277] sm:$0x1] %vm276, %v275
  %s279 = scalar_lea.vmem %s0, 11
  %v280 = vld [vmem:[%s279] sm:$0x1]
  %s281 = scalar_lea.vmem %s0, 74
  %v282 = vld [vmem:[%s281] sm:$0x2]
  %vm283 = vcmask 1041409
  %v284 = vsel %vm283, %v282, %v280
  %285 = vrot.lane.b32.xlu0 %v284, 66
  %v286 = vpop.permute.xlu0 %285
  %vm287 = vcmask 589328
  %288 = vst.msk [vmem:[%s1] ss:$3 sm:$0x3] %vm287, %v286
  %s289 = scalar_lea.vmem %s0, 32
  %v290 = vld [vmem:[%s289] sm:$0x1]
  %s291 = scalar_lea.vmem %s0, 95
  %v292 = vld [vmem:[%s291] sm:$0x2]
  %vm293 = vcmask 1041409
  %v294 = vsel %vm293, %v292, %v290
  %295 = vrot.lane.b32.xlu0 %v294, 64
  %v296 = vpop.permute.xlu0 %295
  %vm297 = vcmask 572928
  %s298 = scalar_lea.vmem %s1, 1
  %299 = vst.msk [vmem:[%s298] ss:$3 sm:$0x3] %vm297, %v296
  %s300 = scalar_lea.vmem %s0, 53
  %v301 = vld [vmem:[%s300] sm:$0x1]
  %302 = vrot.lane.b32.xlu0 %v301, 62
  %v303 = vpop.permute.xlu0 %302
  %vm304 = vcmask 556528
  %s305 = scalar_lea.vmem %s1, 2
  %306 = vst.msk [vmem:[%s305] sm:$0x1] %vm304, %v303
  %s307 = scalar_lea.vmem %s0, 10
  %v308 = vld [vmem:[%s307] sm:$0x1]
  %s309 = scalar_lea.vmem %s0, 73
  %v310 = vld [vmem:[%s309] sm:$0x2]
  %vm311 = vcmask 1041409
  %v312 = vsel %vm311, %v310, %v308
  %313 = vrot.lane.b32.xlu0 %v312, 60
  %v314 = vpop.permute.xlu0 %313
  %vm315 = vcmask 540128
  %316 = vst.msk [vmem:[%s1] ss:$3 sm:$0x3] %vm315, %v314
  %s317 = scalar_lea.vmem %s0, 31
  %v318 = vld [vmem:[%s317] sm:$0x1]
  %s319 = scalar_lea.vmem %s0, 94
  %v320 = vld [vmem:[%s319] sm:$0x2]
  %vm321 = vcmask 1041409
  %v322 = vsel %vm321, %v320, %v318
  %323 = vrot.lane.b32.xlu0 %v322, 58
  %v324 = vpop.permute.xlu0 %323
  %vm325 = vcmask 523728
  %s326 = scalar_lea.vmem %s1, 1
  %327 = vst.msk [vmem:[%s326] ss:$3 sm:$0x3] %vm325, %v324
  %s328 = scalar_lea.vmem %s0, 52
  %v329 = vld [vmem:[%s328] sm:$0x1]
  %330 = vrot.lane.b32.xlu0 %v329, 56
  %v331 = vpop.permute.xlu0 %330
  %vm332 = vcmask 507328
  %s333 = scalar_lea.vmem %s1, 2
  %334 = vst.msk [vmem:[%s333] sm:$0x1] %vm332, %v331
  %s335 = scalar_lea.vmem %s0, 9
  %v336 = vld [vmem:[%s335] sm:$0x1]
  %s337 = scalar_lea.vmem %s0, 72
  %v338 = vld [vmem:[%s337] sm:$0x2]
  %vm339 = vcmask 1041409
  %v340 = vsel %vm339, %v338, %v336
  %341 = vrot.lane.b32.xlu0 %v340, 54
  %v342 = vpop.permute.xlu0 %341
  %vm343 = vcmask 490928
  %344 = vst.msk [vmem:[%s1] ss:$3 sm:$0x3] %vm343, %v342
  %s345 = scalar_lea.vmem %s0, 30
  %v346 = vld [vmem:[%s345] sm:$0x1]
  %s347 = scalar_lea.vmem %s0, 93
  %v348 = vld [vmem:[%s347] sm:$0x2]
  %vm349 = vcmask 1041409
  %v350 = vsel %vm349, %v348, %v346
  %351 = vrot.lane.b32.xlu0 %v350, 52
  %v352 = vpop.permute.xlu0 %351
  %vm353 = vcmask 474528
  %s354 = scalar_lea.vmem %s1, 1
  %355 = vst.msk [vmem:[%s354] ss:$3 sm:$0x3] %vm353, %v352
  %s356 = scalar_lea.vmem %s0, 51
  %v357 = vld [vmem:[%s356] sm:$0x1]
  %358 = vrot.lane.b32.xlu0 %v357, 50
  %v359 = vpop.permute.xlu0 %358
  %vm360 = vcmask 458128
  %s361 = scalar_lea.vmem %s1, 2
  %362 = vst.msk [vmem:[%s361] sm:$0x1] %vm360, %v359
  %s363 = scalar_lea.vmem %s0, 8
  %v364 = vld [vmem:[%s363] sm:$0x1]
  %s365 = scalar_lea.vmem %s0, 71
  %v366 = vld [vmem:[%s365] sm:$0x2]
  %vm367 = vcmask 1041409
  %v368 = vsel %vm367, %v366, %v364
  %369 = vrot.lane.b32.xlu0 %v368, 48
  %v370 = vpop.permute.xlu0 %369
  %vm371 = vcmask 441728
  %372 = vst.msk [vmem:[%s1] ss:$3 sm:$0x3] %vm371, %v370
  %s373 = scalar_lea.vmem %s0, 29
  %v374 = vld [vmem:[%s373] sm:$0x1]
  %s375 = scalar_lea.vmem %s0, 92
  %v376 = vld [vmem:[%s375] sm:$0x2]
  %vm377 = vcmask 1041409
  %v378 = vsel %vm377, %v376, %v374
  %379 = vrot.lane.b32.xlu0 %v378, 46
  %v380 = vpop.permute.xlu0 %379
  %vm381 = vcmask 425328
  %s382 = scalar_lea.vmem %s1, 1
  %383 = vst.msk [vmem:[%s382] ss:$3 sm:$0x3] %vm381, %v380
  %s384 = scalar_lea.vmem %s0, 50
  %v385 = vld [vmem:[%s384] sm:$0x1]
  %386 = vrot.lane.b32.xlu0 %v385, 44
  %v387 = vpop.permute.xlu0 %386
  %vm388 = vcmask 408928
  %s389 = scalar_lea.vmem %s1, 2
  %390 = vst.msk [vmem:[%s389] sm:$0x1] %vm388, %v387
  %s391 = scalar_lea.vmem %s0, 7
  %v392 = vld [vmem:[%s391] sm:$0x1]
  %s393 = scalar_lea.vmem %s0, 70
  %v394 = vld [vmem:[%s393] sm:$0x2]
  %vm395 = vcmask 1041409
  %v396 = vsel %vm395, %v394, %v392
  %397 = vrot.lane.b32.xlu0 %v396, 42
  %v398 = vpop.permute.xlu0 %397
  %vm399 = vcmask 392528
  %400 = vst.msk [vmem:[%s1] ss:$3 sm:$0x3] %vm399, %v398
  %s401 = scalar_lea.vmem %s0, 28
  %v402 = vld [vmem:[%s401] sm:$0x1]
  %s403 = scalar_lea.vmem %s0, 91
  %v404 = vld [vmem:[%s403] sm:$0x2]
  %vm405 = vcmask 1041409
  %v406 = vsel %vm405, %v404, %v402
  %407 = vrot.lane.b32.xlu0 %v406, 40
  %v408 = vpop.permute.xlu0 %407
  %vm409 = vcmask 376128
  %s410 = scalar_lea.vmem %s1, 1
  %411 = vst.msk [vmem:[%s410] ss:$3 sm:$0x3] %vm409, %v408
  %s412 = scalar_lea.vmem %s0, 49
  %v413 = vld [vmem:[%s412] sm:$0x1]
  %414 = vrot.lane.b32.xlu0 %v413, 38
  %v415 = vpop.permute.xlu0 %414
  %vm416 = vcmask 359728
  %s417 = scalar_lea.vmem %s1, 2
  %418 = vst.msk [vmem:[%s417] sm:$0x1] %vm416, %v415
  %s419 = scalar_lea.vmem %s0, 6
  %v420 = vld [vmem:[%s419] sm:$0x1]
  %s421 = scalar_lea.vmem %s0, 69
  %v422 = vld [vmem:[%s421] sm:$0x2]
  %vm423 = vcmask 1041409
  %v424 = vsel %vm423, %v422, %v420
  %425 = vrot.lane.b32.xlu0 %v424, 36
  %v426 = vpop.permute.xlu0 %425
  %vm427 = vcmask 343328
  %428 = vst.msk [vmem:[%s1] ss:$3 sm:$0x3] %vm427, %v426
  %s429 = scalar_lea.vmem %s0, 27
  %v430 = vld [vmem:[%s429] sm:$0x1]
  %s431 = scalar_lea.vmem %s0, 90
  %v432 = vld [vmem:[%s431] sm:$0x2]
  %vm433 = vcmask 1041409
  %v434 = vsel %vm433, %v432, %v430
  %435 = vrot.lane.b32.xlu0 %v434, 34
  %v436 = vpop.permute.xlu0 %435
  %vm437 = vcmask 326928
  %s438 = scalar_lea.vmem %s1, 1
  %439 = vst.msk [vmem:[%s438] ss:$3 sm:$0x3] %vm437, %v436
  %s440 = scalar_lea.vmem %s0, 48
  %v441 = vld [vmem:[%s440] sm:$0x1]
  %442 = vrot.lane.b32.xlu0 %v441, 32
  %v443 = vpop.permute.xlu0 %442
  %vm444 = vcmask 310528
  %s445 = scalar_lea.vmem %s1, 2
  %446 = vst.msk [vmem:[%s445] sm:$0x1] %vm444, %v443
  %s447 = scalar_lea.vmem %s0, 5
  %v448 = vld [vmem:[%s447] sm:$0x1]
  %s449 = scalar_lea.vmem %s0, 68
  %v450 = vld [vmem:[%s449] sm:$0x2]
  %vm451 = vcmask 1041409
  %v452 = vsel %vm451, %v450, %v448
  %453 = vrot.lane.b32.xlu0 %v452, 30
  %v454 = vpop.permute.xlu0 %453
  %vm455 = vcmask 294128
  %456 = vst.msk [vmem:[%s1] ss:$3 sm:$0x3] %vm455, %v454
  %s457 = scalar_lea.vmem %s0, 26
  %v458 = vld [vmem:[%s457] sm:$0x1]
  %s459 = scalar_lea.vmem %s0, 89
  %v460 = vld [vmem:[%s459] sm:$0x2]
  %vm461 = vcmask 1041409
  %v462 = vsel %vm461, %v460, %v458
  %463 = vrot.lane.b32.xlu0 %v462, 28
  %v464 = vpop.permute.xlu0 %463
  %vm465 = vcmask 277728
  %s466 = scalar_lea.vmem %s1, 1
  %467 = vst.msk [vmem:[%s466] ss:$3 sm:$0x3] %vm465, %v464
  %s468 = scalar_lea.vmem %s0, 47
  %v469 = vld [vmem:[%s468] sm:$0x1]
  %470 = vrot.lane.b32.xlu0 %v469, 26
  %v471 = vpop.permute.xlu0 %470
  %vm472 = vcmask 261328
  %s473 = scalar_lea.vmem %s1, 2
  %474 = vst.msk [vmem:[%s473] sm:$0x1] %vm472, %v471
  %s475 = scalar_lea.vmem %s0, 4
  %v476 = vld [vmem:[%s475] sm:$0x1]
  %s477 = scalar_lea.vmem %s0, 67
  %v478 = vld [vmem:[%s477] sm:$0x2]
  %vm479 = vcmask 1041409
  %v480 = vsel %vm479, %v478, %v476
  %481 = vrot.lane.b32.xlu0 %v480, 24
  %v482 = vpop.permute.xlu0 %481
  %vm483 = vcmask 244928
  %484 = vst.msk [vmem:[%s1] ss:$3 sm:$0x3] %vm483, %v482
  %s485 = scalar_lea.vmem %s0, 25
  %v486 = vld [vmem:[%s485] sm:$0x1]
  %s487 = scalar_lea.vmem %s0, 88
  %v488 = vld [vmem:[%s487] sm:$0x2]
  %vm489 = vcmask 1041409
  %v490 = vsel %vm489, %v488, %v486
  %491 = vrot.lane.b32.xlu0 %v490, 22
  %v492 = vpop.permute.xlu0 %491
  %vm493 = vcmask 228528
  %s494 = scalar_lea.vmem %s1, 1
  %495 = vst.msk [vmem:[%s494] ss:$3 sm:$0x3] %vm493, %v492
  %s496 = scalar_lea.vmem %s0, 46
  %v497 = vld [vmem:[%s496] sm:$0x1]
  %498 = vrot.lane.b32.xlu0 %v497, 20
  %v499 = vpop.permute.xlu0 %498
  %vm500 = vcmask 212128
  %s501 = scalar_lea.vmem %s1, 2
  %502 = vst.msk [vmem:[%s501] sm:$0x1] %vm500, %v499
  %s503 = scalar_lea.vmem %s0, 3
  %v504 = vld [vmem:[%s503] sm:$0x1]
  %s505 = scalar_lea.vmem %s0, 66
  %v506 = vld [vmem:[%s505] sm:$0x2]
  %vm507 = vcmask 1041409
  %v508 = vsel %vm507, %v506, %v504
  %509 = vrot.lane.b32.xlu0 %v508, 18
  %v510 = vpop.permute.xlu0 %509
  %vm511 = vcmask 195728
  %512 = vst.msk [vmem:[%s1] ss:$3 sm:$0x3] %vm511, %v510
  %s513 = scalar_lea.vmem %s0, 24
  %v514 = vld [vmem:[%s513] sm:$0x1]
  %s515 = scalar_lea.vmem %s0, 87
  %v516 = vld [vmem:[%s515] sm:$0x2]
  %vm517 = vcmask 1041409
  %v518 = vsel %vm517, %v516, %v514
  %519 = vrot.lane.b32.xlu0 %v518, 16
  %v520 = vpop.permute.xlu0 %519
  %vm521 = vcmask 179328
  %s522 = scalar_lea.vmem %s1, 1
  %523 = vst.msk [vmem:[%s522] ss:$3 sm:$0x3] %vm521, %v520
  %s524 = scalar_lea.vmem %s0, 45
  %v525 = vld [vmem:[%s524] sm:$0x1]
  %526 = vrot.lane.b32.xlu0 %v525, 14
  %v527 = vpop.permute.xlu0 %526
  %vm528 = vcmask 162928
  %s529 = scalar_lea.vmem %s1, 2
  %530 = vst.msk [vmem:[%s529] sm:$0x1] %vm528, %v527
  %s531 = scalar_lea.vmem %s0, 2
  %v532 = vld [vmem:[%s531] sm:$0x1]
  %s533 = scalar_lea.vmem %s0, 65
  %v534 = vld [vmem:[%s533] sm:$0x2]
  %vm535 = vcmask 1041409
  %v536 = vsel %vm535, %v534, %v532
  %537 = vrot.lane.b32.xlu0 %v536, 12
  %v538 = vpop.permute.xlu0 %537
  %vm539 = vcmask 146528
  %540 = vst.msk [vmem:[%s1] ss:$3 sm:$0x3] %vm539, %v538
  %s541 = scalar_lea.vmem %s0, 23
  %v542 = vld [vmem:[%s541] sm:$0x1]
  %s543 = scalar_lea.vmem %s0, 86
  %v544 = vld [vmem:[%s543] sm:$0x2]
  %vm545 = vcmask 1041409
  %v546 = vsel %vm545, %v544, %v542
  %547 = vrot.lane.b32.xlu0 %v546, 10
  %v548 = vpop.permute.xlu0 %547
  %vm549 = vcmask 130128
  %s550 = scalar_lea.vmem %s1, 1
  %551 = vst.msk [vmem:[%s550] ss:$3 sm:$0x3] %vm549, %v548
  %s552 = scalar_lea.vmem %s0, 44
  %v553 = vld [vmem:[%s552] sm:$0x1]
  %554 = vrot.lane.b32.xlu0 %v553, 8
  %v555 = vpop.permute.xlu0 %554
  %vm556 = vcmask 113728
  %s557 = scalar_lea.vmem %s1, 2
  %558 = vst.msk [vmem:[%s557] sm:$0x1] %vm556, %v555
  %s559 = scalar_lea.vmem %s0, 1
  %v560 = vld [vmem:[%s559] sm:$0x1]
  %s561 = scalar_lea.vmem %s0, 64
  %v562 = vld [vmem:[%s561] sm:$0x2]
  %vm563 = vcmask 1041409
  %v564 = vsel %vm563, %v562, %v560
  %565 = vrot.lane.b32.xlu0 %v564, 6
  %v566 = vpop.permute.xlu0 %565
  %vm567 = vcmask 97328
  %568 = vst.msk [vmem:[%s1] ss:$3 sm:$0x3] %vm567, %v566
  %s569 = scalar_lea.vmem %s0, 22
  %v570 = vld [vmem:[%s569] sm:$0x1]
  %s571 = scalar_lea.vmem %s0, 85
  %v572 = vld [vmem:[%s571] sm:$0x2]
  %vm573 = vcmask 1041409
  %v574 = vsel %vm573, %v572, %v570
  %575 = vrot.lane.b32.xlu0 %v574, 4
  %v576 = vpop.permute.xlu0 %575
  %vm577 = vcmask 80928
  %s578 = scalar_lea.vmem %s1, 1
  %579 = vst.msk [vmem:[%s578] ss:$3 sm:$0x3] %vm577, %v576
  %s580 = scalar_lea.vmem %s0, 43
  %v581 = vld [vmem:[%s580] sm:$0x1]
  %582 = vrot.lane.b32.xlu0 %v581, 2
  %v583 = vpop.permute.xlu0 %582
  %vm584 = vcmask 64528
  %s585 = scalar_lea.vmem %s1, 2
  %586 = vst.msk [vmem:[%s585] sm:$0x1] %vm584, %v583

// kernel: tile.18
$region0: #{tile.18}
  #allocation0 [shape = 's32[1]{0}', space=sflag, size = 0x4, scoped, tag = 'scoped memory for tile.18']
  %s0 = inlined_call_operand.vmem [shape: f32[16], index: 0, kind: input, shape index: {}]
  %s1 = inlined_call_operand.vmem [shape: f32[64,16], index: 1, kind: output, shape index: {}]
  // Predicated region
  $region2: #{tile.18} parent=0 // pred_check
    _
  $region3: #{tile.18} parent=0 // pred_check_branch
    %3 = sbr.rel (0) target = $region5
  $region4: #{tile.18} parent=0 // pred_region
    _
  $region5: #{tile.18} parent=0 // pred_fallthru
    _
  %v4 = vld [vmem:[%s0] ss:$0 sm:$0xff]
  %5 = vst [vmem:[%s1] sm:$0xff] %v4
  %s6 = scalar_lea.vmem %s1, 8
  %7 = vst [vmem:[%s6] sm:$0xff] %v4
  %s8 = scalar_lea.vmem %s1, 16
  %9 = vst [vmem:[%s8] sm:$0xff] %v4
  %s10 = scalar_lea.vmem %s1, 24
  %11 = vst [vmem:[%s10] sm:$0xff] %v4
  %s12 = scalar_lea.vmem %s1, 32
  %13 = vst [vmem:[%s12] sm:$0xff] %v4
  %s14 = scalar_lea.vmem %s1, 40
  %15 = vst [vmem:[%s14] sm:$0xff] %v4
  %s16 = scalar_lea.vmem %s1, 48
  %17 = vst [vmem:[%s16] sm:$0xff] %v4
  %s18 = scalar_lea.vmem %s1, 56
  %19 = vst [vmem:[%s18] sm:$0xff] %v4

// kernel: tile.19
$region0: #{tile.19}
  %s0 = inlined_call_operand.vmem [shape: f32[64,16], index: 0, kind: input, shape index: {}]
  %s1 = inlined_call_operand.vmem [shape: f32[1,1024], index: 1, kind: output, shape index: {}]
  $region1: #{tile.19} parent=0
    #allocation0 [shape = 'u8[32768]{0}', space=vmem, size = 0x8000, scoped, tag = 'scoped mem for output reshape']
    %v2 = vld [vmem:[%s0] ss:$8 sm:$0xf]
    %v3 = vld [vmem:[%s0] ss:$8 sm:$0xf0]
    %vm4 = vcmask 1047556
    %v5 = vsel %vm4, %v3, %v2
    %vm6 = vcmask 130048
    %7 = vst.msk [vmem:[#allocation0] ss:$8 sm:$0xf] %vm6, %v5
    %8 = vst.msk [vmem:[#allocation0] ss:$8 sm:$0xf0] %vm6, %v5
    %s9 = scalar_lea.vmem %s0, 7
    %v10 = vld [vmem:[%s9] ss:$8 sm:$0xf]
    %s11 = scalar_lea.vmem %s0, 7
    %v12 = vld [vmem:[%s11] ss:$8 sm:$0xf0]
    %vm13 = vcmask 1047556
    %v14 = vsel %vm13, %v12, %v10
    %15 = vrot.lane.b32.xlu0 %v14, 112
    %v16 = vpop.permute.xlu0 %15
    %vm17 = vcmask 1048448
    %18 = vst.msk [vmem:[#allocation0] ss:$8 sm:$0xf] %vm17, %v16
    %19 = vst.msk [vmem:[#allocation0] ss:$8 sm:$0xf0] %vm17, %v16
    %s20 = scalar_lea.vmem %s0, 6
    %v21 = vld [vmem:[%s20] ss:$8 sm:$0xf]
    %s22 = scalar_lea.vmem %s0, 6
    %v23 = vld [vmem:[%s22] ss:$8 sm:$0xf0]
    %vm24 = vcmask 1047556
    %v25 = vsel %vm24, %v23, %v21
    %26 = vrot.lane.b32.xlu0 %v25, 96
    %v27 = vpop.permute.xlu0 %26
    %vm28 = vcmask 917248
    %29 = vst.msk [vmem:[#allocation0] ss:$8 sm:$0xf] %vm28, %v27
    %30 = vst.msk [vmem:[#allocation0] ss:$8 sm:$0xf0] %vm28, %v27
    %s31 = scalar_lea.vmem %s0, 5
    %v32 = vld [vmem:[%s31] ss:$8 sm:$0xf]
    %s33 = scalar_lea.vmem %s0, 5
    %v34 = vld [vmem:[%s33] ss:$8 sm:$0xf0]
    %vm35 = vcmask 1047556
    %v36 = vsel %vm35, %v34, %v32
    %37 = vrot.lane.b32.xlu0 %v36, 80
    %v38 = vpop.permute.xlu0 %37
    %vm39 = vcmask 786048
    %40 = vst.msk [vmem:[#allocation0] ss:$8 sm:$0xf] %vm39, %v38
    %41 = vst.msk [vmem:[#allocation0] ss:$8 sm:$0xf0] %vm39, %v38
    %s42 = scalar_lea.vmem %s0, 4
    %v43 = vld [vmem:[%s42] ss:$8 sm:$0xf]
    %s44 = scalar_lea.vmem %s0, 4
    %v45 = vld [vmem:[%s44] ss:$8 sm:$0xf0]
    %vm46 = vcmask 1047556
    %v47 = vsel %vm46, %v45, %v43
    %48 = vrot.lane.b32.xlu0 %v47, 64
    %v49 = vpop.permute.xlu0 %48
    %vm50 = vcmask 654848
    %51 = vst.msk [vmem:[#allocation0] ss:$8 sm:$0xf] %vm50, %v49
    %52 = vst.msk [vmem:[#allocation0] ss:$8 sm:$0xf0] %vm50, %v49
    %s53 = scalar_lea.vmem %s0, 3
    %v54 = vld [vmem:[%s53] ss:$8 sm:$0xf]
    %s55 = scalar_lea.vmem %s0, 3
    %v56 = vld [vmem:[%s55] ss:$8 sm:$0xf0]
    %vm57 = vcmask 1047556
    %v58 = vsel %vm57, %v56, %v54
    %59 = vrot.lane.b32.xlu0 %v58, 48
    %v60 = vpop.permute.xlu0 %59
    %vm61 = vcmask 523648
    %62 = vst.msk [vmem:[#allocation0] ss:$8 sm:$0xf] %vm61, %v60
    %63 = vst.msk [vmem:[#allocation0] ss:$8 sm:$0xf0] %vm61, %v60
    %s64 = scalar_lea.vmem %s0, 2
    %v65 = vld [vmem:[%s64] ss:$8 sm:$0xf]
    %s66 = scalar_lea.vmem %s0, 2
    %v67 = vld [vmem:[%s66] ss:$8 sm:$0xf0]
    %vm68 = vcmask 1047556
    %v69 = vsel %vm68, %v67, %v65
    %70 = vrot.lane.b32.xlu0 %v69, 32
    %v71 = vpop.permute.xlu0 %70
    %vm72 = vcmask 392448
    %73 = vst.msk [vmem:[#allocation0] ss:$8 sm:$0xf] %vm72, %v71
    %74 = vst.msk [vmem:[#allocation0] ss:$8 sm:$0xf0] %vm72, %v71
    %s75 = scalar_lea.vmem %s0, 1
    %v76 = vld [vmem:[%s75] ss:$8 sm:$0xf]
    %s77 = scalar_lea.vmem %s0, 1
    %v78 = vld [vmem:[%s77] ss:$8 sm:$0xf0]
    %vm79 = vcmask 1047556
    %v80 = vsel %vm79, %v78, %v76
    %81 = vrot.lane.b32.xlu0 %v80, 16
    %v82 = vpop.permute.xlu0 %81
    %vm83 = vcmask 261248
    %84 = vst.msk [vmem:[#allocation0] ss:$8 sm:$0xf] %vm83, %v82
    %85 = vst.msk [vmem:[#allocation0] ss:$8 sm:$0xf0] %vm83, %v82
    %s87 = sshll.u32 1, 1
    %s88 = ssub.s32 %s87, 1
    %v90 = vld [vmem:[#allocation0] sm:%s88]
    %s91 = sshll.u32 1, 1
    %s92 = ssub.s32 %s91, 1
    %93 = vst [vmem:[%s1] sm:%s92] %v90
    %s94 = scalar_lea.vmem [#allocation0], 8
    %v95 = vld [vmem:[%s94] sm:%s88]
    %s96 = sshll.u32 1, 1
    %s97 = ssub.s32 %s96, 1
    %s98 = scalar_lea.vmem %s1, 1
    %99 = vst [vmem:[%s98] sm:%s97] %v95
    %s100 = scalar_lea.vmem [#allocation0], 16
    %v101 = vld [vmem:[%s100] sm:%s88]
    %s102 = sshll.u32 1, 1
    %s103 = ssub.s32 %s102, 1
    %s104 = smul.addr 1, 2
    %s105 = scalar_lea.vmem %s1, %s104
    %106 = vst [vmem:[%s105] sm:%s103] %v101
    %s107 = scalar_lea.vmem [#allocation0], 24
    %v108 = vld [vmem:[%s107] sm:%s88]
    %s109 = sshll.u32 1, 1
    %s110 = ssub.s32 %s109, 1
    %s111 = smul.addr 1, 3
    %s112 = scalar_lea.vmem %s1, %s111
    %113 = vst [vmem:[%s112] sm:%s110] %v108
    %s114 = scalar_lea.vmem [#allocation0], 32
    %v115 = vld [vmem:[%s114] sm:%s88]
    %s116 = sshll.u32 1, 1
    %s117 = ssub.s32 %s116, 1
    %s118 = smul.addr 1, 4
    %s119 = scalar_lea.vmem %s1, %s118
    %120 = vst [vmem:[%s119] sm:%s117] %v115
    %s121 = scalar_lea.vmem [#allocation0], 40
    %v122 = vld [vmem:[%s121] sm:%s88]
    %s123 = sshll.u32 1, 1
    %s124 = ssub.s32 %s123, 1
    %s125 = smul.addr 1, 5
    %s126 = scalar_lea.vmem %s1, %s125
    %127 = vst [vmem:[%s126] sm:%s124] %v122
    %s128 = scalar_lea.vmem [#allocation0], 48
    %v129 = vld [vmem:[%s128] sm:%s88]
    %s130 = sshll.u32 1, 1
    %s131 = ssub.s32 %s130, 1
    %s132 = smul.addr 1, 6
    %s133 = scalar_lea.vmem %s1, %s132
    %134 = vst [vmem:[%s133] sm:%s131] %v129
    %s135 = scalar_lea.vmem [#allocation0], 56
    %v136 = vld [vmem:[%s135] sm:%s88]
    %s137 = sshll.u32 1, 1
    %s138 = ssub.s32 %s137, 1
    %s139 = smul.addr 1, 7
    %s140 = scalar_lea.vmem %s1, %s139
    %141 = vst [vmem:[%s140] sm:%s138] %v136

// kernel: lenet_forward.1
$region0: #{lenet_forward.1}
  #allocation0 [shape = 'u32[]', space=smem, size = 0x4, offset = 0x4, fixed_abs, tag = 'smem constant byte address 0x4 - core index']
  #allocation1 [shape = 'u32[144,128]{1,0:T(1,128)}', space=vmem, size = 0x12000, scoped, tag = 'internal scratch']
  %s0 = inlined_call_operand.vmem [shape: f32[8,64], index: 0, kind: input, shape index: {}]
  %s1 = inlined_call_operand.vmem [shape: f32[64,640], index: 1, kind: input, shape index: {}]
  %s2 = inlined_call_operand.vmem [shape: f32[1,640], index: 2, kind: input, shape index: {}]
  %s3 = inlined_call_operand.vmem [shape: f32[640,1024], index: 3, kind: input, shape index: {}]
  %s4 = inlined_call_operand.vmem [shape: f32[1,1024], index: 4, kind: input, shape index: {}]
  %s5 = inlined_call_operand.vmem [shape: f32[256,128], index: 5, kind: input, shape index: {}]
  %s6 = inlined_call_operand.vmem [shape: f32[1,128], index: 6, kind: input, shape index: {}]
  %s7 = inlined_call_operand.vmem [shape: f32[128,128], index: 7, kind: input, shape index: {}]
  %s8 = inlined_call_operand.vmem [shape: f32[1,128], index: 8, kind: input, shape index: {}]
  %s9 = inlined_call_operand.vmem [shape: f32[128,896], index: 9, kind: input, shape index: {}]
  %s10 = inlined_call_operand.vmem [shape: f32[1,896], index: 10, kind: input, shape index: {}]
  %s11 = inlined_call_operand.vmem [shape: f32[8,896], index: 11, kind: output, shape index: {}]
  %s12 = sld [smem:[#allocation0]]
  $region54: #{lenet_forward.1} parent=0
    _
  %s14 = ssub.s32 1, %s12
  %s15 = scalar_select 0, %s14, %s12
  // Predicated region
  $region2: #{lenet_forward.1} parent=0 // pred_check
    _
  $region3: #{lenet_forward.1} parent=0 // pred_check_branch
    %17 = sbr.rel (0) target = $region5
  $region4: #{lenet_forward.1} parent=0 // pred_region
    _
  $region5: #{lenet_forward.1} parent=0 // pred_fallthru
    _
  // Predicated region
  $region6: #{lenet_forward.1} parent=0 // pred_check
    _
  $region7: #{lenet_forward.1} parent=0 // pred_check_branch
    %19 = sbr.rel (0) target = $region9
  $region8: #{lenet_forward.1} parent=0 // pred_region
    _
  $region9: #{lenet_forward.1} parent=0 // pred_fallthru
    _
  // Predicated region
  $region10: #{lenet_forward.1} parent=0 // pred_check
    _
  $region11: #{lenet_forward.1} parent=0 // pred_check_branch
    %21 = sbr.rel (0) target = $region13
  $region12: #{lenet_forward.1} parent=0 // pred_region
    _
  $region13: #{lenet_forward.1} parent=0 // pred_fallthru
    _
  // Predicated region
  $region14: #{lenet_forward.1} parent=0 // pred_check
    _
  $region15: #{lenet_forward.1} parent=0 // pred_check_branch
    %23 = sbr.rel (0) target = $region17
  $region16: #{lenet_forward.1} parent=0 // pred_region
    _
  $region17: #{lenet_forward.1} parent=0 // pred_fallthru
    _
  // Predicated region
  $region18: #{lenet_forward.1} parent=0 // pred_check
    _
  $region19: #{lenet_forward.1} parent=0 // pred_check_branch
    %25 = sbr.rel (0) target = $region21
  $region20: #{lenet_forward.1} parent=0 // pred_region
    _
  $region21: #{lenet_forward.1} parent=0 // pred_fallthru
    _
  // Predicated region
  $region22: #{lenet_forward.1} parent=0 // pred_check
    _
  $region23: #{lenet_forward.1} parent=0 // pred_check_branch
    %27 = sbr.rel (0) target = $region25
  $region24: #{lenet_forward.1} parent=0 // pred_region
    _
  $region25: #{lenet_forward.1} parent=0 // pred_fallthru
    _
  // Predicated region
  $region26: #{lenet_forward.1} parent=0 // pred_check
    _
  $region27: #{lenet_forward.1} parent=0 // pred_check_branch
    %29 = sbr.rel (0) target = $region29
  $region28: #{lenet_forward.1} parent=0 // pred_region
    _
  $region29: #{lenet_forward.1} parent=0 // pred_fallthru
    _
  // Predicated region
  $region30: #{lenet_forward.1} parent=0 // pred_check
    _
  $region31: #{lenet_forward.1} parent=0 // pred_check_branch
    %31 = sbr.rel (0) target = $region33
  $region32: #{lenet_forward.1} parent=0 // pred_region
    _
  $region33: #{lenet_forward.1} parent=0 // pred_fallthru
    _
  // Predicated region
  $region34: #{lenet_forward.1} parent=0 // pred_check
    _
  $region35: #{lenet_forward.1} parent=0 // pred_check_branch
    %33 = sbr.rel (0) target = $region37
  $region36: #{lenet_forward.1} parent=0 // pred_region
    _
  $region37: #{lenet_forward.1} parent=0 // pred_fallthru
    _
  // Predicated region
  $region38: #{lenet_forward.1} parent=0 // pred_check
    _
  $region39: #{lenet_forward.1} parent=0 // pred_check_branch
    %35 = sbr.rel (0) target = $region41
  $region40: #{lenet_forward.1} parent=0 // pred_region
    _
  $region41: #{lenet_forward.1} parent=0 // pred_fallthru
    _
  // Predicated region
  $region42: #{lenet_forward.1} parent=0 // pred_check
    _
  $region43: #{lenet_forward.1} parent=0 // pred_check_branch
    %37 = sbr.rel (0) target = $region45
  $region44: #{lenet_forward.1} parent=0 // pred_region
    _
  $region45: #{lenet_forward.1} parent=0 // pred_fallthru
    _
  %v38 = vld [vmem:[%s0] sm:$0xff]
  %v39 = vld [vmem:[%s1] sm:$0xff]
  %v40 = vld [vmem:[%s1 + $0x8] sm:$0xff]
  %v41 = vld [vmem:[%s1 + $0x10] sm:$0xff]
  %v42 = vld [vmem:[%s1 + $0x18] sm:$0xff]
  %v43 = vld [vmem:[%s1 + $0x20] sm:$0xff]
  %v44 = vld [vmem:[%s1 + $0x28] sm:$0xff]
  %v45 = vld [vmem:[%s1 + $0x30] sm:$0xff]
  %v46 = vld [vmem:[%s1 + $0x38] sm:$0xff]
  %v47 = vld [vmem:[%s1 + $0x40] sm:$0xff]
  %v48 = vld [vmem:[%s1 + $0x48] sm:$0xff]
  %v49 = vld [vmem:[%s1 + $0x50] sm:$0xff]
  %v50 = vld [vmem:[%s1 + $0x58] sm:$0xff]
  %v51 = vld [vmem:[%s1 + $0x60] sm:$0xff]
  %v52 = vld [vmem:[%s1 + $0x68] sm:$0xff]
  %v53 = vld [vmem:[%s1 + $0x70] sm:$0xff]
  %v54 = vld [vmem:[%s1 + $0x78] sm:$0xff]
  %v55 = vld [vmem:[%s1 + $0x80] sm:$0xff]
  %v56 = vld [vmem:[%s1 + $0x88] sm:$0xff]
  %v57 = vld [vmem:[%s1 + $0x90] sm:$0xff]
  %v58 = vld [vmem:[%s1 + $0x98] sm:$0xff]
  %v59 = vld [vmem:[%s1 + $0xa0] sm:$0xff]
  %v60 = vld [vmem:[%s1 + $0xa8] sm:$0xff]
  %v61 = vld [vmem:[%s1 + $0xb0] sm:$0xff]
  %v62 = vld [vmem:[%s1 + $0xb8] sm:$0xff]
  %v63 = vld [vmem:[%s1 + $0xc0] sm:$0xff]
  %v64 = vld [vmem:[%s1 + $0xc8] sm:$0xff]
  %v65 = vld [vmem:[%s1 + $0xd0] sm:$0xff]
  %v66 = vld [vmem:[%s1 + $0xd8] sm:$0xff]
  %v67 = vld [vmem:[%s1 + $0xe0] sm:$0xff]
  %v68 = vld [vmem:[%s1 + $0xe8] sm:$0xff]
  %v69 = vld [vmem:[%s1 + $0xf0] sm:$0xff]
  %v70 = vld [vmem:[%s1 + $0xf8] sm:$0xff]
  %v71 = vld [vmem:[%s1 + $0x100] sm:$0xff]
  %v72 = vld [vmem:[%s1 + $0x108] sm:$0xff]
  %v73 = vld [vmem:[%s1 + $0x110] sm:$0xff]
  %v74 = vld [vmem:[%s1 + $0x118] sm:$0xff]
  %v75 = vld [vmem:[%s1 + $0x120] sm:$0xff]
  %v76 = vld [vmem:[%s1 + $0x128] sm:$0xff]
  %v77 = vld [vmem:[%s1 + $0x130] sm:$0xff]
  %v78 = vld [vmem:[%s1 + $0x138] sm:$0xff]
  %v79 = vld [vmem:[%s2] sm:$0x1f]
  %v81 = vlaneseq
  %v82 = vshrl.u32 %v81, 7
  %v83 = vsub.s32 0, %v82
  %v84 = vrot.slane %v79, %v83
  %v85 = vlaneseq
  %v86 = vshrl.u32 %v85, 7
  %v87 = vsub.s32 1, %v86
  %v88 = vrot.slane %v79, %v87
  %v89 = vlaneseq
  %v90 = vshrl.u32 %v89, 7
  %v91 = vsub.s32 2, %v90
  %v92 = vrot.slane %v79, %v91
  %v93 = vlaneseq
  %v94 = vshrl.u32 %v93, 7
  %v95 = vsub.s32 3, %v94
  %v96 = vrot.slane %v79, %v95
  %v97 = vlaneseq
  %v98 = vshrl.u32 %v97, 7
  %v99 = vsub.s32 4, %v98
  %v100 = vrot.slane %v79, %v99
  %vm106 = vcmask 523264
  %v108 = vsel %vm106, %v38, 0
  %110 = vmatprep.subr.mxu0 0.0
  %111 = vmatpush1.msra.mxu0 0.0
  %112 = vmatprep.subr.mxu0 0.0
  %113 = vmatpush1.msra.mxu0 0.0
  %114 = vmatprep.subr.mxu0 0.0
  %115 = vmatpush1.msra.mxu0 0.0
  %116 = vmatprep.subr.mxu0 0.0
  %117 = vmatpush1.msra.mxu0 0.0
  %118 = vmatprep.subr.mxu0 0.0
  %119 = vmatpush1.msra.mxu0 0.0
  %120 = vmatprep.subr.mxu0 0.0
  %121 = vmatpush1.msra.mxu0 0.0
  %122 = vmatprep.subr.mxu0 0.0
  %123 = vmatpush1.msra.mxu0 0.0
  %124 = vmatprep.subr.mxu0 0.0
  %125 = vmatpush1.msra.mxu0 0.0
  %126 = vmatprep.subr.mxu0 %v75
  %127 = vmatpush1.msra.mxu0 %v74
  %128 = vmatprep.subr.mxu0 %v70
  %129 = vmatpush1.msra.mxu0 %v69
  %130 = vmatprep.subr.mxu0 %v65
  %131 = vmatpush1.msra.mxu0 %v64
  %132 = vmatprep.subr.mxu0 %v60
  %133 = vmatpush1.msra.mxu0 %v59
  %134 = vmatprep.subr.mxu0 %v55
  %135 = vmatpush1.msra.mxu0 %v54
  %136 = vmatprep.subr.mxu0 %v50
  %137 = vmatpush1.msra.mxu0 %v49
  %138 = vmatprep.subr.mxu0 %v45
  %139 = vmatpush1.msra.mxu0 %v44
  %140 = vmatprep.subr.mxu0 %v40
  %141 = vmatpush1.msra.mxu0 %v39
  %142 = vmatprep.subr.mxu0 0.0
  %143 = vmatpush2.msra.mxu0 0.0
  %144 = vmatprep.subr.mxu0 0.0
  %145 = vmatpush2.msra.mxu0 0.0
  %146 = vmatprep.subr.mxu0 0.0
  %147 = vmatpush2.msra.mxu0 0.0
  %148 = vmatprep.subr.mxu0 0.0
  %149 = vmatpush2.msra.mxu0 0.0
  %150 = vmatprep.subr.mxu0 0.0
  %151 = vmatpush2.msra.mxu0 0.0
  %152 = vmatprep.subr.mxu0 0.0
  %153 = vmatpush2.msra.mxu0 0.0
  %154 = vmatprep.subr.mxu0 0.0
  %155 = vmatpush2.msra.mxu0 0.0
  %156 = vmatprep.subr.mxu0 0.0
  %157 = vmatpush2.msra.mxu0 0.0
  %158 = vmatprep.subr.mxu0 0.0
  %159 = vmatpush2.msra.mxu0 0.0
  %160 = vmatprep.subr.mxu0 0.0
  %161 = vmatpush2.msra.mxu0 0.0
  %162 = vmatprep.subr.mxu0 0.0
  %163 = vmatpush2.msra.mxu0 0.0
  %164 = vmatprep.subr.mxu0 0.0
  %165 = vmatpush2.msra.mxu0 0.0
  %166 = vmatprep.subr.mxu0 0.0
  %167 = vmatpush2.msra.mxu0 0.0
  %168 = vmatprep.subr.mxu0 0.0
  %169 = vmatpush2.msra.mxu0 0.0
  %170 = vmatprep.subr.mxu0 0.0
  %171 = vmatpush2.msra.mxu0 0.0
  %172 = vmatprep.subr.mxu0 0.0
  %173 = vmatpush2.msra.mxu0 0.0
  %174 = vmatprep.mubr.f32.mxu0 0.0
  %175 = vmatmul.mubr.f32.gmra.mxu0 %v108
  %v176 = vpop.f32.mrf.mxu0
  %v177 = vadd.f32 %v84, %v176
  %v178 = vpop.f32.mrf.mxu0
  %v179 = vadd.f32 %v88, %v178
  %180 = vdwg.mxu0
  %181 = vmatprep.subr.mxu0 0.0
  %182 = vmatpush1.msra.mxu0 0.0
  %183 = vmatprep.subr.mxu0 0.0
  %184 = vmatpush1.msra.mxu0 0.0
  %185 = vmatprep.subr.mxu0 0.0
  %186 = vmatpush1.msra.mxu0 0.0
  %187 = vmatprep.subr.mxu0 0.0
  %188 = vmatpush1.msra.mxu0 0.0
  %189 = vmatprep.subr.mxu0 0.0
  %190 = vmatpush1.msra.mxu0 0.0
  %191 = vmatprep.subr.mxu0 0.0
  %192 = vmatpush1.msra.mxu0 0.0
  %193 = vmatprep.subr.mxu0 0.0
  %194 = vmatpush1.msra.mxu0 0.0
  %195 = vmatprep.subr.mxu0 0.0
  %196 = vmatpush1.msra.mxu0 0.0
  %197 = vmatprep.subr.mxu0 %v77
  %198 = vmatpush1.msra.mxu0 %v76
  %199 = vmatprep.subr.mxu0 %v72
  %200 = vmatpush1.msra.mxu0 %v71
  %201 = vmatprep.subr.mxu0 %v67
  %202 = vmatpush1.msra.mxu0 %v66
  %203 = vmatprep.subr.mxu0 %v62
  %204 = vmatpush1.msra.mxu0 %v61
  %205 = vmatprep.subr.mxu0 %v57
  %206 = vmatpush1.msra.mxu0 %v56
  %207 = vmatprep.subr.mxu0 %v52
  %208 = vmatpush1.msra.mxu0 %v51
  %209 = vmatprep.subr.mxu0 %v47
  %210 = vmatpush1.msra.mxu0 %v46
  %211 = vmatprep.subr.mxu0 %v42
  %212 = vmatpush1.msra.mxu0 %v41
  %213 = vmatprep.subr.mxu0 0.0
  %214 = vmatpush2.msra.mxu0 0.0
  %215 = vmatprep.subr.mxu0 0.0
  %216 = vmatpush2.msra.mxu0 0.0
  %217 = vmatprep.subr.mxu0 0.0
  %218 = vmatpush2.msra.mxu0 0.0
  %219 = vmatprep.subr.mxu0 0.0
  %220 = vmatpush2.msra.mxu0 0.0
  %221 = vmatprep.subr.mxu0 0.0
  %222 = vmatpush2.msra.mxu0 0.0
  %223 = vmatprep.subr.mxu0 0.0
  %224 = vmatpush2.msra.mxu0 0.0
  %225 = vmatprep.subr.mxu0 0.0
  %226 = vmatpush2.msra.mxu0 0.0
  %227 = vmatprep.subr.mxu0 0.0
  %228 = vmatpush2.msra.mxu0 0.0
  %229 = vmatprep.subr.mxu0 0.0
  %230 = vmatpush2.msra.mxu0 0.0
  %231 = vmatprep.subr.mxu0 0.0
  %232 = vmatpush2.msra.mxu0 0.0
  %233 = vmatprep.subr.mxu0 0.0
  %234 = vmatpush2.msra.mxu0 0.0
  %235 = vmatprep.subr.mxu0 0.0
  %236 = vmatpush2.msra.mxu0 0.0
  %237 = vmatprep.subr.mxu0 0.0
  %238 = vmatpush2.msra.mxu0 0.0
  %239 = vmatprep.subr.mxu0 0.0
  %240 = vmatpush2.msra.mxu0 0.0
  %241 = vmatprep.subr.mxu0 0.0
  %242 = vmatpush2.msra.mxu0 0.0
  %243 = vmatprep.subr.mxu0 0.0
  %244 = vmatpush2.msra.mxu0 0.0
  %245 = vmatprep.mubr.f32.mxu0 0.0
  %246 = vmatmul.mubr.f32.gmra.mxu0 %v108
  %v247 = vpop.f32.mrf.mxu0
  %v248 = vadd.f32 %v92, %v247
  %v249 = vpop.f32.mrf.mxu0
  %v250 = vadd.f32 %v96, %v249
  %251 = vdwg.mxu0
  %252 = vmatprep.subr.mxu0 0.0
  %253 = vmatpush1.msra.mxu0 0.0
  %254 = vmatprep.subr.mxu0 0.0
  %255 = vmatpush1.msra.mxu0 0.0
  %256 = vmatprep.subr.mxu0 0.0
  %257 = vmatpush1.msra.mxu0 0.0
  %258 = vmatprep.subr.mxu0 0.0
  %259 = vmatpush1.msra.mxu0 0.0
  %260 = vmatprep.subr.mxu0 0.0
  %261 = vmatpush1.msra.mxu0 0.0
  %262 = vmatprep.subr.mxu0 0.0
  %263 = vmatpush1.msra.mxu0 0.0
  %264 = vmatprep.subr.mxu0 0.0
  %265 = vmatpush1.msra.mxu0 0.0
  %266 = vmatprep.subr.mxu0 0.0
  %267 = vmatpush1.msra.mxu0 0.0
  %268 = vmatprep.subr.mxu0 0.0
  %269 = vmatpush1.msra.mxu0 %v78
  %270 = vmatprep.subr.mxu0 0.0
  %271 = vmatpush1.msra.mxu0 %v73
  %272 = vmatprep.subr.mxu0 0.0
  %273 = vmatpush1.msra.mxu0 %v68
  %274 = vmatprep.subr.mxu0 0.0
  %275 = vmatpush1.msra.mxu0 %v63
  %276 = vmatprep.subr.mxu0 0.0
  %277 = vmatpush1.msra.mxu0 %v58
  %278 = vmatprep.subr.mxu0 0.0
  %279 = vmatpush1.msra.mxu0 %v53
  %280 = vmatprep.subr.mxu0 0.0
  %281 = vmatpush1.msra.mxu0 %v48
  %282 = vmatprep.subr.mxu0 0.0
  %283 = vmatpush1.msra.mxu0 %v43
  %284 = vmatprep.subr.mxu0 0.0
  %285 = vmatpush2.msra.mxu0 0.0
  %286 = vmatprep.subr.mxu0 0.0
  %287 = vmatpush2.msra.mxu0 0.0
  %288 = vmatprep.subr.mxu0 0.0
  %289 = vmatpush2.msra.mxu0 0.0
  %290 = vmatprep.subr.mxu0 0.0
  %291 = vmatpush2.msra.mxu0 0.0
  %292 = vmatprep.subr.mxu0 0.0
  %293 = vmatpush2.msra.mxu0 0.0
  %294 = vmatprep.subr.mxu0 0.0
  %295 = vmatpush2.msra.mxu0 0.0
  %296 = vmatprep.subr.mxu0 0.0
  %297 = vmatpush2.msra.mxu0 0.0
  %298 = vmatprep.subr.mxu0 0.0
  %299 = vmatpush2.msra.mxu0 0.0
  %300 = vmatprep.subr.mxu0 0.0
  %301 = vmatpush2.msra.mxu0 0.0
  %302 = vmatprep.subr.mxu0 0.0
  %303 = vmatpush2.msra.mxu0 0.0
  %304 = vmatprep.subr.mxu0 0.0
  %305 = vmatpush2.msra.mxu0 0.0
  %306 = vmatprep.subr.mxu0 0.0
  %307 = vmatpush2.msra.mxu0 0.0
  %308 = vmatprep.subr.mxu0 0.0
  %309 = vmatpush2.msra.mxu0 0.0
  %310 = vmatprep.subr.mxu0 0.0
  %311 = vmatpush2.msra.mxu0 0.0
  %312 = vmatprep.subr.mxu0 0.0
  %313 = vmatpush2.msra.mxu0 0.0
  %314 = vmatprep.subr.mxu0 0.0
  %315 = vmatpush2.msra.mxu0 0.0
  %316 = vmatprep.mubr.f32.mxu0 0.0
  %317 = vmatmul.mubr.f32.gmra.mxu0 %v108
  %v318 = vpop.f32.mrf.mxu0
  %v319 = vadd.f32 %v100, %v318
  %v320 = vpop.f32.mrf.mxu0
  %321 = vdwg.mxu0
  %v322 = vmax.f32 %v177, 0.0
  %v323 = vmax.f32 %v179, 0.0
  %v324 = vmax.f32 %v248, 0.0
  %v325 = vmax.f32 %v250, 0.0
  %v326 = vmax.f32 %v319, 0.0
  %v327 = vld [vmem:[%s3] sm:$0xff]
  %v328 = vld [vmem:[%s3 + $0x8] sm:$0xff]
  %v329 = vld [vmem:[%s3 + $0x10] sm:$0xff]
  %v330 = vld [vmem:[%s3 + $0x18] sm:$0xff]
  %v331 = vld [vmem:[%s3 + $0x20] sm:$0xff]
  %v332 = vld [vmem:[%s3 + $0x28] sm:$0xff]
  %v333 = vld [vmem:[%s3 + $0x30] sm:$0xff]
  %v334 = vld [vmem:[%s3 + $0x38] sm:$0xff]
  %v335 = vld [vmem:[%s3 + $0x40] sm:$0xff]
  %v336 = vld [vmem:[%s3 + $0x48] sm:$0xff]
  %v337 = vld [vmem:[%s3 + $0x50] sm:$0xff]
  %v338 = vld [vmem:[%s3 + $0x58] sm:$0xff]
  %v339 = vld [vmem:[%s3 + $0x60] sm:$0xff]
  %v340 = vld [vmem:[%s3 + $0x68] sm:$0xff]
  %v341 = vld [vmem:[%s3 + $0x70] sm:$0xff]
  %v342 = vld [vmem:[%s3 + $0x78] sm:$0xff]
  %v343 = vld [vmem:[%s3 + $0x80] sm:$0xff]
  %v344 = vld [vmem:[%s3 + $0x88] sm:$0xff]
  %v345 = vld [vmem:[%s3 + $0x90] sm:$0xff]
  %v346 = vld [vmem:[%s3 + $0x98] sm:$0xff]
  %v347 = vld [vmem:[%s3 + $0xa0] sm:$0xff]
  %v348 = vld [vmem:[%s3 + $0xa8] sm:$0xff]
  %v349 = vld [vmem:[%s3 + $0xb0] sm:$0xff]
  %v350 = vld [vmem:[%s3 + $0xb8] sm:$0xff]
  %v351 = vld [vmem:[%s3 + $0xc0] sm:$0xff]
  %v352 = vld [vmem:[%s3 + $0xc8] sm:$0xff]
  %v353 = vld [vmem:[%s3 + $0xd0] sm:$0xff]
  %v354 = vld [vmem:[%s3 + $0xd8] sm:$0xff]
  %v355 = vld [vmem:[%s3 + $0xe0] sm:$0xff]
  %v356 = vld [vmem:[%s3 + $0xe8] sm:$0xff]
  %v357 = vld [vmem:[%s3 + $0xf0] sm:$0xff]
  %v358 = vld [vmem:[%s3 + $0xf8] sm:$0xff]
  %v359 = vld [vmem:[%s3 + $0x100] sm:$0xff]
  %v360 = vld [vmem:[%s3 + $0x108] sm:$0xff]
  %v361 = vld [vmem:[%s3 + $0x110] sm:$0xff]
  %v362 = vld [vmem:[%s3 + $0x118] sm:$0xff]
  %v363 = vld [vmem:[%s3 + $0x120] sm:$0xff]
  %v364 = vld [vmem:[%s3 + $0x128] sm:$0xff]
  %v365 = vld [vmem:[%s3 + $0x130] sm:$0xff]
  %v366 = vld [vmem:[%s3 + $0x138] sm:$0xff]
  %v367 = vld [vmem:[%s3 + $0x140] sm:$0xff]
  %v368 = vld [vmem:[%s3 + $0x148] sm:$0xff]
  %v369 = vld [vmem:[%s3 + $0x150] sm:$0xff]
  %v370 = vld [vmem:[%s3 + $0x158] sm:$0xff]
  %v371 = vld [vmem:[%s3 + $0x160] sm:$0xff]
  %v372 = vld [vmem:[%s3 + $0x168] sm:$0xff]
  %v373 = vld [vmem:[%s3 + $0x170] sm:$0xff]
  %v374 = vld [vmem:[%s3 + $0x178] sm:$0xff]
  %v375 = vld [vmem:[%s3 + $0x180] sm:$0xff]
  %v376 = vld [vmem:[%s3 + $0x188] sm:$0xff]
  %v377 = vld [vmem:[%s3 + $0x190] sm:$0xff]
  %v378 = vld [vmem:[%s3 + $0x198] sm:$0xff]
  %v379 = vld [vmem:[%s3 + $0x1a0] sm:$0xff]
  %v380 = vld [vmem:[%s3 + $0x1a8] sm:$0xff]
  %v381 = vld [vmem:[%s3 + $0x1b0] sm:$0xff]
  %v382 = vld [vmem:[%s3 + $0x1b8] sm:$0xff]
  %v383 = vld [vmem:[%s3 + $0x1c0] sm:$0xff]
  %v384 = vld [vmem:[%s3 + $0x1c8] sm:$0xff]
  %v385 = vld [vmem:[%s3 + $0x1d0] sm:$0xff]
  %v386 = vld [vmem:[%s3 + $0x1d8] sm:$0xff]
  %v387 = vld [vmem:[%s3 + $0x1e0] sm:$0xff]
  %v388 = vld [vmem:[%s3 + $0x1e8] sm:$0xff]
  %v389 = vld [vmem:[%s3 + $0x1f0] sm:$0xff]
  %v390 = vld [vmem:[%s3 + $0x1f8] sm:$0xff]
  %v391 = vld [vmem:[%s3 + $0x200] sm:$0xff]
  %v392 = vld [vmem:[%s3 + $0x208] sm:$0xff]
  %v393 = vld [vmem:[%s3 + $0x210] sm:$0xff]
  %v394 = vld [vmem:[%s3 + $0x218] sm:$0xff]
  %v395 = vld [vmem:[%s3 + $0x220] sm:$0xff]
  %v396 = vld [vmem:[%s3 + $0x228] sm:$0xff]
  %v397 = vld [vmem:[%s3 + $0x230] sm:$0xff]
  %v398 = vld [vmem:[%s3 + $0x238] sm:$0xff]
  %v399 = vld [vmem:[%s3 + $0x240] sm:$0xff]
  %v400 = vld [vmem:[%s3 + $0x248] sm:$0xff]
  %v401 = vld [vmem:[%s3 + $0x250] sm:$0xff]
  %v402 = vld [vmem:[%s3 + $0x258] sm:$0xff]
  %v403 = vld [vmem:[%s3 + $0x260] sm:$0xff]
  %v404 = vld [vmem:[%s3 + $0x268] sm:$0xff]
  %v405 = vld [vmem:[%s3 + $0x270] sm:$0xff]
  %v406 = vld [vmem:[%s3 + $0x278] sm:$0xff]
  %v407 = vld [vmem:[%s3 + $0x280] sm:$0xff]
  %v408 = vld [vmem:[%s3 + $0x288] sm:$0xff]
  %v409 = vld [vmem:[%s3 + $0x290] sm:$0xff]
  %v410 = vld [vmem:[%s3 + $0x298] sm:$0xff]
  %v411 = vld [vmem:[%s3 + $0x2a0] sm:$0xff]
  %v412 = vld [vmem:[%s3 + $0x2a8] sm:$0xff]
  %v413 = vld [vmem:[%s3 + $0x2b0] sm:$0xff]
  %v414 = vld [vmem:[%s3 + $0x2b8] sm:$0xff]
  %v415 = vld [vmem:[%s3 + $0x2c0] sm:$0xff]
  %v416 = vld [vmem:[%s3 + $0x2c8] sm:$0xff]
  %v417 = vld [vmem:[%s3 + $0x2d0] sm:$0xff]
  %v418 = vld [vmem:[%s3 + $0x2d8] sm:$0xff]
  %v419 = vld [vmem:[%s3 + $0x2e0] sm:$0xff]
  %v420 = vld [vmem:[%s3 + $0x2e8] sm:$0xff]
  %v421 = vld [vmem:[%s3 + $0x2f0] sm:$0xff]
  %v422 = vld [vmem:[%s3 + $0x2f8] sm:$0xff]
  %v423 = vld [vmem:[%s3 + $0x300] sm:$0xff]
  %v424 = vld [vmem:[%s3 + $0x308] sm:$0xff]
  %v425 = vld [vmem:[%s3 + $0x310] sm:$0xff]
  %v426 = vld [vmem:[%s3 + $0x318] sm:$0xff]
  %v427 = vld [vmem:[%s3 + $0x320] sm:$0xff]
  %v428 = vld [vmem:[%s3 + $0x328] sm:$0xff]
  %v429 = vld [vmem:[%s3 + $0x330] sm:$0xff]
  %v430 = vld [vmem:[%s3 + $0x338] sm:$0xff]
  %v431 = vld [vmem:[%s3 + $0x340] sm:$0xff]
  %v432 = vld [vmem:[%s3 + $0x348] sm:$0xff]
  %v433 = vld [vmem:[%s3 + $0x350] sm:$0xff]
  %v434 = vld [vmem:[%s3 + $0x358] sm:$0xff]
  %v435 = vld [vmem:[%s3 + $0x360] sm:$0xff]
  %v436 = vld [vmem:[%s3 + $0x368] sm:$0xff]
  %v437 = vld [vmem:[%s3 + $0x370] sm:$0xff]
  %v438 = vld [vmem:[%s3 + $0x378] sm:$0xff]
  %v439 = vld [vmem:[%s3 + $0x380] sm:$0xff]
  %v440 = vld [vmem:[%s3 + $0x388] sm:$0xff]
  %v441 = vld [vmem:[%s3 + $0x390] sm:$0xff]
  %v442 = vld [vmem:[%s3 + $0x398] sm:$0xff]
  %v443 = vld [vmem:[%s3 + $0x3a0] sm:$0xff]
  %v444 = vld [vmem:[%s3 + $0x3a8] sm:$0xff]
  %v445 = vld [vmem:[%s3 + $0x3b0] sm:$0xff]
  %v446 = vld [vmem:[%s3 + $0x3b8] sm:$0xff]
  %v447 = vld [vmem:[%s3 + $0x3c0] sm:$0xff]
  %v448 = vld [vmem:[%s3 + $0x3c8] sm:$0xff]
  %v449 = vld [vmem:[%s3 + $0x3d0] sm:$0xff]
  %v450 = vld [vmem:[%s3 + $0x3d8] sm:$0xff]
  %v451 = vld [vmem:[%s3 + $0x3e0] sm:$0xff]
  %v452 = vld [vmem:[%s3 + $0x3e8] sm:$0xff]
  %v453 = vld [vmem:[%s3 + $0x3f0] sm:$0xff]
  %v454 = vld [vmem:[%s3 + $0x3f8] sm:$0xff]
  %v455 = vld [vmem:[%s3 + $0x400] sm:$0xff]
  %v456 = vld [vmem:[%s3 + $0x408] sm:$0xff]
  %v457 = vld [vmem:[%s3 + $0x410] sm:$0xff]
  %v458 = vld [vmem:[%s3 + $0x418] sm:$0xff]
  %v459 = vld [vmem:[%s3 + $0x420] sm:$0xff]
  %v460 = vld [vmem:[%s3 + $0x428] sm:$0xff]
  %v461 = vld [vmem:[%s3 + $0x430] sm:$0xff]
  %v462 = vld [vmem:[%s3 + $0x438] sm:$0xff]
  %v463 = vld [vmem:[%s3 + $0x440] sm:$0xff]
  %v464 = vld [vmem:[%s3 + $0x448] sm:$0xff]
  %v465 = vld [vmem:[%s3 + $0x450] sm:$0xff]
  %v466 = vld [vmem:[%s3 + $0x458] sm:$0xff]
  %v467 = vld [vmem:[%s3 + $0x460] sm:$0xff]
  %v468 = vld [vmem:[%s3 + $0x468] sm:$0xff]
  %v469 = vld [vmem:[%s3 + $0x470] sm:$0xff]
  %v470 = vld [vmem:[%s3 + $0x478] sm:$0xff]
  %v471 = vld [vmem:[%s3 + $0x480] sm:$0xff]
  %v472 = vld [vmem:[%s3 + $0x488] sm:$0xff]
  %v473 = vld [vmem:[%s3 + $0x490] sm:$0xff]
  %v474 = vld [vmem:[%s3 + $0x498] sm:$0xff]
  %v475 = vld [vmem:[%s3 + $0x4a0] sm:$0xff]
  %v476 = vld [vmem:[%s3 + $0x4a8] sm:$0xff]
  %v477 = vld [vmem:[%s3 + $0x4b0] sm:$0xff]
  %v478 = vld [vmem:[%s3 + $0x4b8] sm:$0xff]
  %v479 = vld [vmem:[%s3 + $0x4c0] sm:$0xff]
  %v480 = vld [vmem:[%s3 + $0x4c8] sm:$0xff]
  %v481 = vld [vmem:[%s3 + $0x4d0] sm:$0xff]
  %v482 = vld [vmem:[%s3 + $0x4d8] sm:$0xff]
  %v483 = vld [vmem:[%s3 + $0x4e0] sm:$0xff]
  %v484 = vld [vmem:[%s3 + $0x4e8] sm:$0xff]
  %v485 = vld [vmem:[%s3 + $0x4f0] sm:$0xff]
  %v486 = vld [vmem:[%s3 + $0x4f8] sm:$0xff]
  %v487 = vld [vmem:[%s3 + $0x500] sm:$0xff]
  %v488 = vld [vmem:[%s3 + $0x508] sm:$0xff]
  %v489 = vld [vmem:[%s3 + $0x510] sm:$0xff]
  %v490 = vld [vmem:[%s3 + $0x518] sm:$0xff]
  %v491 = vld [vmem:[%s3 + $0x520] sm:$0xff]
  %v492 = vld [vmem:[%s3 + $0x528] sm:$0xff]
  %v493 = vld [vmem:[%s3 + $0x530] sm:$0xff]
  %v494 = vld [vmem:[%s3 + $0x538] sm:$0xff]
  %v495 = vld [vmem:[%s3 + $0x540] sm:$0xff]
  %v496 = vld [vmem:[%s3 + $0x548] sm:$0xff]
  %v497 = vld [vmem:[%s3 + $0x550] sm:$0xff]
  %v498 = vld [vmem:[%s3 + $0x558] sm:$0xff]
  %v499 = vld [vmem:[%s3 + $0x560] sm:$0xff]
  %v500 = vld [vmem:[%s3 + $0x568] sm:$0xff]
  %v501 = vld [vmem:[%s3 + $0x570] sm:$0xff]
  %v502 = vld [vmem:[%s3 + $0x578] sm:$0xff]
  %v503 = vld [vmem:[%s3 + $0x580] sm:$0xff]
  %v504 = vld [vmem:[%s3 + $0x588] sm:$0xff]
  %v505 = vld [vmem:[%s3 + $0x590] sm:$0xff]
  %v506 = vld [vmem:[%s3 + $0x598] sm:$0xff]
  %v507 = vld [vmem:[%s3 + $0x5a0] sm:$0xff]
  %v508 = vld [vmem:[%s3 + $0x5a8] sm:$0xff]
  %v509 = vld [vmem:[%s3 + $0x5b0] sm:$0xff]
  %v510 = vld [vmem:[%s3 + $0x5b8] sm:$0xff]
  %v511 = vld [vmem:[%s3 + $0x5c0] sm:$0xff]
  %v512 = vld [vmem:[%s3 + $0x5c8] sm:$0xff]
  %v513 = vld [vmem:[%s3 + $0x5d0] sm:$0xff]
  %v514 = vld [vmem:[%s3 + $0x5d8] sm:$0xff]
  %v515 = vld [vmem:[%s3 + $0x5e0] sm:$0xff]
  %v516 = vld [vmem:[%s3 + $0x5e8] sm:$0xff]
  %v517 = vld [vmem:[%s3 + $0x5f0] sm:$0xff]
  %v518 = vld [vmem:[%s3 + $0x5f8] sm:$0xff]
  %v519 = vld [vmem:[%s3 + $0x600] sm:$0xff]
  %v520 = vld [vmem:[%s3 + $0x608] sm:$0xff]
  %v521 = vld [vmem:[%s3 + $0x610] sm:$0xff]
  %v522 = vld [vmem:[%s3 + $0x618] sm:$0xff]
  %v523 = vld [vmem:[%s3 + $0x620] sm:$0xff]
  %v524 = vld [vmem:[%s3 + $0x628] sm:$0xff]
  %v525 = vld [vmem:[%s3 + $0x630] sm:$0xff]
  %v526 = vld [vmem:[%s3 + $0x638] sm:$0xff]
  %v527 = vld [vmem:[%s3 + $0x640] sm:$0xff]
  %v528 = vld [vmem:[%s3 + $0x648] sm:$0xff]
  %v529 = vld [vmem:[%s3 + $0x650] sm:$0xff]
  %v530 = vld [vmem:[%s3 + $0x658] sm:$0xff]
  %v531 = vld [vmem:[%s3 + $0x660] sm:$0xff]
  %v532 = vld [vmem:[%s3 + $0x668] sm:$0xff]
  %v533 = vld [vmem:[%s3 + $0x670] sm:$0xff]
  %v534 = vld [vmem:[%s3 + $0x678] sm:$0xff]
  %v535 = vld [vmem:[%s3 + $0x680] sm:$0xff]
  %v536 = vld [vmem:[%s3 + $0x688] sm:$0xff]
  %v537 = vld [vmem:[%s3 + $0x690] sm:$0xff]
  %v538 = vld [vmem:[%s3 + $0x698] sm:$0xff]
  %v539 = vld [vmem:[%s3 + $0x6a0] sm:$0xff]
  %v540 = vld [vmem:[%s3 + $0x6a8] sm:$0xff]
  %v541 = vld [vmem:[%s3 + $0x6b0] sm:$0xff]
  %v542 = vld [vmem:[%s3 + $0x6b8] sm:$0xff]
  %v543 = vld [vmem:[%s3 + $0x6c0] sm:$0xff]
  %v544 = vld [vmem:[%s3 + $0x6c8] sm:$0xff]
  %v545 = vld [vmem:[%s3 + $0x6d0] sm:$0xff]
  %v546 = vld [vmem:[%s3 + $0x6d8] sm:$0xff]
  %v547 = vld [vmem:[%s3 + $0x6e0] sm:$0xff]
  %v548 = vld [vmem:[%s3 + $0x6e8] sm:$0xff]
  %v549 = vld [vmem:[%s3 + $0x6f0] sm:$0xff]
  %v550 = vld [vmem:[%s3 + $0x6f8] sm:$0xff]
  %v551 = vld [vmem:[%s3 + $0x700] sm:$0xff]
  %v552 = vld [vmem:[%s3 + $0x708] sm:$0xff]
  %v553 = vld [vmem:[%s3 + $0x710] sm:$0xff]
  %v554 = vld [vmem:[%s3 + $0x718] sm:$0xff]
  %v555 = vld [vmem:[%s3 + $0x720] sm:$0xff]
  %v556 = vld [vmem:[%s3 + $0x728] sm:$0xff]
  %v557 = vld [vmem:[%s3 + $0x730] sm:$0xff]
  %v558 = vld [vmem:[%s3 + $0x738] sm:$0xff]
  %v559 = vld [vmem:[%s3 + $0x740] sm:$0xff]
  %v560 = vld [vmem:[%s3 + $0x748] sm:$0xff]
  %v561 = vld [vmem:[%s3 + $0x750] sm:$0xff]
  %v562 = vld [vmem:[%s3 + $0x758] sm:$0xff]
  %v563 = vld [vmem:[%s3 + $0x760] sm:$0xff]
  %v564 = vld [vmem:[%s3 + $0x768] sm:$0xff]
  %v565 = vld [vmem:[%s3 + $0x770] sm:$0xff]
  %v566 = vld [vmem:[%s3 + $0x778] sm:$0xff]
  %v567 = vld [vmem:[%s3 + $0x780] sm:$0xff]
  %v568 = vld [vmem:[%s3 + $0x788] sm:$0xff]
  %v569 = vld [vmem:[%s3 + $0x790] sm:$0xff]
  %v570 = vld [vmem:[%s3 + $0x798] sm:$0xff]
  %v571 = vld [vmem:[%s3 + $0x7a0] sm:$0xff]
  %v572 = vld [vmem:[%s3 + $0x7a8] sm:$0xff]
  %v573 = vld [vmem:[%s3 + $0x7b0] sm:$0xff]
  %v574 = vld [vmem:[%s3 + $0x7b8] sm:$0xff]
  %v575 = vld [vmem:[%s3 + $0x7c0] sm:$0xff]
  %v576 = vld [vmem:[%s3 + $0x7c8] sm:$0xff]
  %v577 = vld [vmem:[%s3 + $0x7d0] sm:$0xff]
  %v578 = vld [vmem:[%s3 + $0x7d8] sm:$0xff]
  %v579 = vld [vmem:[%s3 + $0x7e0] sm:$0xff]
  %v580 = vld [vmem:[%s3 + $0x7e8] sm:$0xff]
  %v581 = vld [vmem:[%s3 + $0x7f0] sm:$0xff]
  %v582 = vld [vmem:[%s3 + $0x7f8] sm:$0xff]
  %v583 = vld [vmem:[%s3 + $0x800] sm:$0xff]
  %v584 = vld [vmem:[%s3 + $0x808] sm:$0xff]
  %v585 = vld [vmem:[%s3 + $0x810] sm:$0xff]
  %v586 = vld [vmem:[%s3 + $0x818] sm:$0xff]
  %v587 = vld [vmem:[%s3 + $0x820] sm:$0xff]
  %v588 = vld [vmem:[%s3 + $0x828] sm:$0xff]
  %v589 = vld [vmem:[%s3 + $0x830] sm:$0xff]
  %v590 = vld [vmem:[%s3 + $0x838] sm:$0xff]
  %v591 = vld [vmem:[%s3 + $0x840] sm:$0xff]
  %v592 = vld [vmem:[%s3 + $0x848] sm:$0xff]
  %v593 = vld [vmem:[%s3 + $0x850] sm:$0xff]
  %v594 = vld [vmem:[%s3 + $0x858] sm:$0xff]
  %v595 = vld [vmem:[%s3 + $0x860] sm:$0xff]
  %v596 = vld [vmem:[%s3 + $0x868] sm:$0xff]
  %v597 = vld [vmem:[%s3 + $0x870] sm:$0xff]
  %v598 = vld [vmem:[%s3 + $0x878] sm:$0xff]
  %v599 = vld [vmem:[%s3 + $0x880] sm:$0xff]
  %v600 = vld [vmem:[%s3 + $0x888] sm:$0xff]
  %v601 = vld [vmem:[%s3 + $0x890] sm:$0xff]
  %v602 = vld [vmem:[%s3 + $0x898] sm:$0xff]
  %v603 = vld [vmem:[%s3 + $0x8a0] sm:$0xff]
  %v604 = vld [vmem:[%s3 + $0x8a8] sm:$0xff]
  %v605 = vld [vmem:[%s3 + $0x8b0] sm:$0xff]
  %v606 = vld [vmem:[%s3 + $0x8b8] sm:$0xff]
  %v607 = vld [vmem:[%s3 + $0x8c0] sm:$0xff]
  %v608 = vld [vmem:[%s3 + $0x8c8] sm:$0xff]
  %v609 = vld [vmem:[%s3 + $0x8d0] sm:$0xff]
  %v610 = vld [vmem:[%s3 + $0x8d8] sm:$0xff]
  %v611 = vld [vmem:[%s3 + $0x8e0] sm:$0xff]
  %v612 = vld [vmem:[%s3 + $0x8e8] sm:$0xff]
  %v613 = vld [vmem:[%s3 + $0x8f0] sm:$0xff]
  %v614 = vld [vmem:[%s3 + $0x8f8] sm:$0xff]
  %v615 = vld [vmem:[%s3 + $0x900] sm:$0xff]
  %v616 = vld [vmem:[%s3 + $0x908] sm:$0xff]
  %v617 = vld [vmem:[%s3 + $0x910] sm:$0xff]
  %v618 = vld [vmem:[%s3 + $0x918] sm:$0xff]
  %v619 = vld [vmem:[%s3 + $0x920] sm:$0xff]
  %v620 = vld [vmem:[%s3 + $0x928] sm:$0xff]
  %v621 = vld [vmem:[%s3 + $0x930] sm:$0xff]
  %v622 = vld [vmem:[%s3 + $0x938] sm:$0xff]
  %v623 = vld [vmem:[%s3 + $0x940] sm:$0xff]
  %v624 = vld [vmem:[%s3 + $0x948] sm:$0xff]
  %v625 = vld [vmem:[%s3 + $0x950] sm:$0xff]
  %v626 = vld [vmem:[%s3 + $0x958] sm:$0xff]
  %v627 = vld [vmem:[%s3 + $0x960] sm:$0xff]
  %v628 = vld [vmem:[%s3 + $0x968] sm:$0xff]
  %v629 = vld [vmem:[%s3 + $0x970] sm:$0xff]
  %v630 = vld [vmem:[%s3 + $0x978] sm:$0xff]
  %v631 = vld [vmem:[%s3 + $0x980] sm:$0xff]
  %v632 = vld [vmem:[%s3 + $0x988] sm:$0xff]
  %v633 = vld [vmem:[%s3 + $0x990] sm:$0xff]
  %v634 = vld [vmem:[%s3 + $0x998] sm:$0xff]
  %v635 = vld [vmem:[%s3 + $0x9a0] sm:$0xff]
  %v636 = vld [vmem:[%s3 + $0x9a8] sm:$0xff]
  %v637 = vld [vmem:[%s3 + $0x9b0] sm:$0xff]
  %v638 = vld [vmem:[%s3 + $0x9b8] sm:$0xff]
  %v639 = vld [vmem:[%s3 + $0x9c0] sm:$0xff]
  %v640 = vld [vmem:[%s3 + $0x9c8] sm:$0xff]
  %v641 = vld [vmem:[%s3 + $0x9d0] sm:$0xff]
  %v642 = vld [vmem:[%s3 + $0x9d8] sm:$0xff]
  %v643 = vld [vmem:[%s3 + $0x9e0] sm:$0xff]
  %v644 = vld [vmem:[%s3 + $0x9e8] sm:$0xff]
  %v645 = vld [vmem:[%s3 + $0x9f0] sm:$0xff]
  %v646 = vld [vmem:[%s3 + $0x9f8] sm:$0xff]
  %v647 = vld [vmem:[%s3 + $0xa00] sm:$0xff]
  %v648 = vld [vmem:[%s3 + $0xa08] sm:$0xff]
  %v649 = vld [vmem:[%s3 + $0xa10] sm:$0xff]
  %v650 = vld [vmem:[%s3 + $0xa18] sm:$0xff]
  %v651 = vld [vmem:[%s3 + $0xa20] sm:$0xff]
  %v652 = vld [vmem:[%s3 + $0xa28] sm:$0xff]
  %v653 = vld [vmem:[%s3 + $0xa30] sm:$0xff]
  %v654 = vld [vmem:[%s3 + $0xa38] sm:$0xff]
  %v655 = vld [vmem:[%s3 + $0xa40] sm:$0xff]
  %v656 = vld [vmem:[%s3 + $0xa48] sm:$0xff]
  %v657 = vld [vmem:[%s3 + $0xa50] sm:$0xff]
  %v658 = vld [vmem:[%s3 + $0xa58] sm:$0xff]
  %v659 = vld [vmem:[%s3 + $0xa60] sm:$0xff]
  %v660 = vld [vmem:[%s3 + $0xa68] sm:$0xff]
  %v661 = vld [vmem:[%s3 + $0xa70] sm:$0xff]
  %v662 = vld [vmem:[%s3 + $0xa78] sm:$0xff]
  %v663 = vld [vmem:[%s3 + $0xa80] sm:$0xff]
  %v664 = vld [vmem:[%s3 + $0xa88] sm:$0xff]
  %v665 = vld [vmem:[%s3 + $0xa90] sm:$0xff]
  %v666 = vld [vmem:[%s3 + $0xa98] sm:$0xff]
  %v667 = vld [vmem:[%s3 + $0xaa0] sm:$0xff]
  %v668 = vld [vmem:[%s3 + $0xaa8] sm:$0xff]
  %v669 = vld [vmem:[%s3 + $0xab0] sm:$0xff]
  %v670 = vld [vmem:[%s3 + $0xab8] sm:$0xff]
  %v671 = vld [vmem:[%s3 + $0xac0] sm:$0xff]
  %v672 = vld [vmem:[%s3 + $0xac8] sm:$0xff]
  %v673 = vld [vmem:[%s3 + $0xad0] sm:$0xff]
  %v674 = vld [vmem:[%s3 + $0xad8] sm:$0xff]
  %v675 = vld [vmem:[%s3 + $0xae0] sm:$0xff]
  %v676 = vld [vmem:[%s3 + $0xae8] sm:$0xff]
  %v677 = vld [vmem:[%s3 + $0xaf0] sm:$0xff]
  %v678 = vld [vmem:[%s3 + $0xaf8] sm:$0xff]
  %v679 = vld [vmem:[%s3 + $0xb00] sm:$0xff]
  %v680 = vld [vmem:[%s3 + $0xb08] sm:$0xff]
  %v681 = vld [vmem:[%s3 + $0xb10] sm:$0xff]
  %v682 = vld [vmem:[%s3 + $0xb18] sm:$0xff]
  %v683 = vld [vmem:[%s3 + $0xb20] sm:$0xff]
  %v684 = vld [vmem:[%s3 + $0xb28] sm:$0xff]
  %v685 = vld [vmem:[%s3 + $0xb30] sm:$0xff]
  %v686 = vld [vmem:[%s3 + $0xb38] sm:$0xff]
  %v687 = vld [vmem:[%s3 + $0xb40] sm:$0xff]
  %v688 = vld [vmem:[%s3 + $0xb48] sm:$0xff]
  %v689 = vld [vmem:[%s3 + $0xb50] sm:$0xff]
  %v690 = vld [vmem:[%s3 + $0xb58] sm:$0xff]
  %v691 = vld [vmem:[%s3 + $0xb60] sm:$0xff]
  %v692 = vld [vmem:[%s3 + $0xb68] sm:$0xff]
  %v693 = vld [vmem:[%s3 + $0xb70] sm:$0xff]
  %v694 = vld [vmem:[%s3 + $0xb78] sm:$0xff]
  %v695 = vld [vmem:[%s3 + $0xb80] sm:$0xff]
  %v696 = vld [vmem:[%s3 + $0xb88] sm:$0xff]
  %v697 = vld [vmem:[%s3 + $0xb90] sm:$0xff]
  %v698 = vld [vmem:[%s3 + $0xb98] sm:$0xff]
  %v699 = vld [vmem:[%s3 + $0xba0] sm:$0xff]
  %v700 = vld [vmem:[%s3 + $0xba8] sm:$0xff]
  %v701 = vld [vmem:[%s3 + $0xbb0] sm:$0xff]
  %v702 = vld [vmem:[%s3 + $0xbb8] sm:$0xff]
  %v703 = vld [vmem:[%s3 + $0xbc0] sm:$0xff]
  %v704 = vld [vmem:[%s3 + $0xbc8] sm:$0xff]
  %v705 = vld [vmem:[%s3 + $0xbd0] sm:$0xff]
  %v706 = vld [vmem:[%s3 + $0xbd8] sm:$0xff]
  %v707 = vld [vmem:[%s3 + $0xbe0] sm:$0xff]
  %v708 = vld [vmem:[%s3 + $0xbe8] sm:$0xff]
  %v709 = vld [vmem:[%s3 + $0xbf0] sm:$0xff]
  %v710 = vld [vmem:[%s3 + $0xbf8] sm:$0xff]
  %v711 = vld [vmem:[%s3 + $0xc00] sm:$0xff]
  %v712 = vld [vmem:[%s3 + $0xc08] sm:$0xff]
  %v713 = vld [vmem:[%s3 + $0xc10] sm:$0xff]
  %v714 = vld [vmem:[%s3 + $0xc18] sm:$0xff]
  %v715 = vld [vmem:[%s3 + $0xc20] sm:$0xff]
  %v716 = vld [vmem:[%s3 + $0xc28] sm:$0xff]
  %v717 = vld [vmem:[%s3 + $0xc30] sm:$0xff]
  %v718 = vld [vmem:[%s3 + $0xc38] sm:$0xff]
  %v719 = vld [vmem:[%s3 + $0xc40] sm:$0xff]
  %v720 = vld [vmem:[%s3 + $0xc48] sm:$0xff]
  %v721 = vld [vmem:[%s3 + $0xc50] sm:$0xff]
  %v722 = vld [vmem:[%s3 + $0xc58] sm:$0xff]
  %v723 = vld [vmem:[%s3 + $0xc60] sm:$0xff]
  %v724 = vld [vmem:[%s3 + $0xc68] sm:$0xff]
  %v725 = vld [vmem:[%s3 + $0xc70] sm:$0xff]
  %v726 = vld [vmem:[%s3 + $0xc78] sm:$0xff]
  %v727 = vld [vmem:[%s3 + $0xc80] sm:$0xff]
  %v728 = vld [vmem:[%s3 + $0xc88] sm:$0xff]
  %v729 = vld [vmem:[%s3 + $0xc90] sm:$0xff]
  %v730 = vld [vmem:[%s3 + $0xc98] sm:$0xff]
  %v731 = vld [vmem:[%s3 + $0xca0] sm:$0xff]
  %v732 = vld [vmem:[%s3 + $0xca8] sm:$0xff]
  %v733 = vld [vmem:[%s3 + $0xcb0] sm:$0xff]
  %v734 = vld [vmem:[%s3 + $0xcb8] sm:$0xff]
  %v735 = vld [vmem:[%s3 + $0xcc0] sm:$0xff]
  %v736 = vld [vmem:[%s3 + $0xcc8] sm:$0xff]
  %v737 = vld [vmem:[%s3 + $0xcd0] sm:$0xff]
  %v738 = vld [vmem:[%s3 + $0xcd8] sm:$0xff]
  %v739 = vld [vmem:[%s3 + $0xce0] sm:$0xff]
  %v740 = vld [vmem:[%s3 + $0xce8] sm:$0xff]
  %v741 = vld [vmem:[%s3 + $0xcf0] sm:$0xff]
  %v742 = vld [vmem:[%s3 + $0xcf8] sm:$0xff]
  %v743 = vld [vmem:[%s3 + $0xd00] sm:$0xff]
  %v744 = vld [vmem:[%s3 + $0xd08] sm:$0xff]
  %v745 = vld [vmem:[%s3 + $0xd10] sm:$0xff]
  %v746 = vld [vmem:[%s3 + $0xd18] sm:$0xff]
  %v747 = vld [vmem:[%s3 + $0xd20] sm:$0xff]
  %v748 = vld [vmem:[%s3 + $0xd28] sm:$0xff]
  %v749 = vld [vmem:[%s3 + $0xd30] sm:$0xff]
  %v750 = vld [vmem:[%s3 + $0xd38] sm:$0xff]
  %v751 = vld [vmem:[%s3 + $0xd40] sm:$0xff]
  %v752 = vld [vmem:[%s3 + $0xd48] sm:$0xff]
  %v753 = vld [vmem:[%s3 + $0xd50] sm:$0xff]
  %v754 = vld [vmem:[%s3 + $0xd58] sm:$0xff]
  %v755 = vld [vmem:[%s3 + $0xd60] sm:$0xff]
  %v756 = vld [vmem:[%s3 + $0xd68] sm:$0xff]
  %v757 = vld [vmem:[%s3 + $0xd70] sm:$0xff]
  %v758 = vld [vmem:[%s3 + $0xd78] sm:$0xff]
  %v759 = vld [vmem:[%s3 + $0xd80] sm:$0xff]
  %v760 = vld [vmem:[%s3 + $0xd88] sm:$0xff]
  %v761 = vld [vmem:[%s3 + $0xd90] sm:$0xff]
  %v762 = vld [vmem:[%s3 + $0xd98] sm:$0xff]
  %v763 = vld [vmem:[%s3 + $0xda0] sm:$0xff]
  %v764 = vld [vmem:[%s3 + $0xda8] sm:$0xff]
  %v765 = vld [vmem:[%s3 + $0xdb0] sm:$0xff]
  %v766 = vld [vmem:[%s3 + $0xdb8] sm:$0xff]
  %v767 = vld [vmem:[%s3 + $0xdc0] sm:$0xff]
  %v768 = vld [vmem:[%s3 + $0xdc8] sm:$0xff]
  %v769 = vld [vmem:[%s3 + $0xdd0] sm:$0xff]
  %v770 = vld [vmem:[%s3 + $0xdd8] sm:$0xff]
  %v771 = vld [vmem:[%s3 + $0xde0] sm:$0xff]
  %v772 = vld [vmem:[%s3 + $0xde8] sm:$0xff]
  %v773 = vld [vmem:[%s3 + $0xdf0] sm:$0xff]
  %v774 = vld [vmem:[%s3 + $0xdf8] sm:$0xff]
  %v775 = vld [vmem:[%s3 + $0xe00] sm:$0xff]
  %v776 = vld [vmem:[%s3 + $0xe08] sm:$0xff]
  %v777 = vld [vmem:[%s3 + $0xe10] sm:$0xff]
  %v778 = vld [vmem:[%s3 + $0xe18] sm:$0xff]
  %v779 = vld [vmem:[%s3 + $0xe20] sm:$0xff]
  %v780 = vld [vmem:[%s3 + $0xe28] sm:$0xff]
  %v781 = vld [vmem:[%s3 + $0xe30] sm:$0xff]
  %v782 = vld [vmem:[%s3 + $0xe38] sm:$0xff]
  %v783 = vld [vmem:[%s3 + $0xe40] sm:$0xff]
  %v784 = vld [vmem:[%s3 + $0xe48] sm:$0xff]
  %v785 = vld [vmem:[%s3 + $0xe50] sm:$0xff]
  %v786 = vld [vmem:[%s3 + $0xe58] sm:$0xff]
  %v787 = vld [vmem:[%s3 + $0xe60] sm:$0xff]
  %v788 = vld [vmem:[%s3 + $0xe68] sm:$0xff]
  %v789 = vld [vmem:[%s3 + $0xe70] sm:$0xff]
  %v790 = vld [vmem:[%s3 + $0xe78] sm:$0xff]
  %v791 = vld [vmem:[%s3 + $0xe80] sm:$0xff]
  %v792 = vld [vmem:[%s3 + $0xe88] sm:$0xff]
  %v793 = vld [vmem:[%s3 + $0xe90] sm:$0xff]
  %v794 = vld [vmem:[%s3 + $0xe98] sm:$0xff]
  %v795 = vld [vmem:[%s3 + $0xea0] sm:$0xff]
  %v796 = vld [vmem:[%s3 + $0xea8] sm:$0xff]
  %v797 = vld [vmem:[%s3 + $0xeb0] sm:$0xff]
  %v798 = vld [vmem:[%s3 + $0xeb8] sm:$0xff]
  %v799 = vld [vmem:[%s3 + $0xec0] sm:$0xff]
  %v800 = vld [vmem:[%s3 + $0xec8] sm:$0xff]
  %v801 = vld [vmem:[%s3 + $0xed0] sm:$0xff]
  %v802 = vld [vmem:[%s3 + $0xed8] sm:$0xff]
  %v803 = vld [vmem:[%s3 + $0xee0] sm:$0xff]
  %v804 = vld [vmem:[%s3 + $0xee8] sm:$0xff]
  %v805 = vld [vmem:[%s3 + $0xef0] sm:$0xff]
  %v806 = vld [vmem:[%s3 + $0xef8] sm:$0xff]
  %v807 = vld [vmem:[%s3 + $0xf00] sm:$0xff]
  %v808 = vld [vmem:[%s3 + $0xf08] sm:$0xff]
  %v809 = vld [vmem:[%s3 + $0xf10] sm:$0xff]
  %v810 = vld [vmem:[%s3 + $0xf18] sm:$0xff]
  %v811 = vld [vmem:[%s3 + $0xf20] sm:$0xff]
  %v812 = vld [vmem:[%s3 + $0xf28] sm:$0xff]
  %v813 = vld [vmem:[%s3 + $0xf30] sm:$0xff]
  %v814 = vld [vmem:[%s3 + $0xf38] sm:$0xff]
  %v815 = vld [vmem:[%s3 + $0xf40] sm:$0xff]
  %v816 = vld [vmem:[%s3 + $0xf48] sm:$0xff]
  %v817 = vld [vmem:[%s3 + $0xf50] sm:$0xff]
  %v818 = vld [vmem:[%s3 + $0xf58] sm:$0xff]
  %v819 = vld [vmem:[%s3 + $0xf60] sm:$0xff]
  %v820 = vld [vmem:[%s3 + $0xf68] sm:$0xff]
  %v821 = vld [vmem:[%s3 + $0xf70] sm:$0xff]
  %v822 = vld [vmem:[%s3 + $0xf78] sm:$0xff]
  %v823 = vld [vmem:[%s3 + $0xf80] sm:$0xff]
  %v824 = vld [vmem:[%s3 + $0xf88] sm:$0xff]
  %v825 = vld [vmem:[%s3 + $0xf90] sm:$0xff]
  %v826 = vld [vmem:[%s3 + $0xf98] sm:$0xff]
  %v827 = vld [vmem:[%s3 + $0xfa0] sm:$0xff]
  %v828 = vld [vmem:[%s3 + $0xfa8] sm:$0xff]
  %v829 = vld [vmem:[%s3 + $0xfb0] sm:$0xff]
  %v830 = vld [vmem:[%s3 + $0xfb8] sm:$0xff]
  %v831 = vld [vmem:[%s3 + $0xfc0] sm:$0xff]
  %v832 = vld [vmem:[%s3 + $0xfc8] sm:$0xff]
  %v833 = vld [vmem:[%s3 + $0xfd0] sm:$0xff]
  %v834 = vld [vmem:[%s3 + $0xfd8] sm:$0xff]
  %v835 = vld [vmem:[%s3 + $0xfe0] sm:$0xff]
  %v836 = vld [vmem:[%s3 + $0xfe8] sm:$0xff]
  %v837 = vld [vmem:[%s3 + $0xff0] sm:$0xff]
  %v838 = vld [vmem:[%s3 + $0xff8] sm:$0xff]
  %v839 = vld [vmem:[%s3 + $0x1000] sm:$0xff]
  %v840 = vld [vmem:[%s3 + $0x1008] sm:$0xff]
  %v841 = vld [vmem:[%s3 + $0x1010] sm:$0xff]
  %v842 = vld [vmem:[%s3 + $0x1018] sm:$0xff]
  %v843 = vld [vmem:[%s3 + $0x1020] sm:$0xff]
  %v844 = vld [vmem:[%s3 + $0x1028] sm:$0xff]
  %v845 = vld [vmem:[%s3 + $0x1030] sm:$0xff]
  %v846 = vld [vmem:[%s3 + $0x1038] sm:$0xff]
  %v847 = vld [vmem:[%s3 + $0x1040] sm:$0xff]
  %v848 = vld [vmem:[%s3 + $0x1048] sm:$0xff]
  %v849 = vld [vmem:[%s3 + $0x1050] sm:$0xff]
  %v850 = vld [vmem:[%s3 + $0x1058] sm:$0xff]
  %v851 = vld [vmem:[%s3 + $0x1060] sm:$0xff]
  %v852 = vld [vmem:[%s3 + $0x1068] sm:$0xff]
  %v853 = vld [vmem:[%s3 + $0x1070] sm:$0xff]
  %v854 = vld [vmem:[%s3 + $0x1078] sm:$0xff]
  %v855 = vld [vmem:[%s3 + $0x1080] sm:$0xff]
  %v856 = vld [vmem:[%s3 + $0x1088] sm:$0xff]
  %v857 = vld [vmem:[%s3 + $0x1090] sm:$0xff]
  %v858 = vld [vmem:[%s3 + $0x1098] sm:$0xff]
  %v859 = vld [vmem:[%s3 + $0x10a0] sm:$0xff]
  %v860 = vld [vmem:[%s3 + $0x10a8] sm:$0xff]
  %v861 = vld [vmem:[%s3 + $0x10b0] sm:$0xff]
  %v862 = vld [vmem:[%s3 + $0x10b8] sm:$0xff]
  %v863 = vld [vmem:[%s3 + $0x10c0] sm:$0xff]
  %v864 = vld [vmem:[%s3 + $0x10c8] sm:$0xff]
  %v865 = vld [vmem:[%s3 + $0x10d0] sm:$0xff]
  %v866 = vld [vmem:[%s3 + $0x10d8] sm:$0xff]
  %v867 = vld [vmem:[%s3 + $0x10e0] sm:$0xff]
  %v868 = vld [vmem:[%s3 + $0x10e8] sm:$0xff]
  %v869 = vld [vmem:[%s3 + $0x10f0] sm:$0xff]
  %v870 = vld [vmem:[%s3 + $0x10f8] sm:$0xff]
  %v871 = vld [vmem:[%s3 + $0x1100] sm:$0xff]
  %v872 = vld [vmem:[%s3 + $0x1108] sm:$0xff]
  %v873 = vld [vmem:[%s3 + $0x1110] sm:$0xff]
  %v874 = vld [vmem:[%s3 + $0x1118] sm:$0xff]
  %v875 = vld [vmem:[%s3 + $0x1120] sm:$0xff]
  %v876 = vld [vmem:[%s3 + $0x1128] sm:$0xff]
  %v877 = vld [vmem:[%s3 + $0x1130] sm:$0xff]
  %v878 = vld [vmem:[%s3 + $0x1138] sm:$0xff]
  %v879 = vld [vmem:[%s3 + $0x1140] sm:$0xff]
  %v880 = vld [vmem:[%s3 + $0x1148] sm:$0xff]
  %v881 = vld [vmem:[%s3 + $0x1150] sm:$0xff]
  %v882 = vld [vmem:[%s3 + $0x1158] sm:$0xff]
  %v883 = vld [vmem:[%s3 + $0x1160] sm:$0xff]
  %v884 = vld [vmem:[%s3 + $0x1168] sm:$0xff]
  %v885 = vld [vmem:[%s3 + $0x1170] sm:$0xff]
  %v886 = vld [vmem:[%s3 + $0x1178] sm:$0xff]
  %v887 = vld [vmem:[%s3 + $0x1180] sm:$0xff]
  %v888 = vld [vmem:[%s3 + $0x1188] sm:$0xff]
  %v889 = vld [vmem:[%s3 + $0x1190] sm:$0xff]
  %v890 = vld [vmem:[%s3 + $0x1198] sm:$0xff]
  %v891 = vld [vmem:[%s3 + $0x11a0] sm:$0xff]
  %v892 = vld [vmem:[%s3 + $0x11a8] sm:$0xff]
  %v893 = vld [vmem:[%s3 + $0x11b0] sm:$0xff]
  %v894 = vld [vmem:[%s3 + $0x11b8] sm:$0xff]
  %v895 = vld [vmem:[%s3 + $0x11c0] sm:$0xff]
  %v896 = vld [vmem:[%s3 + $0x11c8] sm:$0xff]
  %v897 = vld [vmem:[%s3 + $0x11d0] sm:$0xff]
  %v898 = vld [vmem:[%s3 + $0x11d8] sm:$0xff]
  %v899 = vld [vmem:[%s3 + $0x11e0] sm:$0xff]
  %v900 = vld [vmem:[%s3 + $0x11e8] sm:$0xff]
  %v901 = vld [vmem:[%s3 + $0x11f0] sm:$0xff]
  %v902 = vld [vmem:[%s3 + $0x11f8] sm:$0xff]
  %v903 = vld [vmem:[%s3 + $0x1200] sm:$0xff]
  %v904 = vld [vmem:[%s3 + $0x1208] sm:$0xff]
  %v905 = vld [vmem:[%s3 + $0x1210] sm:$0xff]
  %v906 = vld [vmem:[%s3 + $0x1218] sm:$0xff]
  %v907 = vld [vmem:[%s3 + $0x1220] sm:$0xff]
  %v908 = vld [vmem:[%s3 + $0x1228] sm:$0xff]
  %v909 = vld [vmem:[%s3 + $0x1230] sm:$0xff]
  %v910 = vld [vmem:[%s3 + $0x1238] sm:$0xff]
  %v911 = vld [vmem:[%s3 + $0x1240] sm:$0xff]
  %v912 = vld [vmem:[%s3 + $0x1248] sm:$0xff]
  %v913 = vld [vmem:[%s3 + $0x1250] sm:$0xff]
  %v914 = vld [vmem:[%s3 + $0x1258] sm:$0xff]
  %v915 = vld [vmem:[%s3 + $0x1260] sm:$0xff]
  %v916 = vld [vmem:[%s3 + $0x1268] sm:$0xff]
  %v917 = vld [vmem:[%s3 + $0x1270] sm:$0xff]
  %v918 = vld [vmem:[%s3 + $0x1278] sm:$0xff]
  %v919 = vld [vmem:[%s3 + $0x1280] sm:$0xff]
  %v920 = vld [vmem:[%s3 + $0x1288] sm:$0xff]
  %v921 = vld [vmem:[%s3 + $0x1290] sm:$0xff]
  %v922 = vld [vmem:[%s3 + $0x1298] sm:$0xff]
  %v923 = vld [vmem:[%s3 + $0x12a0] sm:$0xff]
  %v924 = vld [vmem:[%s3 + $0x12a8] sm:$0xff]
  %v925 = vld [vmem:[%s3 + $0x12b0] sm:$0xff]
  %v926 = vld [vmem:[%s3 + $0x12b8] sm:$0xff]
  %v927 = vld [vmem:[%s3 + $0x12c0] sm:$0xff]
  %v928 = vld [vmem:[%s3 + $0x12c8] sm:$0xff]
  %v929 = vld [vmem:[%s3 + $0x12d0] sm:$0xff]
  %v930 = vld [vmem:[%s3 + $0x12d8] sm:$0xff]
  %v931 = vld [vmem:[%s3 + $0x12e0] sm:$0xff]
  %v932 = vld [vmem:[%s3 + $0x12e8] sm:$0xff]
  %v933 = vld [vmem:[%s3 + $0x12f0] sm:$0xff]
  %v934 = vld [vmem:[%s3 + $0x12f8] sm:$0xff]
  %v935 = vld [vmem:[%s3 + $0x1300] sm:$0xff]
  %v936 = vld [vmem:[%s3 + $0x1308] sm:$0xff]
  %v937 = vld [vmem:[%s3 + $0x1310] sm:$0xff]
  %v938 = vld [vmem:[%s3 + $0x1318] sm:$0xff]
  %v939 = vld [vmem:[%s3 + $0x1320] sm:$0xff]
  %v940 = vld [vmem:[%s3 + $0x1328] sm:$0xff]
  %v941 = vld [vmem:[%s3 + $0x1330] sm:$0xff]
  %v942 = vld [vmem:[%s3 + $0x1338] sm:$0xff]
  %v943 = vld [vmem:[%s3 + $0x1340] sm:$0xff]
  %v944 = vld [vmem:[%s3 + $0x1348] sm:$0xff]
  %v945 = vld [vmem:[%s3 + $0x1350] sm:$0xff]
  %v946 = vld [vmem:[%s3 + $0x1358] sm:$0xff]
  %v947 = vld [vmem:[%s3 + $0x1360] sm:$0xff]
  %v948 = vld [vmem:[%s3 + $0x1368] sm:$0xff]
  %v949 = vld [vmem:[%s3 + $0x1370] sm:$0xff]
  %v950 = vld [vmem:[%s3 + $0x1378] sm:$0xff]
  %v951 = vld [vmem:[%s3 + $0x1380] sm:$0xff]
  %v952 = vld [vmem:[%s3 + $0x1388] sm:$0xff]
  %v953 = vld [vmem:[%s3 + $0x1390] sm:$0xff]
  %v954 = vld [vmem:[%s3 + $0x1398] sm:$0xff]
  %v955 = vld [vmem:[%s3 + $0x13a0] sm:$0xff]
  %v956 = vld [vmem:[%s3 + $0x13a8] sm:$0xff]
  %v957 = vld [vmem:[%s3 + $0x13b0] sm:$0xff]
  %v958 = vld [vmem:[%s3 + $0x13b8] sm:$0xff]
  %v959 = vld [vmem:[%s3 + $0x13c0] sm:$0xff]
  %v960 = vld [vmem:[%s3 + $0x13c8] sm:$0xff]
  %v961 = vld [vmem:[%s3 + $0x13d0] sm:$0xff]
  %v962 = vld [vmem:[%s3 + $0x13d8] sm:$0xff]
  %v963 = vld [vmem:[%s3 + $0x13e0] sm:$0xff]
  %v964 = vld [vmem:[%s3 + $0x13e8] sm:$0xff]
  %v965 = vld [vmem:[%s3 + $0x13f0] sm:$0xff]
  %v966 = vld [vmem:[%s3 + $0x13f8] sm:$0xff]
  %v967 = vld [vmem:[%s4] sm:$0xff]
  %v969 = vlaneseq
  %v970 = vshrl.u32 %v969, 7
  %v971 = vsub.s32 0, %v970
  %v972 = vrot.slane %v967, %v971
  %v973 = vlaneseq
  %v974 = vshrl.u32 %v973, 7
  %v975 = vsub.s32 1, %v974
  %v976 = vrot.slane %v967, %v975
  %v977 = vlaneseq
  %v978 = vshrl.u32 %v977, 7
  %v979 = vsub.s32 2, %v978
  %v980 = vrot.slane %v967, %v979
  %v981 = vlaneseq
  %v982 = vshrl.u32 %v981, 7
  %v983 = vsub.s32 3, %v982
  %v984 = vrot.slane %v967, %v983
  %v985 = vlaneseq
  %v986 = vshrl.u32 %v985, 7
  %v987 = vsub.s32 4, %v986
  %v988 = vrot.slane %v967, %v987
  %v989 = vlaneseq
  %v990 = vshrl.u32 %v989, 7
  %v991 = vsub.s32 5, %v990
  %v992 = vrot.slane %v967, %v991
  %v993 = vlaneseq
  %v994 = vshrl.u32 %v993, 7
  %v995 = vsub.s32 6, %v994
  %v996 = vrot.slane %v967, %v995
  %v997 = vlaneseq
  %v998 = vshrl.u32 %v997, 7
  %v999 = vsub.s32 7, %v998
  %v1000 = vrot.slane %v967, %v999
  %1009 = vmatprep.subr.mxu0 %v448
  %1010 = vmatpush1.msra.mxu0 %v447
  %1011 = vmatprep.subr.mxu0 %v440
  %1012 = vmatpush1.msra.mxu0 %v439
  %1013 = vmatprep.subr.mxu0 %v432
  %1014 = vmatpush1.msra.mxu0 %v431
  %1015 = vmatprep.subr.mxu0 %v424
  %1016 = vmatpush1.msra.mxu0 %v423
  %1017 = vmatprep.subr.mxu0 %v416
  %1018 = vmatpush1.msra.mxu0 %v415
  %1019 = vmatprep.subr.mxu0 %v408
  %1020 = vmatpush1.msra.mxu0 %v407
  %1021 = vmatprep.subr.mxu0 %v400
  %1022 = vmatpush1.msra.mxu0 %v399
  %1023 = vmatprep.subr.mxu0 %v392
  %1024 = vmatpush1.msra.mxu0 %v391
  %1025 = vmatprep.subr.mxu0 %v384
  %1026 = vmatpush1.msra.mxu0 %v383
  %1027 = vmatprep.subr.mxu0 %v376
  %1028 = vmatpush1.msra.mxu0 %v375
  %1029 = vmatprep.subr.mxu0 %v368
  %1030 = vmatpush1.msra.mxu0 %v367
  %1031 = vmatprep.subr.mxu0 %v360
  %1032 = vmatpush1.msra.mxu0 %v359
  %1033 = vmatprep.subr.mxu0 %v352
  %1034 = vmatpush1.msra.mxu0 %v351
  %1035 = vmatprep.subr.mxu0 %v344
  %1036 = vmatpush1.msra.mxu0 %v343
  %1037 = vmatprep.subr.mxu0 %v336
  %1038 = vmatpush1.msra.mxu0 %v335
  %1039 = vmatprep.subr.mxu0 %v328
  %1040 = vmatpush1.msra.mxu0 %v327
  %1041 = vmatprep.subr.mxu0 %v576
  %1042 = vmatpush2.msra.mxu0 %v575
  %1043 = vmatprep.subr.mxu0 %v568
  %1044 = vmatpush2.msra.mxu0 %v567
  %1045 = vmatprep.subr.mxu0 %v560
  %1046 = vmatpush2.msra.mxu0 %v559
  %1047 = vmatprep.subr.mxu0 %v552
  %1048 = vmatpush2.msra.mxu0 %v551
  %1049 = vmatprep.subr.mxu0 %v544
  %1050 = vmatpush2.msra.mxu0 %v543
  %1051 = vmatprep.subr.mxu0 %v536
  %1052 = vmatpush2.msra.mxu0 %v535
  %1053 = vmatprep.subr.mxu0 %v528
  %1054 = vmatpush2.msra.mxu0 %v527
  %1055 = vmatprep.subr.mxu0 %v520
  %1056 = vmatpush2.msra.mxu0 %v519
  %1057 = vmatprep.subr.mxu0 %v512
  %1058 = vmatpush2.msra.mxu0 %v511
  %1059 = vmatprep.subr.mxu0 %v504
  %1060 = vmatpush2.msra.mxu0 %v503
  %1061 = vmatprep.subr.mxu0 %v496
  %1062 = vmatpush2.msra.mxu0 %v495
  %1063 = vmatprep.subr.mxu0 %v488
  %1064 = vmatpush2.msra.mxu0 %v487
  %1065 = vmatprep.subr.mxu0 %v480
  %1066 = vmatpush2.msra.mxu0 %v479
  %1067 = vmatprep.subr.mxu0 %v472
  %1068 = vmatpush2.msra.mxu0 %v471
  %1069 = vmatprep.subr.mxu0 %v464
  %1070 = vmatpush2.msra.mxu0 %v463
  %1071 = vmatprep.subr.mxu0 %v456
  %1072 = vmatpush2.msra.mxu0 %v455
  %1073 = vmatprep.mubr.f32.mxu0 %v323
  %1074 = vmatmul.mubr.f32.gmra.mxu0 %v322
  %v1075 = vpop.f32.mrf.mxu0
  %v1076 = vadd.f32 %v972, %v1075
  %v1077 = vpop.f32.mrf.mxu0
  %v1078 = vadd.f32 %v976, %v1077
  %1079 = vdwg.mxu0
  %1080 = vmatprep.subr.mxu0 %v704
  %1081 = vmatpush1.msra.mxu0 %v703
  %1082 = vmatprep.subr.mxu0 %v696
  %1083 = vmatpush1.msra.mxu0 %v695
  %1084 = vmatprep.subr.mxu0 %v688
  %1085 = vmatpush1.msra.mxu0 %v687
  %1086 = vmatprep.subr.mxu0 %v680
  %1087 = vmatpush1.msra.mxu0 %v679
  %1088 = vmatprep.subr.mxu0 %v672
  %1089 = vmatpush1.msra.mxu0 %v671
  %1090 = vmatprep.subr.mxu0 %v664
  %1091 = vmatpush1.msra.mxu0 %v663
  %1092 = vmatprep.subr.mxu0 %v656
  %1093 = vmatpush1.msra.mxu0 %v655
  %1094 = vmatprep.subr.mxu0 %v648
  %1095 = vmatpush1.msra.mxu0 %v647
  %1096 = vmatprep.subr.mxu0 %v640
  %1097 = vmatpush1.msra.mxu0 %v639
  %1098 = vmatprep.subr.mxu0 %v632
  %1099 = vmatpush1.msra.mxu0 %v631
  %1100 = vmatprep.subr.mxu0 %v624
  %1101 = vmatpush1.msra.mxu0 %v623
  %1102 = vmatprep.subr.mxu0 %v616
  %1103 = vmatpush1.msra.mxu0 %v615
  %1104 = vmatprep.subr.mxu0 %v608
  %1105 = vmatpush1.msra.mxu0 %v607
  %1106 = vmatprep.subr.mxu0 %v600
  %1107 = vmatpush1.msra.mxu0 %v599
  %1108 = vmatprep.subr.mxu0 %v592
  %1109 = vmatpush1.msra.mxu0 %v591
  %1110 = vmatprep.subr.mxu0 %v584
  %1111 = vmatpush1.msra.mxu0 %v583
  %1112 = vmatprep.subr.mxu0 %v832
  %1113 = vmatpush2.msra.mxu0 %v831
  %1114 = vmatprep.subr.mxu0 %v824
  %1115 = vmatpush2.msra.mxu0 %v823
  %1116 = vmatprep.subr.mxu0 %v816
  %1117 = vmatpush2.msra.mxu0 %v815
  %1118 = vmatprep.subr.mxu0 %v808
  %1119 = vmatpush2.msra.mxu0 %v807
  %1120 = vmatprep.subr.mxu0 %v800
  %1121 = vmatpush2.msra.mxu0 %v799
  %1122 = vmatprep.subr.mxu0 %v792
  %1123 = vmatpush2.msra.mxu0 %v791
  %1124 = vmatprep.subr.mxu0 %v784
  %1125 = vmatpush2.msra.mxu0 %v783
  %1126 = vmatprep.subr.mxu0 %v776
  %1127 = vmatpush2.msra.mxu0 %v775
  %1128 = vmatprep.subr.mxu0 %v768
  %1129 = vmatpush2.msra.mxu0 %v767
  %1130 = vmatprep.subr.mxu0 %v760
  %1131 = vmatpush2.msra.mxu0 %v759
  %1132 = vmatprep.subr.mxu0 %v752
  %1133 = vmatpush2.msra.mxu0 %v751
  %1134 = vmatprep.subr.mxu0 %v744
  %1135 = vmatpush2.msra.mxu0 %v743
  %1136 = vmatprep.subr.mxu0 %v736
  %1137 = vmatpush2.msra.mxu0 %v735
  %1138 = vmatprep.subr.mxu0 %v728
  %1139 = vmatpush2.msra.mxu0 %v727
  %1140 = vmatprep.subr.mxu0 %v720
  %1141 = vmatpush2.msra.mxu0 %v719
  %1142 = vmatprep.subr.mxu0 %v712
  %1143 = vmatpush2.msra.mxu0 %v711
  %1144 = vmatprep.mubr.f32.mxu0 %v325
  %1145 = vmatmul.mubr.f32.gmra.mxu0 %v324
  %v1146 = vpop.f32.mrf.mxu0
  %v1147 = vadd.f32 %v1076, %v1146
  %v1148 = vpop.f32.mrf.mxu0
  %v1149 = vadd.f32 %v1078, %v1148
  %1150 = vdwg.mxu0
  %1151 = vmatprep.subr.mxu0 %v960
  %1152 = vmatpush1.msra.mxu0 %v959
  %1153 = vmatprep.subr.mxu0 %v952
  %1154 = vmatpush1.msra.mxu0 %v951
  %1155 = vmatprep.subr.mxu0 %v944
  %1156 = vmatpush1.msra.mxu0 %v943
  %1157 = vmatprep.subr.mxu0 %v936
  %1158 = vmatpush1.msra.mxu0 %v935
  %1159 = vmatprep.subr.mxu0 %v928
  %1160 = vmatpush1.msra.mxu0 %v927
  %1161 = vmatprep.subr.mxu0 %v920
  %1162 = vmatpush1.msra.mxu0 %v919
  %1163 = vmatprep.subr.mxu0 %v912
  %1164 = vmatpush1.msra.mxu0 %v911
  %1165 = vmatprep.subr.mxu0 %v904
  %1166 = vmatpush1.msra.mxu0 %v903
  %1167 = vmatprep.subr.mxu0 %v896
  %1168 = vmatpush1.msra.mxu0 %v895
  %1169 = vmatprep.subr.mxu0 %v888
  %1170 = vmatpush1.msra.mxu0 %v887
  %1171 = vmatprep.subr.mxu0 %v880
  %1172 = vmatpush1.msra.mxu0 %v879
  %1173 = vmatprep.subr.mxu0 %v872
  %1174 = vmatpush1.msra.mxu0 %v871
  %1175 = vmatprep.subr.mxu0 %v864
  %1176 = vmatpush1.msra.mxu0 %v863
  %1177 = vmatprep.subr.mxu0 %v856
  %1178 = vmatpush1.msra.mxu0 %v855
  %1179 = vmatprep.subr.mxu0 %v848
  %1180 = vmatpush1.msra.mxu0 %v847
  %1181 = vmatprep.subr.mxu0 %v840
  %1182 = vmatpush1.msra.mxu0 %v839
  %1183 = vmatprep.subr.mxu0 0.0
  %1184 = vmatpush2.msra.mxu0 0.0
  %1185 = vmatprep.subr.mxu0 0.0
  %1186 = vmatpush2.msra.mxu0 0.0
  %1187 = vmatprep.subr.mxu0 0.0
  %1188 = vmatpush2.msra.mxu0 0.0
  %1189 = vmatprep.subr.mxu0 0.0
  %1190 = vmatpush2.msra.mxu0 0.0
  %1191 = vmatprep.subr.mxu0 0.0
  %1192 = vmatpush2.msra.mxu0 0.0
  %1193 = vmatprep.subr.mxu0 0.0
  %1194 = vmatpush2.msra.mxu0 0.0
  %1195 = vmatprep.subr.mxu0 0.0
  %1196 = vmatpush2.msra.mxu0 0.0
  %1197 = vmatprep.subr.mxu0 0.0
  %1198 = vmatpush2.msra.mxu0 0.0
  %1199 = vmatprep.subr.mxu0 0.0
  %1200 = vmatpush2.msra.mxu0 0.0
  %1201 = vmatprep.subr.mxu0 0.0
  %1202 = vmatpush2.msra.mxu0 0.0
  %1203 = vmatprep.subr.mxu0 0.0
  %1204 = vmatpush2.msra.mxu0 0.0
  %1205 = vmatprep.subr.mxu0 0.0
  %1206 = vmatpush2.msra.mxu0 0.0
  %1207 = vmatprep.subr.mxu0 0.0
  %1208 = vmatpush2.msra.mxu0 0.0
  %1209 = vmatprep.subr.mxu0 0.0
  %1210 = vmatpush2.msra.mxu0 0.0
  %1211 = vmatprep.subr.mxu0 0.0
  %1212 = vmatpush2.msra.mxu0 0.0
  %1213 = vmatprep.subr.mxu0 0.0
  %1214 = vmatpush2.msra.mxu0 0.0
  %1215 = vmatprep.mubr.f32.mxu0 0.0
  %1216 = vmatmul.mubr.f32.gmra.mxu0 %v326
  %v1217 = vpop.f32.mrf.mxu0
  %v1218 = vadd.f32 %v1147, %v1217
  %v1219 = vpop.f32.mrf.mxu0
  %v1220 = vadd.f32 %v1149, %v1219
  %1221 = vdwg.mxu0
  %1222 = vmatprep.subr.mxu0 %v450
  %1223 = vmatpush1.msra.mxu0 %v449
  %1224 = vmatprep.subr.mxu0 %v442
  %1225 = vmatpush1.msra.mxu0 %v441
  %1226 = vmatprep.subr.mxu0 %v434
  %1227 = vmatpush1.msra.mxu0 %v433
  %1228 = vmatprep.subr.mxu0 %v426
  %1229 = vmatpush1.msra.mxu0 %v425
  %1230 = vmatprep.subr.mxu0 %v418
  %1231 = vmatpush1.msra.mxu0 %v417
  %1232 = vmatprep.subr.mxu0 %v410
  %1233 = vmatpush1.msra.mxu0 %v409
  %1234 = vmatprep.subr.mxu0 %v402
  %1235 = vmatpush1.msra.mxu0 %v401
  %1236 = vmatprep.subr.mxu0 %v394
  %1237 = vmatpush1.msra.mxu0 %v393
  %1238 = vmatprep.subr.mxu0 %v386
  %1239 = vmatpush1.msra.mxu0 %v385
  %1240 = vmatprep.subr.mxu0 %v378
  %1241 = vmatpush1.msra.mxu0 %v377
  %1242 = vmatprep.subr.mxu0 %v370
  %1243 = vmatpush1.msra.mxu0 %v369
  %1244 = vmatprep.subr.mxu0 %v362
  %1245 = vmatpush1.msra.mxu0 %v361
  %1246 = vmatprep.subr.mxu0 %v354
  %1247 = vmatpush1.msra.mxu0 %v353
  %1248 = vmatprep.subr.mxu0 %v346
  %1249 = vmatpush1.msra.mxu0 %v345
  %1250 = vmatprep.subr.mxu0 %v338
  %1251 = vmatpush1.msra.mxu0 %v337
  %1252 = vmatprep.subr.mxu0 %v330
  %1253 = vmatpush1.msra.mxu0 %v329
  %1254 = vmatprep.subr.mxu0 %v578
  %1255 = vmatpush2.msra.mxu0 %v577
  %1256 = vmatprep.subr.mxu0 %v570
  %1257 = vmatpush2.msra.mxu0 %v569
  %1258 = vmatprep.subr.mxu0 %v562
  %1259 = vmatpush2.msra.mxu0 %v561
  %1260 = vmatprep.subr.mxu0 %v554
  %1261 = vmatpush2.msra.mxu0 %v553
  %1262 = vmatprep.subr.mxu0 %v546
  %1263 = vmatpush2.msra.mxu0 %v545
  %1264 = vmatprep.subr.mxu0 %v538
  %1265 = vmatpush2.msra.mxu0 %v537
  %1266 = vmatprep.subr.mxu0 %v530
  %1267 = vmatpush2.msra.mxu0 %v529
  %1268 = vmatprep.subr.mxu0 %v522
  %1269 = vmatpush2.msra.mxu0 %v521
  %1270 = vmatprep.subr.mxu0 %v514
  %1271 = vmatpush2.msra.mxu0 %v513
  %1272 = vmatprep.subr.mxu0 %v506
  %1273 = vmatpush2.msra.mxu0 %v505
  %1274 = vmatprep.subr.mxu0 %v498
  %1275 = vmatpush2.msra.mxu0 %v497
  %1276 = vmatprep.subr.mxu0 %v490
  %1277 = vmatpush2.msra.mxu0 %v489
  %1278 = vmatprep.subr.mxu0 %v482
  %1279 = vmatpush2.msra.mxu0 %v481
  %1280 = vmatprep.subr.mxu0 %v474
  %1281 = vmatpush2.msra.mxu0 %v473
  %1282 = vmatprep.subr.mxu0 %v466
  %1283 = vmatpush2.msra.mxu0 %v465
  %1284 = vmatprep.subr.mxu0 %v458
  %1285 = vmatpush2.msra.mxu0 %v457
  %1286 = vmatprep.mubr.f32.mxu0 %v323
  %1287 = vmatmul.mubr.f32.gmra.mxu0 %v322
  %v1288 = vpop.f32.mrf.mxu0
  %v1289 = vadd.f32 %v980, %v1288
  %v1290 = vpop.f32.mrf.mxu0
  %v1291 = vadd.f32 %v984, %v1290
  %1292 = vdwg.mxu0
  %1293 = vmatprep.subr.mxu0 %v706
  %1294 = vmatpush1.msra.mxu0 %v705
  %1295 = vmatprep.subr.mxu0 %v698
  %1296 = vmatpush1.msra.mxu0 %v697
  %1297 = vmatprep.subr.mxu0 %v690
  %1298 = vmatpush1.msra.mxu0 %v689
  %1299 = vmatprep.subr.mxu0 %v682
  %1300 = vmatpush1.msra.mxu0 %v681
  %1301 = vmatprep.subr.mxu0 %v674
  %1302 = vmatpush1.msra.mxu0 %v673
  %1303 = vmatprep.subr.mxu0 %v666
  %1304 = vmatpush1.msra.mxu0 %v665
  %1305 = vmatprep.subr.mxu0 %v658
  %1306 = vmatpush1.msra.mxu0 %v657
  %1307 = vmatprep.subr.mxu0 %v650
  %1308 = vmatpush1.msra.mxu0 %v649
  %1309 = vmatprep.subr.mxu0 %v642
  %1310 = vmatpush1.msra.mxu0 %v641
  %1311 = vmatprep.subr.mxu0 %v634
  %1312 = vmatpush1.msra.mxu0 %v633
  %1313 = vmatprep.subr.mxu0 %v626
  %1314 = vmatpush1.msra.mxu0 %v625
  %1315 = vmatprep.subr.mxu0 %v618
  %1316 = vmatpush1.msra.mxu0 %v617
  %1317 = vmatprep.subr.mxu0 %v610
  %1318 = vmatpush1.msra.mxu0 %v609
  %1319 = vmatprep.subr.mxu0 %v602
  %1320 = vmatpush1.msra.mxu0 %v601
  %1321 = vmatprep.subr.mxu0 %v594
  %1322 = vmatpush1.msra.mxu0 %v593
  %1323 = vmatprep.subr.mxu0 %v586
  %1324 = vmatpush1.msra.mxu0 %v585
  %1325 = vmatprep.subr.mxu0 %v834
  %1326 = vmatpush2.msra.mxu0 %v833
  %1327 = vmatprep.subr.mxu0 %v826
  %1328 = vmatpush2.msra.mxu0 %v825
  %1329 = vmatprep.subr.mxu0 %v818
  %1330 = vmatpush2.msra.mxu0 %v817
  %1331 = vmatprep.subr.mxu0 %v810
  %1332 = vmatpush2.msra.mxu0 %v809
  %1333 = vmatprep.subr.mxu0 %v802
  %1334 = vmatpush2.msra.mxu0 %v801
  %1335 = vmatprep.subr.mxu0 %v794
  %1336 = vmatpush2.msra.mxu0 %v793
  %1337 = vmatprep.subr.mxu0 %v786
  %1338 = vmatpush2.msra.mxu0 %v785
  %1339 = vmatprep.subr.mxu0 %v778
  %1340 = vmatpush2.msra.mxu0 %v777
  %1341 = vmatprep.subr.mxu0 %v770
  %1342 = vmatpush2.msra.mxu0 %v769
  %1343 = vmatprep.subr.mxu0 %v762
  %1344 = vmatpush2.msra.mxu0 %v761
  %1345 = vmatprep.subr.mxu0 %v754
  %1346 = vmatpush2.msra.mxu0 %v753
  %1347 = vmatprep.subr.mxu0 %v746
  %1348 = vmatpush2.msra.mxu0 %v745
  %1349 = vmatprep.subr.mxu0 %v738
  %1350 = vmatpush2.msra.mxu0 %v737
  %1351 = vmatprep.subr.mxu0 %v730
  %1352 = vmatpush2.msra.mxu0 %v729
  %1353 = vmatprep.subr.mxu0 %v722
  %1354 = vmatpush2.msra.mxu0 %v721
  %1355 = vmatprep.subr.mxu0 %v714
  %1356 = vmatpush2.msra.mxu0 %v713
  %1357 = vmatprep.mubr.f32.mxu0 %v325
  %1358 = vmatmul.mubr.f32.gmra.mxu0 %v324
  %v1359 = vpop.f32.mrf.mxu0
  %v1360 = vadd.f32 %v1289, %v1359
  %v1361 = vpop.f32.mrf.mxu0
  %v1362 = vadd.f32 %v1291, %v1361
  %1363 = vdwg.mxu0
  %1364 = vmatprep.subr.mxu0 %v962
  %1365 = vmatpush1.msra.mxu0 %v961
  %1366 = vmatprep.subr.mxu0 %v954
  %1367 = vmatpush1.msra.mxu0 %v953
  %1368 = vmatprep.subr.mxu0 %v946
  %1369 = vmatpush1.msra.mxu0 %v945
  %1370 = vmatprep.subr.mxu0 %v938
  %1371 = vmatpush1.msra.mxu0 %v937
  %1372 = vmatprep.subr.mxu0 %v930
  %1373 = vmatpush1.msra.mxu0 %v929
  %1374 = vmatprep.subr.mxu0 %v922
  %1375 = vmatpush1.msra.mxu0 %v921
  %1376 = vmatprep.subr.mxu0 %v914
  %1377 = vmatpush1.msra.mxu0 %v913
  %1378 = vmatprep.subr.mxu0 %v906
  %1379 = vmatpush1.msra.mxu0 %v905
  %1380 = vmatprep.subr.mxu0 %v898
  %1381 = vmatpush1.msra.mxu0 %v897
  %1382 = vmatprep.subr.mxu0 %v890
  %1383 = vmatpush1.msra.mxu0 %v889
  %1384 = vmatprep.subr.mxu0 %v882
  %1385 = vmatpush1.msra.mxu0 %v881
  %1386 = vmatprep.subr.mxu0 %v874
  %1387 = vmatpush1.msra.mxu0 %v873
  %1388 = vmatprep.subr.mxu0 %v866
  %1389 = vmatpush1.msra.mxu0 %v865
  %1390 = vmatprep.subr.mxu0 %v858
  %1391 = vmatpush1.msra.mxu0 %v857
  %1392 = vmatprep.subr.mxu0 %v850
  %1393 = vmatpush1.msra.mxu0 %v849
  %1394 = vmatprep.subr.mxu0 %v842
  %1395 = vmatpush1.msra.mxu0 %v841
  %1396 = vmatprep.subr.mxu0 0.0
  %1397 = vmatpush2.msra.mxu0 0.0
  %1398 = vmatprep.subr.mxu0 0.0
  %1399 = vmatpush2.msra.mxu0 0.0
  %1400 = vmatprep.subr.mxu0 0.0
  %1401 = vmatpush2.msra.mxu0 0.0
  %1402 = vmatprep.subr.mxu0 0.0
  %1403 = vmatpush2.msra.mxu0 0.0
  %1404 = vmatprep.subr.mxu0 0.0
  %1405 = vmatpush2.msra.mxu0 0.0
  %1406 = vmatprep.subr.mxu0 0.0
  %1407 = vmatpush2.msra.mxu0 0.0
  %1408 = vmatprep.subr.mxu0 0.0
  %1409 = vmatpush2.msra.mxu0 0.0
  %1410 = vmatprep.subr.mxu0 0.0
  %1411 = vmatpush2.msra.mxu0 0.0
  %1412 = vmatprep.subr.mxu0 0.0
  %1413 = vmatpush2.msra.mxu0 0.0
  %1414 = vmatprep.subr.mxu0 0.0
  %1415 = vmatpush2.msra.mxu0 0.0
  %1416 = vmatprep.subr.mxu0 0.0
  %1417 = vmatpush2.msra.mxu0 0.0
  %1418 = vmatprep.subr.mxu0 0.0
  %1419 = vmatpush2.msra.mxu0 0.0
  %1420 = vmatprep.subr.mxu0 0.0
  %1421 = vmatpush2.msra.mxu0 0.0
  %1422 = vmatprep.subr.mxu0 0.0
  %1423 = vmatpush2.msra.mxu0 0.0
  %1424 = vmatprep.subr.mxu0 0.0
  %1425 = vmatpush2.msra.mxu0 0.0
  %1426 = vmatprep.subr.mxu0 0.0
  %1427 = vmatpush2.msra.mxu0 0.0
  %1428 = vmatprep.mubr.f32.mxu0 0.0
  %1429 = vmatmul.mubr.f32.gmra.mxu0 %v326
  %v1430 = vpop.f32.mrf.mxu0
  %v1431 = vadd.f32 %v1360, %v1430
  %v1432 = vpop.f32.mrf.mxu0
  %v1433 = vadd.f32 %v1362, %v1432
  %1434 = vdwg.mxu0
  %1435 = vmatprep.subr.mxu0 %v452
  %1436 = vmatpush1.msra.mxu0 %v451
  %1437 = vmatprep.subr.mxu0 %v444
  %1438 = vmatpush1.msra.mxu0 %v443
  %1439 = vmatprep.subr.mxu0 %v436
  %1440 = vmatpush1.msra.mxu0 %v435
  %1441 = vmatprep.subr.mxu0 %v428
  %1442 = vmatpush1.msra.mxu0 %v427
  %1443 = vmatprep.subr.mxu0 %v420
  %1444 = vmatpush1.msra.mxu0 %v419
  %1445 = vmatprep.subr.mxu0 %v412
  %1446 = vmatpush1.msra.mxu0 %v411
  %1447 = vmatprep.subr.mxu0 %v404
  %1448 = vmatpush1.msra.mxu0 %v403
  %1449 = vmatprep.subr.mxu0 %v396
  %1450 = vmatpush1.msra.mxu0 %v395
  %1451 = vmatprep.subr.mxu0 %v388
  %1452 = vmatpush1.msra.mxu0 %v387
  %1453 = vmatprep.subr.mxu0 %v380
  %1454 = vmatpush1.msra.mxu0 %v379
  %1455 = vmatprep.subr.mxu0 %v372
  %1456 = vmatpush1.msra.mxu0 %v371
  %1457 = vmatprep.subr.mxu0 %v364
  %1458 = vmatpush1.msra.mxu0 %v363
  %1459 = vmatprep.subr.mxu0 %v356
  %1460 = vmatpush1.msra.mxu0 %v355
  %1461 = vmatprep.subr.mxu0 %v348
  %1462 = vmatpush1.msra.mxu0 %v347
  %1463 = vmatprep.subr.mxu0 %v340
  %1464 = vmatpush1.msra.mxu0 %v339
  %1465 = vmatprep.subr.mxu0 %v332
  %1466 = vmatpush1.msra.mxu0 %v331
  %1467 = vmatprep.subr.mxu0 %v580
  %1468 = vmatpush2.msra.mxu0 %v579
  %1469 = vmatprep.subr.mxu0 %v572
  %1470 = vmatpush2.msra.mxu0 %v571
  %1471 = vmatprep.subr.mxu0 %v564
  %1472 = vmatpush2.msra.mxu0 %v563
  %1473 = vmatprep.subr.mxu0 %v556
  %1474 = vmatpush2.msra.mxu0 %v555
  %1475 = vmatprep.subr.mxu0 %v548
  %1476 = vmatpush2.msra.mxu0 %v547
  %1477 = vmatprep.subr.mxu0 %v540
  %1478 = vmatpush2.msra.mxu0 %v539
  %1479 = vmatprep.subr.mxu0 %v532
  %1480 = vmatpush2.msra.mxu0 %v531
  %1481 = vmatprep.subr.mxu0 %v524
  %1482 = vmatpush2.msra.mxu0 %v523
  %1483 = vmatprep.subr.mxu0 %v516
  %1484 = vmatpush2.msra.mxu0 %v515
  %1485 = vmatprep.subr.mxu0 %v508
  %1486 = vmatpush2.msra.mxu0 %v507
  %1487 = vmatprep.subr.mxu0 %v500
  %1488 = vmatpush2.msra.mxu0 %v499
  %1489 = vmatprep.subr.mxu0 %v492
  %1490 = vmatpush2.msra.mxu0 %v491
  %1491 = vmatprep.subr.mxu0 %v484
  %1492 = vmatpush2.msra.mxu0 %v483
  %1493 = vmatprep.subr.mxu0 %v476
  %1494 = vmatpush2.msra.mxu0 %v475
  %1495 = vmatprep.subr.mxu0 %v468
  %1496 = vmatpush2.msra.mxu0 %v467
  %1497 = vmatprep.subr.mxu0 %v460
  %1498 = vmatpush2.msra.mxu0 %v459
  %1499 = vmatprep.mubr.f32.mxu0 %v323
  %1500 = vmatmul.mubr.f32.gmra.mxu0 %v322
  %v1501 = vpop.f32.mrf.mxu0
  %v1502 = vadd.f32 %v988, %v1501
  %v1503 = vpop.f32.mrf.mxu0
  %v1504 = vadd.f32 %v992, %v1503
  %1505 = vdwg.mxu0
  %1506 = vmatprep.subr.mxu0 %v708
  %1507 = vmatpush1.msra.mxu0 %v707
  %1508 = vmatprep.subr.mxu0 %v700
  %1509 = vmatpush1.msra.mxu0 %v699
  %1510 = vmatprep.subr.mxu0 %v692
  %1511 = vmatpush1.msra.mxu0 %v691
  %1512 = vmatprep.subr.mxu0 %v684
  %1513 = vmatpush1.msra.mxu0 %v683
  %1514 = vmatprep.subr.mxu0 %v676
  %1515 = vmatpush1.msra.mxu0 %v675
  %1516 = vmatprep.subr.mxu0 %v668
  %1517 = vmatpush1.msra.mxu0 %v667
  %1518 = vmatprep.subr.mxu0 %v660
  %1519 = vmatpush1.msra.mxu0 %v659
  %1520 = vmatprep.subr.mxu0 %v652
  %1521 = vmatpush1.msra.mxu0 %v651
  %1522 = vmatprep.subr.mxu0 %v644
  %1523 = vmatpush1.msra.mxu0 %v643
  %1524 = vmatprep.subr.mxu0 %v636
  %1525 = vmatpush1.msra.mxu0 %v635
  %1526 = vmatprep.subr.mxu0 %v628
  %1527 = vmatpush1.msra.mxu0 %v627
  %1528 = vmatprep.subr.mxu0 %v620
  %1529 = vmatpush1.msra.mxu0 %v619
  %1530 = vmatprep.subr.mxu0 %v612
  %1531 = vmatpush1.msra.mxu0 %v611
  %1532 = vmatprep.subr.mxu0 %v604
  %1533 = vmatpush1.msra.mxu0 %v603
  %1534 = vmatprep.subr.mxu0 %v596
  %1535 = vmatpush1.msra.mxu0 %v595
  %1536 = vmatprep.subr.mxu0 %v588
  %1537 = vmatpush1.msra.mxu0 %v587
  %1538 = vmatprep.subr.mxu0 %v836
  %1539 = vmatpush2.msra.mxu0 %v835
  %1540 = vmatprep.subr.mxu0 %v828
  %1541 = vmatpush2.msra.mxu0 %v827
  %1542 = vmatprep.subr.mxu0 %v820
  %1543 = vmatpush2.msra.mxu0 %v819
  %1544 = vmatprep.subr.mxu0 %v812
  %1545 = vmatpush2.msra.mxu0 %v811
  %1546 = vmatprep.subr.mxu0 %v804
  %1547 = vmatpush2.msra.mxu0 %v803
  %1548 = vmatprep.subr.mxu0 %v796
  %1549 = vmatpush2.msra.mxu0 %v795
  %1550 = vmatprep.subr.mxu0 %v788
  %1551 = vmatpush2.msra.mxu0 %v787
  %1552 = vmatprep.subr.mxu0 %v780
  %1553 = vmatpush2.msra.mxu0 %v779
  %1554 = vmatprep.subr.mxu0 %v772
  %1555 = vmatpush2.msra.mxu0 %v771
  %1556 = vmatprep.subr.mxu0 %v764
  %1557 = vmatpush2.msra.mxu0 %v763
  %1558 = vmatprep.subr.mxu0 %v756
  %1559 = vmatpush2.msra.mxu0 %v755
  %1560 = vmatprep.subr.mxu0 %v748
  %1561 = vmatpush2.msra.mxu0 %v747
  %1562 = vmatprep.subr.mxu0 %v740
  %1563 = vmatpush2.msra.mxu0 %v739
  %1564 = vmatprep.subr.mxu0 %v732
  %1565 = vmatpush2.msra.mxu0 %v731
  %1566 = vmatprep.subr.mxu0 %v724
  %1567 = vmatpush2.msra.mxu0 %v723
  %1568 = vmatprep.subr.mxu0 %v716
  %1569 = vmatpush2.msra.mxu0 %v715
  %1570 = vmatprep.mubr.f32.mxu0 %v325
  %1571 = vmatmul.mubr.f32.gmra.mxu0 %v324
  %v1572 = vpop.f32.mrf.mxu0
  %v1573 = vadd.f32 %v1502, %v1572
  %v1574 = vpop.f32.mrf.mxu0
  %v1575 = vadd.f32 %v1504, %v1574
  %1576 = vdwg.mxu0
  %1577 = vmatprep.subr.mxu0 %v964
  %1578 = vmatpush1.msra.mxu0 %v963
  %1579 = vmatprep.subr.mxu0 %v956
  %1580 = vmatpush1.msra.mxu0 %v955
  %1581 = vmatprep.subr.mxu0 %v948
  %1582 = vmatpush1.msra.mxu0 %v947
  %1583 = vmatprep.subr.mxu0 %v940
  %1584 = vmatpush1.msra.mxu0 %v939
  %1585 = vmatprep.subr.mxu0 %v932
  %1586 = vmatpush1.msra.mxu0 %v931
  %1587 = vmatprep.subr.mxu0 %v924
  %1588 = vmatpush1.msra.mxu0 %v923
  %1589 = vmatprep.subr.mxu0 %v916
  %1590 = vmatpush1.msra.mxu0 %v915
  %1591 = vmatprep.subr.mxu0 %v908
  %1592 = vmatpush1.msra.mxu0 %v907
  %1593 = vmatprep.subr.mxu0 %v900
  %1594 = vmatpush1.msra.mxu0 %v899
  %1595 = vmatprep.subr.mxu0 %v892
  %1596 = vmatpush1.msra.mxu0 %v891
  %1597 = vmatprep.subr.mxu0 %v884
  %1598 = vmatpush1.msra.mxu0 %v883
  %1599 = vmatprep.subr.mxu0 %v876
  %1600 = vmatpush1.msra.mxu0 %v875
  %1601 = vmatprep.subr.mxu0 %v868
  %1602 = vmatpush1.msra.mxu0 %v867
  %1603 = vmatprep.subr.mxu0 %v860
  %1604 = vmatpush1.msra.mxu0 %v859
  %1605 = vmatprep.subr.mxu0 %v852
  %1606 = vmatpush1.msra.mxu0 %v851
  %1607 = vmatprep.subr.mxu0 %v844
  %1608 = vmatpush1.msra.mxu0 %v843
  %1609 = vmatprep.subr.mxu0 0.0
  %1610 = vmatpush2.msra.mxu0 0.0
  %1611 = vmatprep.subr.mxu0 0.0
  %1612 = vmatpush2.msra.mxu0 0.0
  %1613 = vmatprep.subr.mxu0 0.0
  %1614 = vmatpush2.msra.mxu0 0.0
  %1615 = vmatprep.subr.mxu0 0.0
  %1616 = vmatpush2.msra.mxu0 0.0
  %1617 = vmatprep.subr.mxu0 0.0
  %1618 = vmatpush2.msra.mxu0 0.0
  %1619 = vmatprep.subr.mxu0 0.0
  %1620 = vmatpush2.msra.mxu0 0.0
  %1621 = vmatprep.subr.mxu0 0.0
  %1622 = vmatpush2.msra.mxu0 0.0
  %1623 = vmatprep.subr.mxu0 0.0
  %1624 = vmatpush2.msra.mxu0 0.0
  %1625 = vmatprep.subr.mxu0 0.0
  %1626 = vmatpush2.msra.mxu0 0.0
  %1627 = vmatprep.subr.mxu0 0.0
  %1628 = vmatpush2.msra.mxu0 0.0
  %1629 = vmatprep.subr.mxu0 0.0
  %1630 = vmatpush2.msra.mxu0 0.0
  %1631 = vmatprep.subr.mxu0 0.0
  %1632 = vmatpush2.msra.mxu0 0.0
  %1633 = vmatprep.subr.mxu0 0.0
  %1634 = vmatpush2.msra.mxu0 0.0
  %1635 = vmatprep.subr.mxu0 0.0
  %1636 = vmatpush2.msra.mxu0 0.0
  %1637 = vmatprep.subr.mxu0 0.0
  %1638 = vmatpush2.msra.mxu0 0.0
  %1639 = vmatprep.subr.mxu0 0.0
  %1640 = vmatpush2.msra.mxu0 0.0
  %1641 = vmatprep.mubr.f32.mxu0 0.0
  %1642 = vmatmul.mubr.f32.gmra.mxu0 %v326
  %v1643 = vpop.f32.mrf.mxu0
  %v1644 = vadd.f32 %v1573, %v1643
  %v1645 = vpop.f32.mrf.mxu0
  %v1646 = vadd.f32 %v1575, %v1645
  %1647 = vdwg.mxu0
  %1648 = vmatprep.subr.mxu0 %v454
  %1649 = vmatpush1.msra.mxu0 %v453
  %1650 = vmatprep.subr.mxu0 %v446
  %1651 = vmatpush1.msra.mxu0 %v445
  %1652 = vmatprep.subr.mxu0 %v438
  %1653 = vmatpush1.msra.mxu0 %v437
  %1654 = vmatprep.subr.mxu0 %v430
  %1655 = vmatpush1.msra.mxu0 %v429
  %1656 = vmatprep.subr.mxu0 %v422
  %1657 = vmatpush1.msra.mxu0 %v421
  %1658 = vmatprep.subr.mxu0 %v414
  %1659 = vmatpush1.msra.mxu0 %v413
  %1660 = vmatprep.subr.mxu0 %v406
  %1661 = vmatpush1.msra.mxu0 %v405
  %1662 = vmatprep.subr.mxu0 %v398
  %1663 = vmatpush1.msra.mxu0 %v397
  %1664 = vmatprep.subr.mxu0 %v390
  %1665 = vmatpush1.msra.mxu0 %v389
  %1666 = vmatprep.subr.mxu0 %v382
  %1667 = vmatpush1.msra.mxu0 %v381
  %1668 = vmatprep.subr.mxu0 %v374
  %1669 = vmatpush1.msra.mxu0 %v373
  %1670 = vmatprep.subr.mxu0 %v366
  %1671 = vmatpush1.msra.mxu0 %v365
  %1672 = vmatprep.subr.mxu0 %v358
  %1673 = vmatpush1.msra.mxu0 %v357
  %1674 = vmatprep.subr.mxu0 %v350
  %1675 = vmatpush1.msra.mxu0 %v349
  %1676 = vmatprep.subr.mxu0 %v342
  %1677 = vmatpush1.msra.mxu0 %v341
  %1678 = vmatprep.subr.mxu0 %v334
  %1679 = vmatpush1.msra.mxu0 %v333
  %1680 = vmatprep.subr.mxu0 %v582
  %1681 = vmatpush2.msra.mxu0 %v581
  %1682 = vmatprep.subr.mxu0 %v574
  %1683 = vmatpush2.msra.mxu0 %v573
  %1684 = vmatprep.subr.mxu0 %v566
  %1685 = vmatpush2.msra.mxu0 %v565
  %1686 = vmatprep.subr.mxu0 %v558
  %1687 = vmatpush2.msra.mxu0 %v557
  %1688 = vmatprep.subr.mxu0 %v550
  %1689 = vmatpush2.msra.mxu0 %v549
  %1690 = vmatprep.subr.mxu0 %v542
  %1691 = vmatpush2.msra.mxu0 %v541
  %1692 = vmatprep.subr.mxu0 %v534
  %1693 = vmatpush2.msra.mxu0 %v533
  %1694 = vmatprep.subr.mxu0 %v526
  %1695 = vmatpush2.msra.mxu0 %v525
  %1696 = vmatprep.subr.mxu0 %v518
  %1697 = vmatpush2.msra.mxu0 %v517
  %1698 = vmatprep.subr.mxu0 %v510
  %1699 = vmatpush2.msra.mxu0 %v509
  %1700 = vmatprep.subr.mxu0 %v502
  %1701 = vmatpush2.msra.mxu0 %v501
  %1702 = vmatprep.subr.mxu0 %v494
  %1703 = vmatpush2.msra.mxu0 %v493
  %1704 = vmatprep.subr.mxu0 %v486
  %1705 = vmatpush2.msra.mxu0 %v485
  %1706 = vmatprep.subr.mxu0 %v478
  %1707 = vmatpush2.msra.mxu0 %v477
  %1708 = vmatprep.subr.mxu0 %v470
  %1709 = vmatpush2.msra.mxu0 %v469
  %1710 = vmatprep.subr.mxu0 %v462
  %1711 = vmatpush2.msra.mxu0 %v461
  %1712 = vmatprep.mubr.f32.mxu0 %v323
  %1713 = vmatmul.mubr.f32.gmra.mxu0 %v322
  %v1714 = vpop.f32.mrf.mxu0
  %v1715 = vadd.f32 %v996, %v1714
  %v1716 = vpop.f32.mrf.mxu0
  %v1717 = vadd.f32 %v1000, %v1716
  %1718 = vdwg.mxu0
  %1719 = vmatprep.subr.mxu0 %v710
  %1720 = vmatpush1.msra.mxu0 %v709
  %1721 = vmatprep.subr.mxu0 %v702
  %1722 = vmatpush1.msra.mxu0 %v701
  %1723 = vmatprep.subr.mxu0 %v694
  %1724 = vmatpush1.msra.mxu0 %v693
  %1725 = vmatprep.subr.mxu0 %v686
  %1726 = vmatpush1.msra.mxu0 %v685
  %1727 = vmatprep.subr.mxu0 %v678
  %1728 = vmatpush1.msra.mxu0 %v677
  %1729 = vmatprep.subr.mxu0 %v670
  %1730 = vmatpush1.msra.mxu0 %v669
  %1731 = vmatprep.subr.mxu0 %v662
  %1732 = vmatpush1.msra.mxu0 %v661
  %1733 = vmatprep.subr.mxu0 %v654
  %1734 = vmatpush1.msra.mxu0 %v653
  %1735 = vmatprep.subr.mxu0 %v646
  %1736 = vmatpush1.msra.mxu0 %v645
  %1737 = vmatprep.subr.mxu0 %v638
  %1738 = vmatpush1.msra.mxu0 %v637
  %1739 = vmatprep.subr.mxu0 %v630
  %1740 = vmatpush1.msra.mxu0 %v629
  %1741 = vmatprep.subr.mxu0 %v622
  %1742 = vmatpush1.msra.mxu0 %v621
  %1743 = vmatprep.subr.mxu0 %v614
  %1744 = vmatpush1.msra.mxu0 %v613
  %1745 = vmatprep.subr.mxu0 %v606
  %1746 = vmatpush1.msra.mxu0 %v605
  %1747 = vmatprep.subr.mxu0 %v598
  %1748 = vmatpush1.msra.mxu0 %v597
  %1749 = vmatprep.subr.mxu0 %v590
  %1750 = vmatpush1.msra.mxu0 %v589
  %1751 = vmatprep.subr.mxu0 %v838
  %1752 = vmatpush2.msra.mxu0 %v837
  %1753 = vmatprep.subr.mxu0 %v830
  %1754 = vmatpush2.msra.mxu0 %v829
  %1755 = vmatprep.subr.mxu0 %v822
  %1756 = vmatpush2.msra.mxu0 %v821
  %1757 = vmatprep.subr.mxu0 %v814
  %1758 = vmatpush2.msra.mxu0 %v813
  %1759 = vmatprep.subr.mxu0 %v806
  %1760 = vmatpush2.msra.mxu0 %v805
  %1761 = vmatprep.subr.mxu0 %v798
  %1762 = vmatpush2.msra.mxu0 %v797
  %1763 = vmatprep.subr.mxu0 %v790
  %1764 = vmatpush2.msra.mxu0 %v789
  %1765 = vmatprep.subr.mxu0 %v782
  %1766 = vmatpush2.msra.mxu0 %v781
  %1767 = vmatprep.subr.mxu0 %v774
  %1768 = vmatpush2.msra.mxu0 %v773
  %1769 = vmatprep.subr.mxu0 %v766
  %1770 = vmatpush2.msra.mxu0 %v765
  %1771 = vmatprep.subr.mxu0 %v758
  %1772 = vmatpush2.msra.mxu0 %v757
  %1773 = vmatprep.subr.mxu0 %v750
  %1774 = vmatpush2.msra.mxu0 %v749
  %1775 = vmatprep.subr.mxu0 %v742
  %1776 = vmatpush2.msra.mxu0 %v741
  %1777 = vmatprep.subr.mxu0 %v734
  %1778 = vmatpush2.msra.mxu0 %v733
  %1779 = vmatprep.subr.mxu0 %v726
  %1780 = vmatpush2.msra.mxu0 %v725
  %1781 = vmatprep.subr.mxu0 %v718
  %1782 = vmatpush2.msra.mxu0 %v717
  %1783 = vmatprep.mubr.f32.mxu0 %v325
  %1784 = vmatmul.mubr.f32.gmra.mxu0 %v324
  %v1785 = vpop.f32.mrf.mxu0
  %v1786 = vadd.f32 %v1715, %v1785
  %v1787 = vpop.f32.mrf.mxu0
  %v1788 = vadd.f32 %v1717, %v1787
  %1789 = vdwg.mxu0
  %1790 = vmatprep.subr.mxu0 %v966
  %1791 = vmatpush1.msra.mxu0 %v965
  %1792 = vmatprep.subr.mxu0 %v958
  %1793 = vmatpush1.msra.mxu0 %v957
  %1794 = vmatprep.subr.mxu0 %v950
  %1795 = vmatpush1.msra.mxu0 %v949
  %1796 = vmatprep.subr.mxu0 %v942
  %1797 = vmatpush1.msra.mxu0 %v941
  %1798 = vmatprep.subr.mxu0 %v934
  %1799 = vmatpush1.msra.mxu0 %v933
  %1800 = vmatprep.subr.mxu0 %v926
  %1801 = vmatpush1.msra.mxu0 %v925
  %1802 = vmatprep.subr.mxu0 %v918
  %1803 = vmatpush1.msra.mxu0 %v917
  %1804 = vmatprep.subr.mxu0 %v910
  %1805 = vmatpush1.msra.mxu0 %v909
  %1806 = vmatprep.subr.mxu0 %v902
  %1807 = vmatpush1.msra.mxu0 %v901
  %1808 = vmatprep.subr.mxu0 %v894
  %1809 = vmatpush1.msra.mxu0 %v893
  %1810 = vmatprep.subr.mxu0 %v886
  %1811 = vmatpush1.msra.mxu0 %v885
  %1812 = vmatprep.subr.mxu0 %v878
  %1813 = vmatpush1.msra.mxu0 %v877
  %1814 = vmatprep.subr.mxu0 %v870
  %1815 = vmatpush1.msra.mxu0 %v869
  %1816 = vmatprep.subr.mxu0 %v862
  %1817 = vmatpush1.msra.mxu0 %v861
  %1818 = vmatprep.subr.mxu0 %v854
  %1819 = vmatpush1.msra.mxu0 %v853
  %1820 = vmatprep.subr.mxu0 %v846
  %1821 = vmatpush1.msra.mxu0 %v845
  %1822 = vmatprep.subr.mxu0 0.0
  %1823 = vmatpush2.msra.mxu0 0.0
  %1824 = vmatprep.subr.mxu0 0.0
  %1825 = vmatpush2.msra.mxu0 0.0
  %1826 = vmatprep.subr.mxu0 0.0
  %1827 = vmatpush2.msra.mxu0 0.0
  %1828 = vmatprep.subr.mxu0 0.0
  %1829 = vmatpush2.msra.mxu0 0.0
  %1830 = vmatprep.subr.mxu0 0.0
  %1831 = vmatpush2.msra.mxu0 0.0
  %1832 = vmatprep.subr.mxu0 0.0
  %1833 = vmatpush2.msra.mxu0 0.0
  %1834 = vmatprep.subr.mxu0 0.0
  %1835 = vmatpush2.msra.mxu0 0.0
  %1836 = vmatprep.subr.mxu0 0.0
  %1837 = vmatpush2.msra.mxu0 0.0
  %1838 = vmatprep.subr.mxu0 0.0
  %1839 = vmatpush2.msra.mxu0 0.0
  %1840 = vmatprep.subr.mxu0 0.0
  %1841 = vmatpush2.msra.mxu0 0.0
  %1842 = vmatprep.subr.mxu0 0.0
  %1843 = vmatpush2.msra.mxu0 0.0
  %1844 = vmatprep.subr.mxu0 0.0
  %1845 = vmatpush2.msra.mxu0 0.0
  %1846 = vmatprep.subr.mxu0 0.0
  %1847 = vmatpush2.msra.mxu0 0.0
  %1848 = vmatprep.subr.mxu0 0.0
  %1849 = vmatpush2.msra.mxu0 0.0
  %1850 = vmatprep.subr.mxu0 0.0
  %1851 = vmatpush2.msra.mxu0 0.0
  %1852 = vmatprep.subr.mxu0 0.0
  %1853 = vmatpush2.msra.mxu0 0.0
  %1854 = vmatprep.mubr.f32.mxu0 0.0
  %1855 = vmatmul.mubr.f32.gmra.mxu0 %v326
  %v1856 = vpop.f32.mrf.mxu0
  %v1857 = vadd.f32 %v1786, %v1856
  %v1858 = vpop.f32.mrf.mxu0
  %v1859 = vadd.f32 %v1788, %v1858
  %1860 = vdwg.mxu0
  %v1861 = vmax.f32 %v1218, 0.0
  %v1862 = vmax.f32 %v1220, 0.0
  %v1863 = vmax.f32 %v1431, 0.0
  %v1864 = vmax.f32 %v1433, 0.0
  %v1865 = vmax.f32 %v1644, 0.0
  %v1866 = vmax.f32 %v1646, 0.0
  %v1867 = vmax.f32 %v1857, 0.0
  %v1868 = vmax.f32 %v1859, 0.0
  %v1869 = vmax.f32 %v1861, %v1863
  %v1870 = vmax.f32 %v1862, %v1864
  %v1871 = vmax.f32 %v1865, %v1867
  %v1872 = vmax.f32 %v1866, %v1868
  %v1873 = vmax.f32 %v1869, %v1871
  %v1874 = vmax.f32 %v1870, %v1872
  %v1875 = vld [vmem:[%s5] sm:$0xff]
  %v1876 = vld [vmem:[%s5 + $0x8] sm:$0xff]
  %v1877 = vld [vmem:[%s5 + $0x10] sm:$0xff]
  %v1878 = vld [vmem:[%s5 + $0x18] sm:$0xff]
  %v1879 = vld [vmem:[%s5 + $0x20] sm:$0xff]
  %v1880 = vld [vmem:[%s5 + $0x28] sm:$0xff]
  %v1881 = vld [vmem:[%s5 + $0x30] sm:$0xff]
  %v1882 = vld [vmem:[%s5 + $0x38] sm:$0xff]
  %v1883 = vld [vmem:[%s5 + $0x40] sm:$0xff]
  %v1884 = vld [vmem:[%s5 + $0x48] sm:$0xff]
  %v1885 = vld [vmem:[%s5 + $0x50] sm:$0xff]
  %v1886 = vld [vmem:[%s5 + $0x58] sm:$0xff]
  %v1887 = vld [vmem:[%s5 + $0x60] sm:$0xff]
  %v1888 = vld [vmem:[%s5 + $0x68] sm:$0xff]
  %v1889 = vld [vmem:[%s5 + $0x70] sm:$0xff]
  %v1890 = vld [vmem:[%s5 + $0x78] sm:$0xff]
  %v1891 = vld [vmem:[%s5 + $0x80] sm:$0xff]
  %v1892 = vld [vmem:[%s5 + $0x88] sm:$0xff]
  %v1893 = vld [vmem:[%s5 + $0x90] sm:$0xff]
  %v1894 = vld [vmem:[%s5 + $0x98] sm:$0xff]
  %v1895 = vld [vmem:[%s5 + $0xa0] sm:$0xff]
  %v1896 = vld [vmem:[%s5 + $0xa8] sm:$0xff]
  %v1897 = vld [vmem:[%s5 + $0xb0] sm:$0xff]
  %v1898 = vld [vmem:[%s5 + $0xb8] sm:$0xff]
  %v1899 = vld [vmem:[%s5 + $0xc0] sm:$0xff]
  %v1900 = vld [vmem:[%s5 + $0xc8] sm:$0xff]
  %v1901 = vld [vmem:[%s5 + $0xd0] sm:$0xff]
  %v1902 = vld [vmem:[%s5 + $0xd8] sm:$0xff]
  %v1903 = vld [vmem:[%s5 + $0xe0] sm:$0xff]
  %v1904 = vld [vmem:[%s5 + $0xe8] sm:$0xff]
  %v1905 = vld [vmem:[%s5 + $0xf0] sm:$0xff]
  %v1906 = vld [vmem:[%s5 + $0xf8] sm:$0xff]
  %v1907 = vld [vmem:[%s6] sm:$0x1]
  %v1909 = vlaneseq
  %v1910 = vshrl.u32 %v1909, 7
  %v1911 = vsub.s32 0, %v1910
  %v1912 = vrot.slane %v1907, %v1911
  %1914 = vmatprep.subr.mxu0 0.0
  %1915 = vmatpush1.msra.mxu0 %v1890
  %1916 = vmatprep.subr.mxu0 0.0
  %1917 = vmatpush1.msra.mxu0 %v1889
  %1918 = vmatprep.subr.mxu0 0.0
  %1919 = vmatpush1.msra.mxu0 %v1888
  %1920 = vmatprep.subr.mxu0 0.0
  %1921 = vmatpush1.msra.mxu0 %v1887
  %1922 = vmatprep.subr.mxu0 0.0
  %1923 = vmatpush1.msra.mxu0 %v1886
  %1924 = vmatprep.subr.mxu0 0.0
  %1925 = vmatpush1.msra.mxu0 %v1885
  %1926 = vmatprep.subr.mxu0 0.0
  %1927 = vmatpush1.msra.mxu0 %v1884
  %1928 = vmatprep.subr.mxu0 0.0
  %1929 = vmatpush1.msra.mxu0 %v1883
  %1930 = vmatprep.subr.mxu0 0.0
  %1931 = vmatpush1.msra.mxu0 %v1882
  %1932 = vmatprep.subr.mxu0 0.0
  %1933 = vmatpush1.msra.mxu0 %v1881
  %1934 = vmatprep.subr.mxu0 0.0
  %1935 = vmatpush1.msra.mxu0 %v1880
  %1936 = vmatprep.subr.mxu0 0.0
  %1937 = vmatpush1.msra.mxu0 %v1879
  %1938 = vmatprep.subr.mxu0 0.0
  %1939 = vmatpush1.msra.mxu0 %v1878
  %1940 = vmatprep.subr.mxu0 0.0
  %1941 = vmatpush1.msra.mxu0 %v1877
  %1942 = vmatprep.subr.mxu0 0.0
  %1943 = vmatpush1.msra.mxu0 %v1876
  %1944 = vmatprep.subr.mxu0 0.0
  %1945 = vmatpush1.msra.mxu0 %v1875
  %1946 = vmatprep.subr.mxu0 0.0
  %1947 = vmatpush2.msra.mxu0 %v1906
  %1948 = vmatprep.subr.mxu0 0.0
  %1949 = vmatpush2.msra.mxu0 %v1905
  %1950 = vmatprep.subr.mxu0 0.0
  %1951 = vmatpush2.msra.mxu0 %v1904
  %1952 = vmatprep.subr.mxu0 0.0
  %1953 = vmatpush2.msra.mxu0 %v1903
  %1954 = vmatprep.subr.mxu0 0.0
  %1955 = vmatpush2.msra.mxu0 %v1902
  %1956 = vmatprep.subr.mxu0 0.0
  %1957 = vmatpush2.msra.mxu0 %v1901
  %1958 = vmatprep.subr.mxu0 0.0
  %1959 = vmatpush2.msra.mxu0 %v1900
  %1960 = vmatprep.subr.mxu0 0.0
  %1961 = vmatpush2.msra.mxu0 %v1899
  %1962 = vmatprep.subr.mxu0 0.0
  %1963 = vmatpush2.msra.mxu0 %v1898
  %1964 = vmatprep.subr.mxu0 0.0
  %1965 = vmatpush2.msra.mxu0 %v1897
  %1966 = vmatprep.subr.mxu0 0.0
  %1967 = vmatpush2.msra.mxu0 %v1896
  %1968 = vmatprep.subr.mxu0 0.0
  %1969 = vmatpush2.msra.mxu0 %v1895
  %1970 = vmatprep.subr.mxu0 0.0
  %1971 = vmatpush2.msra.mxu0 %v1894
  %1972 = vmatprep.subr.mxu0 0.0
  %1973 = vmatpush2.msra.mxu0 %v1893
  %1974 = vmatprep.subr.mxu0 0.0
  %1975 = vmatpush2.msra.mxu0 %v1892
  %1976 = vmatprep.subr.mxu0 0.0
  %1977 = vmatpush2.msra.mxu0 %v1891
  %1978 = vmatprep.mubr.f32.mxu0 %v1874
  %1979 = vmatmul.mubr.f32.gmra.mxu0 %v1873
  %v1980 = vpop.f32.mrf.mxu0
  %v1981 = vadd.f32 %v1912, %v1980
  %v1982 = vpop.f32.mrf.mxu0
  %1983 = vdwg.mxu0
  %v1984 = vmax.f32 %v1981, 0.0
  %v1985 = vld [vmem:[%s7] sm:$0xff]
  %v1986 = vld [vmem:[%s7 + $0x8] sm:$0xff]
  %v1987 = vld [vmem:[%s7 + $0x10] sm:$0xff]
  %v1988 = vld [vmem:[%s7 + $0x18] sm:$0xff]
  %v1989 = vld [vmem:[%s7 + $0x20] sm:$0xff]
  %v1990 = vld [vmem:[%s7 + $0x28] sm:$0xff]
  %v1991 = vld [vmem:[%s7 + $0x30] sm:$0xff]
  %v1992 = vld [vmem:[%s7 + $0x38] sm:$0xff]
  %v1993 = vld [vmem:[%s7 + $0x40] sm:$0xff]
  %v1994 = vld [vmem:[%s7 + $0x48] sm:$0xff]
  %v1995 = vld [vmem:[%s7 + $0x50] sm:$0xff]
  %v1996 = vld [vmem:[%s7 + $0x58] sm:$0xff]
  %v1997 = vld [vmem:[%s7 + $0x60] sm:$0xff]
  %v1998 = vld [vmem:[%s7 + $0x68] sm:$0xff]
  %v1999 = vld [vmem:[%s7 + $0x70] sm:$0xff]
  %v2000 = vld [vmem:[%s7 + $0x78] sm:$0xff]
  %v2001 = vld [vmem:[%s8] sm:$0x1]
  %v2003 = vlaneseq
  %v2004 = vshrl.u32 %v2003, 7
  %v2005 = vsub.s32 0, %v2004
  %v2006 = vrot.slane %v2001, %v2005
  %2008 = vmatprep.subr.mxu0 0.0
  %2009 = vmatpush1.msra.mxu0 %v2000
  %2010 = vmatprep.subr.mxu0 0.0
  %2011 = vmatpush1.msra.mxu0 %v1999
  %2012 = vmatprep.subr.mxu0 0.0
  %2013 = vmatpush1.msra.mxu0 %v1998
  %2014 = vmatprep.subr.mxu0 0.0
  %2015 = vmatpush1.msra.mxu0 %v1997
  %2016 = vmatprep.subr.mxu0 0.0
  %2017 = vmatpush1.msra.mxu0 %v1996
  %2018 = vmatprep.subr.mxu0 0.0
  %2019 = vmatpush1.msra.mxu0 %v1995
  %2020 = vmatprep.subr.mxu0 0.0
  %2021 = vmatpush1.msra.mxu0 %v1994
  %2022 = vmatprep.subr.mxu0 0.0
  %2023 = vmatpush1.msra.mxu0 %v1993
  %2024 = vmatprep.subr.mxu0 0.0
  %2025 = vmatpush1.msra.mxu0 %v1992
  %2026 = vmatprep.subr.mxu0 0.0
  %2027 = vmatpush1.msra.mxu0 %v1991
  %2028 = vmatprep.subr.mxu0 0.0
  %2029 = vmatpush1.msra.mxu0 %v1990
  %2030 = vmatprep.subr.mxu0 0.0
  %2031 = vmatpush1.msra.mxu0 %v1989
  %2032 = vmatprep.subr.mxu0 0.0
  %2033 = vmatpush1.msra.mxu0 %v1988
  %2034 = vmatprep.subr.mxu0 0.0
  %2035 = vmatpush1.msra.mxu0 %v1987
  %2036 = vmatprep.subr.mxu0 0.0
  %2037 = vmatpush1.msra.mxu0 %v1986
  %2038 = vmatprep.subr.mxu0 0.0
  %2039 = vmatpush1.msra.mxu0 %v1985
  %2040 = vmatprep.subr.mxu0 0.0
  %2041 = vmatpush2.msra.mxu0 0.0
  %2042 = vmatprep.subr.mxu0 0.0
  %2043 = vmatpush2.msra.mxu0 0.0
  %2044 = vmatprep.subr.mxu0 0.0
  %2045 = vmatpush2.msra.mxu0 0.0
  %2046 = vmatprep.subr.mxu0 0.0
  %2047 = vmatpush2.msra.mxu0 0.0
  %2048 = vmatprep.subr.mxu0 0.0
  %2049 = vmatpush2.msra.mxu0 0.0
  %2050 = vmatprep.subr.mxu0 0.0
  %2051 = vmatpush2.msra.mxu0 0.0
  %2052 = vmatprep.subr.mxu0 0.0
  %2053 = vmatpush2.msra.mxu0 0.0
  %2054 = vmatprep.subr.mxu0 0.0
  %2055 = vmatpush2.msra.mxu0 0.0
  %2056 = vmatprep.subr.mxu0 0.0
  %2057 = vmatpush2.msra.mxu0 0.0
  %2058 = vmatprep.subr.mxu0 0.0
  %2059 = vmatpush2.msra.mxu0 0.0
  %2060 = vmatprep.subr.mxu0 0.0
  %2061 = vmatpush2.msra.mxu0 0.0
  %2062 = vmatprep.subr.mxu0 0.0
  %2063 = vmatpush2.msra.mxu0 0.0
  %2064 = vmatprep.subr.mxu0 0.0
  %2065 = vmatpush2.msra.mxu0 0.0
  %2066 = vmatprep.subr.mxu0 0.0
  %2067 = vmatpush2.msra.mxu0 0.0
  %2068 = vmatprep.subr.mxu0 0.0
  %2069 = vmatpush2.msra.mxu0 0.0
  %2070 = vmatprep.subr.mxu0 0.0
  %2071 = vmatpush2.msra.mxu0 0.0
  %2072 = vmatprep.mubr.f32.mxu0 0.0
  %2073 = vmatmul.mubr.f32.gmra.mxu0 %v1984
  %v2074 = vpop.f32.mrf.mxu0
  %v2075 = vadd.f32 %v2006, %v2074
  %v2076 = vpop.f32.mrf.mxu0
  %2077 = vdwg.mxu0
  %v2078 = vmax.f32 %v2075, 0.0
  %v2079 = vld [vmem:[%s9] sm:$0xff]
  %v2080 = vld [vmem:[%s9 + $0x8] sm:$0xff]
  %v2081 = vld [vmem:[%s9 + $0x10] sm:$0xff]
  %v2082 = vld [vmem:[%s9 + $0x18] sm:$0xff]
  %v2083 = vld [vmem:[%s9 + $0x20] sm:$0xff]
  %v2084 = vld [vmem:[%s9 + $0x28] sm:$0xff]
  %v2085 = vld [vmem:[%s9 + $0x30] sm:$0xff]
  %v2086 = vld [vmem:[%s9 + $0x38] sm:$0xff]
  %v2087 = vld [vmem:[%s9 + $0x40] sm:$0xff]
  %v2088 = vld [vmem:[%s9 + $0x48] sm:$0xff]
  %v2089 = vld [vmem:[%s9 + $0x50] sm:$0xff]
  %v2090 = vld [vmem:[%s9 + $0x58] sm:$0xff]
  %v2091 = vld [vmem:[%s9 + $0x60] sm:$0xff]
  %v2092 = vld [vmem:[%s9 + $0x68] sm:$0xff]
  %v2093 = vld [vmem:[%s9 + $0x70] sm:$0xff]
  %v2094 = vld [vmem:[%s9 + $0x78] sm:$0xff]
  %v2095 = vld [vmem:[%s9 + $0x80] sm:$0xff]
  %v2096 = vld [vmem:[%s9 + $0x88] sm:$0xff]
  %v2097 = vld [vmem:[%s9 + $0x90] sm:$0xff]
  %v2098 = vld [vmem:[%s9 + $0x98] sm:$0xff]
  %v2099 = vld [vmem:[%s9 + $0xa0] sm:$0xff]
  %v2100 = vld [vmem:[%s9 + $0xa8] sm:$0xff]
  %v2101 = vld [vmem:[%s9 + $0xb0] sm:$0xff]
  %v2102 = vld [vmem:[%s9 + $0xb8] sm:$0xff]
  %v2103 = vld [vmem:[%s9 + $0xc0] sm:$0xff]
  %v2104 = vld [vmem:[%s9 + $0xc8] sm:$0xff]
  %v2105 = vld [vmem:[%s9 + $0xd0] sm:$0xff]
  %v2106 = vld [vmem:[%s9 + $0xd8] sm:$0xff]
  %v2107 = vld [vmem:[%s9 + $0xe0] sm:$0xff]
  %v2108 = vld [vmem:[%s9 + $0xe8] sm:$0xff]
  %v2109 = vld [vmem:[%s9 + $0xf0] sm:$0xff]
  %v2110 = vld [vmem:[%s9 + $0xf8] sm:$0xff]
  %v2111 = vld [vmem:[%s9 + $0x100] sm:$0xff]
  %v2112 = vld [vmem:[%s9 + $0x108] sm:$0xff]
  %v2113 = vld [vmem:[%s9 + $0x110] sm:$0xff]
  %v2114 = vld [vmem:[%s9 + $0x118] sm:$0xff]
  %v2115 = vld [vmem:[%s9 + $0x120] sm:$0xff]
  %v2116 = vld [vmem:[%s9 + $0x128] sm:$0xff]
  %v2117 = vld [vmem:[%s9 + $0x130] sm:$0xff]
  %v2118 = vld [vmem:[%s9 + $0x138] sm:$0xff]
  %v2119 = vld [vmem:[%s9 + $0x140] sm:$0xff]
  %v2120 = vld [vmem:[%s9 + $0x148] sm:$0xff]
  %v2121 = vld [vmem:[%s9 + $0x150] sm:$0xff]
  %v2122 = vld [vmem:[%s9 + $0x158] sm:$0xff]
  %v2123 = vld [vmem:[%s9 + $0x160] sm:$0xff]
  %v2124 = vld [vmem:[%s9 + $0x168] sm:$0xff]
  %v2125 = vld [vmem:[%s9 + $0x170] sm:$0xff]
  %v2126 = vld [vmem:[%s9 + $0x178] sm:$0xff]
  %v2127 = vld [vmem:[%s9 + $0x180] sm:$0xff]
  %v2128 = vld [vmem:[%s9 + $0x188] sm:$0xff]
  %v2129 = vld [vmem:[%s9 + $0x190] sm:$0xff]
  %v2130 = vld [vmem:[%s9 + $0x198] sm:$0xff]
  %v2131 = vld [vmem:[%s9 + $0x1a0] sm:$0xff]
  %v2132 = vld [vmem:[%s9 + $0x1a8] sm:$0xff]
  %v2133 = vld [vmem:[%s9 + $0x1b0] sm:$0xff]
  %v2134 = vld [vmem:[%s9 + $0x1b8] sm:$0xff]
  %v2135 = vld [vmem:[%s9 + $0x1c0] sm:$0xff]
  %v2136 = vld [vmem:[%s9 + $0x1c8] sm:$0xff]
  %v2137 = vld [vmem:[%s9 + $0x1d0] sm:$0xff]
  %v2138 = vld [vmem:[%s9 + $0x1d8] sm:$0xff]
  %v2139 = vld [vmem:[%s9 + $0x1e0] sm:$0xff]
  %v2140 = vld [vmem:[%s9 + $0x1e8] sm:$0xff]
  %v2141 = vld [vmem:[%s9 + $0x1f0] sm:$0xff]
  %v2142 = vld [vmem:[%s9 + $0x1f8] sm:$0xff]
  %v2143 = vld [vmem:[%s9 + $0x200] sm:$0xff]
  %v2144 = vld [vmem:[%s9 + $0x208] sm:$0xff]
  %v2145 = vld [vmem:[%s9 + $0x210] sm:$0xff]
  %v2146 = vld [vmem:[%s9 + $0x218] sm:$0xff]
  %v2147 = vld [vmem:[%s9 + $0x220] sm:$0xff]
  %v2148 = vld [vmem:[%s9 + $0x228] sm:$0xff]
  %v2149 = vld [vmem:[%s9 + $0x230] sm:$0xff]
  %v2150 = vld [vmem:[%s9 + $0x238] sm:$0xff]
  %v2151 = vld [vmem:[%s9 + $0x240] sm:$0xff]
  %v2152 = vld [vmem:[%s9 + $0x248] sm:$0xff]
  %v2153 = vld [vmem:[%s9 + $0x250] sm:$0xff]
  %v2154 = vld [vmem:[%s9 + $0x258] sm:$0xff]
  %v2155 = vld [vmem:[%s9 + $0x260] sm:$0xff]
  %v2156 = vld [vmem:[%s9 + $0x268] sm:$0xff]
  %v2157 = vld [vmem:[%s9 + $0x270] sm:$0xff]
  %v2158 = vld [vmem:[%s9 + $0x278] sm:$0xff]
  %v2159 = vld [vmem:[%s9 + $0x280] sm:$0xff]
  %v2160 = vld [vmem:[%s9 + $0x288] sm:$0xff]
  %v2161 = vld [vmem:[%s9 + $0x290] sm:$0xff]
  %v2162 = vld [vmem:[%s9 + $0x298] sm:$0xff]
  %v2163 = vld [vmem:[%s9 + $0x2a0] sm:$0xff]
  %v2164 = vld [vmem:[%s9 + $0x2a8] sm:$0xff]
  %v2165 = vld [vmem:[%s9 + $0x2b0] sm:$0xff]
  %v2166 = vld [vmem:[%s9 + $0x2b8] sm:$0xff]
  %v2167 = vld [vmem:[%s9 + $0x2c0] sm:$0xff]
  %v2168 = vld [vmem:[%s9 + $0x2c8] sm:$0xff]
  %v2169 = vld [vmem:[%s9 + $0x2d0] sm:$0xff]
  %v2170 = vld [vmem:[%s9 + $0x2d8] sm:$0xff]
  %v2171 = vld [vmem:[%s9 + $0x2e0] sm:$0xff]
  %v2172 = vld [vmem:[%s9 + $0x2e8] sm:$0xff]
  %v2173 = vld [vmem:[%s9 + $0x2f0] sm:$0xff]
  %v2174 = vld [vmem:[%s9 + $0x2f8] sm:$0xff]
  %v2175 = vld [vmem:[%s9 + $0x300] sm:$0xff]
  %v2176 = vld [vmem:[%s9 + $0x308] sm:$0xff]
  %v2177 = vld [vmem:[%s9 + $0x310] sm:$0xff]
  %v2178 = vld [vmem:[%s9 + $0x318] sm:$0xff]
  %v2179 = vld [vmem:[%s9 + $0x320] sm:$0xff]
  %v2180 = vld [vmem:[%s9 + $0x328] sm:$0xff]
  %v2181 = vld [vmem:[%s9 + $0x330] sm:$0xff]
  %v2182 = vld [vmem:[%s9 + $0x338] sm:$0xff]
  %v2183 = vld [vmem:[%s9 + $0x340] sm:$0xff]
  %v2184 = vld [vmem:[%s9 + $0x348] sm:$0xff]
  %v2185 = vld [vmem:[%s9 + $0x350] sm:$0xff]
  %v2186 = vld [vmem:[%s9 + $0x358] sm:$0xff]
  %v2187 = vld [vmem:[%s9 + $0x360] sm:$0xff]
  %v2188 = vld [vmem:[%s9 + $0x368] sm:$0xff]
  %v2189 = vld [vmem:[%s9 + $0x370] sm:$0xff]
  %v2190 = vld [vmem:[%s9 + $0x378] sm:$0xff]
  %v2191 = vld [vmem:[%s10] sm:$0xff]
  %v2193 = vlaneseq
  %v2194 = vshrl.u32 %v2193, 7
  %v2195 = vsub.s32 0, %v2194
  %v2196 = vrot.slane %v2191, %v2195
  %v2197 = vlaneseq
  %v2198 = vshrl.u32 %v2197, 7
  %v2199 = vsub.s32 1, %v2198
  %v2200 = vrot.slane %v2191, %v2199
  %v2201 = vlaneseq
  %v2202 = vshrl.u32 %v2201, 7
  %v2203 = vsub.s32 2, %v2202
  %v2204 = vrot.slane %v2191, %v2203
  %v2205 = vlaneseq
  %v2206 = vshrl.u32 %v2205, 7
  %v2207 = vsub.s32 3, %v2206
  %v2208 = vrot.slane %v2191, %v2207
  %v2209 = vlaneseq
  %v2210 = vshrl.u32 %v2209, 7
  %v2211 = vsub.s32 4, %v2210
  %v2212 = vrot.slane %v2191, %v2211
  %v2213 = vlaneseq
  %v2214 = vshrl.u32 %v2213, 7
  %v2215 = vsub.s32 5, %v2214
  %v2216 = vrot.slane %v2191, %v2215
  %v2217 = vlaneseq
  %v2218 = vshrl.u32 %v2217, 7
  %v2219 = vsub.s32 6, %v2218
  %v2220 = vrot.slane %v2191, %v2219
  %2228 = vmatprep.subr.mxu0 %v2185
  %2229 = vmatpush1.msra.mxu0 %v2184
  %2230 = vmatprep.subr.mxu0 %v2178
  %2231 = vmatpush1.msra.mxu0 %v2177
  %2232 = vmatprep.subr.mxu0 %v2171
  %2233 = vmatpush1.msra.mxu0 %v2170
  %2234 = vmatprep.subr.mxu0 %v2164
  %2235 = vmatpush1.msra.mxu0 %v2163
  %2236 = vmatprep.subr.mxu0 %v2157
  %2237 = vmatpush1.msra.mxu0 %v2156
  %2238 = vmatprep.subr.mxu0 %v2150
  %2239 = vmatpush1.msra.mxu0 %v2149
  %2240 = vmatprep.subr.mxu0 %v2143
  %2241 = vmatpush1.msra.mxu0 %v2142
  %2242 = vmatprep.subr.mxu0 %v2136
  %2243 = vmatpush1.msra.mxu0 %v2135
  %2244 = vmatprep.subr.mxu0 %v2129
  %2245 = vmatpush1.msra.mxu0 %v2128
  %2246 = vmatprep.subr.mxu0 %v2122
  %2247 = vmatpush1.msra.mxu0 %v2121
  %2248 = vmatprep.subr.mxu0 %v2115
  %2249 = vmatpush1.msra.mxu0 %v2114
  %2250 = vmatprep.subr.mxu0 %v2108
  %2251 = vmatpush1.msra.mxu0 %v2107
  %2252 = vmatprep.subr.mxu0 %v2101
  %2253 = vmatpush1.msra.mxu0 %v2100
  %2254 = vmatprep.subr.mxu0 %v2094
  %2255 = vmatpush1.msra.mxu0 %v2093
  %2256 = vmatprep.subr.mxu0 %v2087
  %2257 = vmatpush1.msra.mxu0 %v2086
  %2258 = vmatprep.subr.mxu0 %v2080
  %2259 = vmatpush1.msra.mxu0 %v2079
  %2260 = vmatprep.subr.mxu0 0.0
  %2261 = vmatpush2.msra.mxu0 0.0
  %2262 = vmatprep.subr.mxu0 0.0
  %2263 = vmatpush2.msra.mxu0 0.0
  %2264 = vmatprep.subr.mxu0 0.0
  %2265 = vmatpush2.msra.mxu0 0.0
  %2266 = vmatprep.subr.mxu0 0.0
  %2267 = vmatpush2.msra.mxu0 0.0
  %2268 = vmatprep.subr.mxu0 0.0
  %2269 = vmatpush2.msra.mxu0 0.0
  %2270 = vmatprep.subr.mxu0 0.0
  %2271 = vmatpush2.msra.mxu0 0.0
  %2272 = vmatprep.subr.mxu0 0.0
  %2273 = vmatpush2.msra.mxu0 0.0
  %2274 = vmatprep.subr.mxu0 0.0
  %2275 = vmatpush2.msra.mxu0 0.0
  %2276 = vmatprep.subr.mxu0 0.0
  %2277 = vmatpush2.msra.mxu0 0.0
  %2278 = vmatprep.subr.mxu0 0.0
  %2279 = vmatpush2.msra.mxu0 0.0
  %2280 = vmatprep.subr.mxu0 0.0
  %2281 = vmatpush2.msra.mxu0 0.0
  %2282 = vmatprep.subr.mxu0 0.0
  %2283 = vmatpush2.msra.mxu0 0.0
  %2284 = vmatprep.subr.mxu0 0.0
  %2285 = vmatpush2.msra.mxu0 0.0
  %2286 = vmatprep.subr.mxu0 0.0
  %2287 = vmatpush2.msra.mxu0 0.0
  %2288 = vmatprep.subr.mxu0 0.0
  %2289 = vmatpush2.msra.mxu0 0.0
  %2290 = vmatprep.subr.mxu0 0.0
  %2291 = vmatpush2.msra.mxu0 0.0
  %2292 = vmatprep.mubr.f32.mxu0 0.0
  %2293 = vmatmul.mubr.f32.gmra.mxu0 %v2078
  %v2294 = vpop.f32.mrf.mxu0
  %v2295 = vadd.f32 %v2196, %v2294
  %v2296 = vpop.f32.mrf.mxu0
  %v2297 = vadd.f32 %v2200, %v2296
  %2298 = vdwg.mxu0
  %2299 = vmatprep.subr.mxu0 %v2187
  %2300 = vmatpush1.msra.mxu0 %v2186
  %2301 = vmatprep.subr.mxu0 %v2180
  %2302 = vmatpush1.msra.mxu0 %v2179
  %2303 = vmatprep.subr.mxu0 %v2173
  %2304 = vmatpush1.msra.mxu0 %v2172
  %2305 = vmatprep.subr.mxu0 %v2166
  %2306 = vmatpush1.msra.mxu0 %v2165
  %2307 = vmatprep.subr.mxu0 %v2159
  %2308 = vmatpush1.msra.mxu0 %v2158
  %2309 = vmatprep.subr.mxu0 %v2152
  %2310 = vmatpush1.msra.mxu0 %v2151
  %2311 = vmatprep.subr.mxu0 %v2145
  %2312 = vmatpush1.msra.mxu0 %v2144
  %2313 = vmatprep.subr.mxu0 %v2138
  %2314 = vmatpush1.msra.mxu0 %v2137
  %2315 = vmatprep.subr.mxu0 %v2131
  %2316 = vmatpush1.msra.mxu0 %v2130
  %2317 = vmatprep.subr.mxu0 %v2124
  %2318 = vmatpush1.msra.mxu0 %v2123
  %2319 = vmatprep.subr.mxu0 %v2117
  %2320 = vmatpush1.msra.mxu0 %v2116
  %2321 = vmatprep.subr.mxu0 %v2110
  %2322 = vmatpush1.msra.mxu0 %v2109
  %2323 = vmatprep.subr.mxu0 %v2103
  %2324 = vmatpush1.msra.mxu0 %v2102
  %2325 = vmatprep.subr.mxu0 %v2096
  %2326 = vmatpush1.msra.mxu0 %v2095
  %2327 = vmatprep.subr.mxu0 %v2089
  %2328 = vmatpush1.msra.mxu0 %v2088
  %2329 = vmatprep.subr.mxu0 %v2082
  %2330 = vmatpush1.msra.mxu0 %v2081
  %2331 = vmatprep.subr.mxu0 0.0
  %2332 = vmatpush2.msra.mxu0 0.0
  %2333 = vmatprep.subr.mxu0 0.0
  %2334 = vmatpush2.msra.mxu0 0.0
  %2335 = vmatprep.subr.mxu0 0.0
  %2336 = vmatpush2.msra.mxu0 0.0
  %2337 = vmatprep.subr.mxu0 0.0
  %2338 = vmatpush2.msra.mxu0 0.0
  %2339 = vmatprep.subr.mxu0 0.0
  %2340 = vmatpush2.msra.mxu0 0.0
  %2341 = vmatprep.subr.mxu0 0.0
  %2342 = vmatpush2.msra.mxu0 0.0
  %2343 = vmatprep.subr.mxu0 0.0
  %2344 = vmatpush2.msra.mxu0 0.0
  %2345 = vmatprep.subr.mxu0 0.0
  %2346 = vmatpush2.msra.mxu0 0.0
  %2347 = vmatprep.subr.mxu0 0.0
  %2348 = vmatpush2.msra.mxu0 0.0
  %2349 = vmatprep.subr.mxu0 0.0
  %2350 = vmatpush2.msra.mxu0 0.0
  %2351 = vmatprep.subr.mxu0 0.0
  %2352 = vmatpush2.msra.mxu0 0.0
  %2353 = vmatprep.subr.mxu0 0.0
  %2354 = vmatpush2.msra.mxu0 0.0
  %2355 = vmatprep.subr.mxu0 0.0
  %2356 = vmatpush2.msra.mxu0 0.0
  %2357 = vmatprep.subr.mxu0 0.0
  %2358 = vmatpush2.msra.mxu0 0.0
  %2359 = vmatprep.subr.mxu0 0.0
  %2360 = vmatpush2.msra.mxu0 0.0
  %2361 = vmatprep.subr.mxu0 0.0
  %2362 = vmatpush2.msra.mxu0 0.0
  %2363 = vmatprep.mubr.f32.mxu0 0.0
  %2364 = vmatmul.mubr.f32.gmra.mxu0 %v2078
  %v2365 = vpop.f32.mrf.mxu0
  %v2366 = vadd.f32 %v2204, %v2365
  %v2367 = vpop.f32.mrf.mxu0
  %v2368 = vadd.f32 %v2208, %v2367
  %2369 = vdwg.mxu0
  %2370 = vmatprep.subr.mxu0 %v2189
  %2371 = vmatpush1.msra.mxu0 %v2188
  %2372 = vmatprep.subr.mxu0 %v2182
  %2373 = vmatpush1.msra.mxu0 %v2181
  %2374 = vmatprep.subr.mxu0 %v2175
  %2375 = vmatpush1.msra.mxu0 %v2174
  %2376 = vmatprep.subr.mxu0 %v2168
  %2377 = vmatpush1.msra.mxu0 %v2167
  %2378 = vmatprep.subr.mxu0 %v2161
  %2379 = vmatpush1.msra.mxu0 %v2160
  %2380 = vmatprep.subr.mxu0 %v2154
  %2381 = vmatpush1.msra.mxu0 %v2153
  %2382 = vmatprep.subr.mxu0 %v2147
  %2383 = vmatpush1.msra.mxu0 %v2146
  %2384 = vmatprep.subr.mxu0 %v2140
  %2385 = vmatpush1.msra.mxu0 %v2139
  %2386 = vmatprep.subr.mxu0 %v2133
  %2387 = vmatpush1.msra.mxu0 %v2132
  %2388 = vmatprep.subr.mxu0 %v2126
  %2389 = vmatpush1.msra.mxu0 %v2125
  %2390 = vmatprep.subr.mxu0 %v2119
  %2391 = vmatpush1.msra.mxu0 %v2118
  %2392 = vmatprep.subr.mxu0 %v2112
  %2393 = vmatpush1.msra.mxu0 %v2111
  %2394 = vmatprep.subr.mxu0 %v2105
  %2395 = vmatpush1.msra.mxu0 %v2104
  %2396 = vmatprep.subr.mxu0 %v2098
  %2397 = vmatpush1.msra.mxu0 %v2097
  %2398 = vmatprep.subr.mxu0 %v2091
  %2399 = vmatpush1.msra.mxu0 %v2090
  %2400 = vmatprep.subr.mxu0 %v2084
  %2401 = vmatpush1.msra.mxu0 %v2083
  %2402 = vmatprep.subr.mxu0 0.0
  %2403 = vmatpush2.msra.mxu0 0.0
  %2404 = vmatprep.subr.mxu0 0.0
  %2405 = vmatpush2.msra.mxu0 0.0
  %2406 = vmatprep.subr.mxu0 0.0
  %2407 = vmatpush2.msra.mxu0 0.0
  %2408 = vmatprep.subr.mxu0 0.0
  %2409 = vmatpush2.msra.mxu0 0.0
  %2410 = vmatprep.subr.mxu0 0.0
  %2411 = vmatpush2.msra.mxu0 0.0
  %2412 = vmatprep.subr.mxu0 0.0
  %2413 = vmatpush2.msra.mxu0 0.0
  %2414 = vmatprep.subr.mxu0 0.0
  %2415 = vmatpush2.msra.mxu0 0.0
  %2416 = vmatprep.subr.mxu0 0.0
  %2417 = vmatpush2.msra.mxu0 0.0
  %2418 = vmatprep.subr.mxu0 0.0
  %2419 = vmatpush2.msra.mxu0 0.0
  %2420 = vmatprep.subr.mxu0 0.0
  %2421 = vmatpush2.msra.mxu0 0.0
  %2422 = vmatprep.subr.mxu0 0.0
  %2423 = vmatpush2.msra.mxu0 0.0
  %2424 = vmatprep.subr.mxu0 0.0
  %2425 = vmatpush2.msra.mxu0 0.0
  %2426 = vmatprep.subr.mxu0 0.0
  %2427 = vmatpush2.msra.mxu0 0.0
  %2428 = vmatprep.subr.mxu0 0.0
  %2429 = vmatpush2.msra.mxu0 0.0
  %2430 = vmatprep.subr.mxu0 0.0
  %2431 = vmatpush2.msra.mxu0 0.0
  %2432 = vmatprep.subr.mxu0 0.0
  %2433 = vmatpush2.msra.mxu0 0.0
  %2434 = vmatprep.mubr.f32.mxu0 0.0
  %2435 = vmatmul.mubr.f32.gmra.mxu0 %v2078
  %v2436 = vpop.f32.mrf.mxu0
  %v2437 = vadd.f32 %v2212, %v2436
  %v2438 = vpop.f32.mrf.mxu0
  %v2439 = vadd.f32 %v2216, %v2438
  %2440 = vdwg.mxu0
  %2441 = vmatprep.subr.mxu0 0.0
  %2442 = vmatpush1.msra.mxu0 %v2190
  %2443 = vmatprep.subr.mxu0 0.0
  %2444 = vmatpush1.msra.mxu0 %v2183
  %2445 = vmatprep.subr.mxu0 0.0
  %2446 = vmatpush1.msra.mxu0 %v2176
  %2447 = vmatprep.subr.mxu0 0.0
  %2448 = vmatpush1.msra.mxu0 %v2169
  %2449 = vmatprep.subr.mxu0 0.0
  %2450 = vmatpush1.msra.mxu0 %v2162
  %2451 = vmatprep.subr.mxu0 0.0
  %2452 = vmatpush1.msra.mxu0 %v2155
  %2453 = vmatprep.subr.mxu0 0.0
  %2454 = vmatpush1.msra.mxu0 %v2148
  %2455 = vmatprep.subr.mxu0 0.0
  %2456 = vmatpush1.msra.mxu0 %v2141
  %2457 = vmatprep.subr.mxu0 0.0
  %2458 = vmatpush1.msra.mxu0 %v2134
  %2459 = vmatprep.subr.mxu0 0.0
  %2460 = vmatpush1.msra.mxu0 %v2127
  %2461 = vmatprep.subr.mxu0 0.0
  %2462 = vmatpush1.msra.mxu0 %v2120
  %2463 = vmatprep.subr.mxu0 0.0
  %2464 = vmatpush1.msra.mxu0 %v2113
  %2465 = vmatprep.subr.mxu0 0.0
  %2466 = vmatpush1.msra.mxu0 %v2106
  %2467 = vmatprep.subr.mxu0 0.0
  %2468 = vmatpush1.msra.mxu0 %v2099
  %2469 = vmatprep.subr.mxu0 0.0
  %2470 = vmatpush1.msra.mxu0 %v2092
  %2471 = vmatprep.subr.mxu0 0.0
  %2472 = vmatpush1.msra.mxu0 %v2085
  %2473 = vmatprep.subr.mxu0 0.0
  %2474 = vmatpush2.msra.mxu0 0.0
  %2475 = vmatprep.subr.mxu0 0.0
  %2476 = vmatpush2.msra.mxu0 0.0
  %2477 = vmatprep.subr.mxu0 0.0
  %2478 = vmatpush2.msra.mxu0 0.0
  %2479 = vmatprep.subr.mxu0 0.0
  %2480 = vmatpush2.msra.mxu0 0.0
  %2481 = vmatprep.subr.mxu0 0.0
  %2482 = vmatpush2.msra.mxu0 0.0
  %2483 = vmatprep.subr.mxu0 0.0
  %2484 = vmatpush2.msra.mxu0 0.0
  %2485 = vmatprep.subr.mxu0 0.0
  %2486 = vmatpush2.msra.mxu0 0.0
  %2487 = vmatprep.subr.mxu0 0.0
  %2488 = vmatpush2.msra.mxu0 0.0
  %2489 = vmatprep.subr.mxu0 0.0
  %2490 = vmatpush2.msra.mxu0 0.0
  %2491 = vmatprep.subr.mxu0 0.0
  %2492 = vmatpush2.msra.mxu0 0.0
  %2493 = vmatprep.subr.mxu0 0.0
  %2494 = vmatpush2.msra.mxu0 0.0
  %2495 = vmatprep.subr.mxu0 0.0
  %2496 = vmatpush2.msra.mxu0 0.0
  %2497 = vmatprep.subr.mxu0 0.0
  %2498 = vmatpush2.msra.mxu0 0.0
  %2499 = vmatprep.subr.mxu0 0.0
  %2500 = vmatpush2.msra.mxu0 0.0
  %2501 = vmatprep.subr.mxu0 0.0
  %2502 = vmatpush2.msra.mxu0 0.0
  %2503 = vmatprep.subr.mxu0 0.0
  %2504 = vmatpush2.msra.mxu0 0.0
  %2505 = vmatprep.mubr.f32.mxu0 0.0
  %2506 = vmatmul.mubr.f32.gmra.mxu0 %v2078
  %v2507 = vpop.f32.mrf.mxu0
  %v2508 = vadd.f32 %v2220, %v2507
  %v2509 = vpop.f32.mrf.mxu0
  %2510 = vdwg.mxu0
  %2511 = vst [vmem:[%s11] sm:$0xff] %v2295
  %2512 = vst [vmem:[%s11 + $0x8] sm:$0xff] %v2297
  %2513 = vst [vmem:[%s11 + $0x10] sm:$0xff] %v2366
  %2514 = vst [vmem:[%s11 + $0x18] sm:$0xff] %v2368
  %2515 = vst [vmem:[%s11 + $0x20] sm:$0xff] %v2437
  %2516 = vst [vmem:[%s11 + $0x28] sm:$0xff] %v2439
  %2517 = vst [vmem:[%s11 + $0x30] sm:$0xff] %v2508
  // Predicated region
  $region46: #{lenet_forward.1} parent=0 // pred_check
    _
  $region47: #{lenet_forward.1} parent=0 // pred_check_branch
    %2519 = sbr.rel (0) target = $region49
  $region48: #{lenet_forward.1} parent=0 // pred_region
    _
  $region49: #{lenet_forward.1} parent=0 // pred_fallthru
    _
  // Predicated region
  $region50: #{lenet_forward.1} parent=0 // pred_check
    _
  $region51: #{lenet_forward.1} parent=0 // pred_check_branch
    %2521 = sbr.rel (0) target = $region53
  $region52: #{lenet_forward.1} parent=0 // pred_region
    _
  $region53: #{lenet_forward.1} parent=0 // pred_fallthru
    _

</llo_original>
